<compile_context>
chip_gen: v6e
topology: v6e:2x2x1
jax: 0.10.0
libtpu: 0.0.40
codegen_flags: <defaults>
</compile_context>

<pallas_src>
import jax
import jax.numpy as jnp
from jax.experimental import pallas as pl
from jax.experimental.pallas import tpu as pltpu


def _glu_mlp_kernel(x_ref, w1o_ref, w1g_ref, b1o_ref, b1g_ref, w2_ref, b2_ref, o_ref):
    """Fused GLU-MLP for one (block_m, D) row tile.

    x_ref  : (bm, D)
    w1o_ref: (D, H)   first half of ffn1 weight  (GLU "outputs" branch)
    w1g_ref: (D, H)   second half of ffn1 weight (GLU "gate" branch)
    b1o_ref: (1, H)   b1g_ref: (1, H)
    w2_ref : (H, D)   b2_ref : (1, D)
    o_ref  : (bm, D)
    """
    x = x_ref[...]

    # ffn1 split into the two GLU halves; bias added immediately after the MXU op.
    h_out = jnp.dot(x, w1o_ref[...], preferred_element_type=jnp.float32) + b1o_ref[...]
    h_gate = jnp.dot(x, w1g_ref[...], preferred_element_type=jnp.float32) + b1g_ref[...]

    # GLU with SiLU activation: outputs * (gate * sigmoid(gate)); exp goes to the EUP.
    g = h_out * (h_gate * jax.nn.sigmoid(h_gate))

    # Dropout is identity at inference time.
    # TODO(synk): training-mode dropout (pltpu.prng_seed + pltpu.prng_random_bits) not implemented.

    o = jnp.dot(g.astype(w2_ref.dtype), w2_ref[...], preferred_element_type=jnp.float32)
    o_ref[...] = (o + b2_ref[...]).astype(o_ref.dtype)


def _round_up(x, m):
    return (x + m - 1) // m * m


def glu_mlp(x, w1, b1, w2, b2, *, block_m=512):
    """GLUMlp forward (eval mode).

    x : (..., D) float32
    w1: (D, 2H) ffn1 weight (stored (in, out));  b1: (2H,)
    w2: (H, D)  ffn2 weight (stored (in, out));  b2: (D,)
    """
    orig_shape = x.shape
    D = orig_shape[-1]
    H = w1.shape[1] // 2

    x2 = x.reshape(-1, D)
    M = x2.shape[0]

    # Row tile: multiple of 8 sublanes; cap so 2x(in+out block) + resident weights
    # stays well under v7x's 64 MiB physical VMEM.
    bm = min(block_m, _round_up(M, 8))
    M_pad = _round_up(M, bm)
    if M_pad != M:
        x2 = jnp.pad(x2, ((0, M_pad - M), (0, 0)))

    # Split ffn1 into the GLU branches in the wrapper (lane-aligned slice, no copy cost).
    w1o, w1g = w1[:, :H], w1[:, H:]
    b1o, b1g = b1[:H].reshape(1, H), b1[H:].reshape(1, H)
    b2r = b2.reshape(1, D)

    row_tile = lambda i: (i, 0)   # x / out advance along rows
    resident = lambda i: (0, 0)   # weights & biases stay put in VMEM

    out = pl.pallas_call(
        _glu_mlp_kernel,
        out_shape=jax.ShapeDtypeStruct((M_pad, D), x.dtype),
        grid_spec=pltpu.PrefetchScalarGridSpec(
            num_scalar_prefetch=0,
            grid=(M_pad // bm,),
            in_specs=[
                pl.BlockSpec((bm, D), row_tile),
                pl.BlockSpec((D, H), resident),
                pl.BlockSpec((D, H), resident),
                pl.BlockSpec((1, H), resident),
                pl.BlockSpec((1, H), resident),
                pl.BlockSpec((H, D), resident),
                pl.BlockSpec((1, D), resident),
            ],
            out_specs=pl.BlockSpec((bm, D), row_tile),
        ),
        compiler_params=pltpu.CompilerParams(
            dimension_semantics=("parallel",),          # shard row tiles across TCs on v7x
            vmem_limit_bytes=48 * 1024 * 1024,          # safe on v5e/v6e (128 MiB) and v7x (64 MiB)
        ),
    )(x2, w1o, w1g, b1o, b1g, w2, b2r)

    if M_pad != M:
        out = out[:M]
    return out.reshape(orig_shape[:-1] + (D,))


if __name__ == "__main__":
    # Module defaults: dim=512, expand=4, bias=True, activation=SiLU. Small batch/seq.
    dim, expand = 512, 4
    B, S = 2, 8
    H = dim * expand // 2

    key = jax.random.PRNGKey(0)
    kx, kw1, kb1, kw2, kb2 = jax.random.split(key, 5)
    x = jax.random.normal(kx, (B, S, dim), jnp.float32)

    # PyTorch nn.Linear init: U(-1/sqrt(fan_in), 1/sqrt(fan_in)); stored here as (in, out).
    bound1 = 1.0 / (dim ** 0.5)
    w1 = jax.random.uniform(kw1, (dim, dim * expand), jnp.float32, -bound1, bound1)
    b1 = jax.random.uniform(kb1, (dim * expand,), jnp.float32, -bound1, bound1)
    bound2 = 1.0 / (H ** 0.5)
    w2 = jax.random.uniform(kw2, (H, dim), jnp.float32, -bound2, bound2)
    b2 = jax.random.uniform(kb2, (dim,), jnp.float32, -bound2, bound2)

    out = glu_mlp(x, w1, b1, w2, b2)
    out = jax.block_until_ready(out)

    # Reference: same math as GLUMlp.forward in eval mode (dropout = identity).
    h = x @ w1 + b1
    o_half, gate = h[..., :H], h[..., H:]
    ref = (o_half * (gate * jax.nn.sigmoid(gate))) @ w2 + b2

    assert out.shape == ref.shape, (out.shape, ref.shape)
    max_err = float(jnp.max(jnp.abs(out - ref)))
    assert jnp.allclose(out, ref, atol=2e-2, rtol=2e-2), max_err

    print("KERNEL_OK")
</pallas_src>

<mosaic_0001>
module attributes {stable_mosaic.version = 11 : i64} {
  func.func @_glu_mlp_kernel(%arg0: i32, %arg1: memref<16x512xf32, #tpu.memory_space<vmem>>, %arg2: memref<512x1024xf32, #tpu.memory_space<vmem>>, %arg3: memref<512x1024xf32, #tpu.memory_space<vmem>>, %arg4: memref<1x1024xf32, #tpu.memory_space<vmem>>, %arg5: memref<1x1024xf32, #tpu.memory_space<vmem>>, %arg6: memref<1024x512xf32, #tpu.memory_space<vmem>>, %arg7: memref<1x512xf32, #tpu.memory_space<vmem>>, %arg8: memref<16x512xf32, #tpu.memory_space<vmem>>) attributes {dimension_semantics = [#tpu.dimension_semantics<parallel>], iteration_bounds = array<i64: 1>, scalar_prefetch = 0 : i64, scratch_operands = 0 : i64, tpu.core_type = #tpu.core_type<tc>, window_params = [{transform_indices = @transform_0, window_bounds = array<i64: 16, 512>}, {pipeline_mode = #tpu.pipeline_mode<synchronous>, transform_indices = @transform_1, window_bounds = array<i64: 512, 1024>}, {pipeline_mode = #tpu.pipeline_mode<synchronous>, transform_indices = @transform_2, window_bounds = array<i64: 512, 1024>}, {pipeline_mode = #tpu.pipeline_mode<synchronous>, transform_indices = @transform_3, window_bounds = array<i64: 1, 1024>}, {pipeline_mode = #tpu.pipeline_mode<synchronous>, transform_indices = @transform_4, window_bounds = array<i64: 1, 1024>}, {pipeline_mode = #tpu.pipeline_mode<synchronous>, transform_indices = @transform_5, window_bounds = array<i64: 1024, 512>}, {pipeline_mode = #tpu.pipeline_mode<synchronous>, transform_indices = @transform_6, window_bounds = array<i64: 1, 512>}, {transform_indices = @transform_7, window_bounds = array<i64: 16, 512>}]} {
    %c0 = arith.constant 0 : index
    %c0_0 = arith.constant 0 : index
    %0 = vector.load %arg1[%c0, %c0_0] : memref<16x512xf32, #tpu.memory_space<vmem>>, vector<16x512xf32>
    %c0_1 = arith.constant 0 : index
    %c0_2 = arith.constant 0 : index
    %1 = vector.load %arg2[%c0_1, %c0_2] : memref<512x1024xf32, #tpu.memory_space<vmem>>, vector<512x1024xf32>
    %cst = arith.constant dense<0.000000e+00> : vector<16x1024xf32>
    %2 = tpu.matmul %0, %1, %cst {dimension_numbers = #tpu.dot_dimension_numbers<[1], [0], [0], [1], [0, 0, 1, 1], [], []>} : vector<16x512xf32>, vector<512x1024xf32>, vector<16x1024xf32> -> vector<16x1024xf32>
    %c0_3 = arith.constant 0 : index
    %c0_4 = arith.constant 0 : index
    %3 = vector.load %arg4[%c0_3, %c0_4] : memref<1x1024xf32, #tpu.memory_space<vmem>>, vector<1x1024xf32>
    %4 = vector.broadcast %3 : vector<1x1024xf32> to vector<16x1024xf32>
    %5 = arith.addf %2, %4 : vector<16x1024xf32>
    %c0_5 = arith.constant 0 : index
    %c0_6 = arith.constant 0 : index
    %6 = vector.load %arg3[%c0_5, %c0_6] : memref<512x1024xf32, #tpu.memory_space<vmem>>, vector<512x1024xf32>
    %cst_7 = arith.constant dense<0.000000e+00> : vector<16x1024xf32>
    %7 = tpu.matmul %0, %6, %cst_7 {dimension_numbers = #tpu.dot_dimension_numbers<[1], [0], [0], [1], [0, 0, 1, 1], [], []>} : vector<16x512xf32>, vector<512x1024xf32>, vector<16x1024xf32> -> vector<16x1024xf32>
    %c0_8 = arith.constant 0 : index
    %c0_9 = arith.constant 0 : index
    %8 = vector.load %arg5[%c0_8, %c0_9] : memref<1x1024xf32, #tpu.memory_space<vmem>>, vector<1x1024xf32>
    %9 = vector.broadcast %8 : vector<1x1024xf32> to vector<16x1024xf32>
    %10 = arith.addf %7, %9 : vector<16x1024xf32>
    %11 = arith.negf %10 : vector<16x1024xf32>
    %12 = math.exp %11 : vector<16x1024xf32>
    %cst_10 = arith.constant 1.000000e+00 : f32
    %13 = vector.broadcast %cst_10 : f32 to vector<16x1024xf32>
    %14 = arith.addf %13, %12 : vector<16x1024xf32>
    %15 = arith.divf %13, %14 : vector<16x1024xf32>
    %16 = arith.mulf %10, %15 : vector<16x1024xf32>
    %17 = arith.mulf %5, %16 : vector<16x1024xf32>
    %c0_11 = arith.constant 0 : index
    %c0_12 = arith.constant 0 : index
    %18 = vector.load %arg6[%c0_11, %c0_12] : memref<1024x512xf32, #tpu.memory_space<vmem>>, vector<1024x512xf32>
    %cst_13 = arith.constant dense<0.000000e+00> : vector<16x512xf32>
    %19 = tpu.matmul %17, %18, %cst_13 {dimension_numbers = #tpu.dot_dimension_numbers<[1], [0], [0], [1], [0, 0, 1, 1], [], []>} : vector<16x1024xf32>, vector<1024x512xf32>, vector<16x512xf32> -> vector<16x512xf32>
    %c0_14 = arith.constant 0 : index
    %c0_15 = arith.constant 0 : index
    %20 = vector.load %arg7[%c0_14, %c0_15] : memref<1x512xf32, #tpu.memory_space<vmem>>, vector<1x512xf32>
    %21 = vector.broadcast %20 : vector<1x512xf32> to vector<16x512xf32>
    %22 = arith.addf %19, %21 : vector<16x512xf32>
    %c0_16 = arith.constant 0 : index
    %c0_17 = arith.constant 0 : index
    %23 = vector.load %arg8[%c0_16, %c0_17] : memref<16x512xf32, #tpu.memory_space<vmem>>, vector<16x512xf32>
    tpu.vector_store %arg8[%c0_16, %c0_17], %22 {strides = array<i32>} : memref<16x512xf32, #tpu.memory_space<vmem>>, vector<16x512xf32>,
    return
  }
  func.func @transform_0(%arg0: i32) -> (i32, i32) {
    %c0_i32 = arith.constant 0 : i32
    %c0_i32_0 = arith.constant 0 : i32
    return %arg0, %c0_i32 : i32, i32
  }
  func.func @transform_1(%arg0: i32) -> (i32, i32) {
    %c0_i32 = arith.constant 0 : i32
    %c0_i32_0 = arith.constant 0 : i32
    %c0_i32_1 = arith.constant 0 : i32
    return %c0_i32, %c0_i32_0 : i32, i32
  }
  func.func @transform_2(%arg0: i32) -> (i32, i32) {
    %c0_i32 = arith.constant 0 : i32
    %c0_i32_0 = arith.constant 0 : i32
    %c0_i32_1 = arith.constant 0 : i32
    return %c0_i32, %c0_i32_0 : i32, i32
  }
  func.func @transform_3(%arg0: i32) -> (i32, i32) {
    %c0_i32 = arith.constant 0 : i32
    %c0_i32_0 = arith.constant 0 : i32
    %c0_i32_1 = arith.constant 0 : i32
    return %c0_i32, %c0_i32_0 : i32, i32
  }
  func.func @transform_4(%arg0: i32) -> (i32, i32) {
    %c0_i32 = arith.constant 0 : i32
    %c0_i32_0 = arith.constant 0 : i32
    %c0_i32_1 = arith.constant 0 : i32
    return %c0_i32, %c0_i32_0 : i32, i32
  }
  func.func @transform_5(%arg0: i32) -> (i32, i32) {
    %c0_i32 = arith.constant 0 : i32
    %c0_i32_0 = arith.constant 0 : i32
    %c0_i32_1 = arith.constant 0 : i32
    return %c0_i32, %c0_i32_0 : i32, i32
  }
  func.func @transform_6(%arg0: i32) -> (i32, i32) {
    %c0_i32 = arith.constant 0 : i32
    %c0_i32_0 = arith.constant 0 : i32
    %c0_i32_1 = arith.constant 0 : i32
    return %c0_i32, %c0_i32_0 : i32, i32
  }
  func.func @transform_7(%arg0: i32) -> (i32, i32) {
    %c0_i32 = arith.constant 0 : i32
    %c0_i32_0 = arith.constant 0 : i32
    return %arg0, %c0_i32 : i32, i32
  }
}

</mosaic_0001>

<llo_original>
// kernel: tpu_custom_call.1
$region0: #{tpu_custom_call.1}
  #allocation0 [shape = 'u32[]', space=smem, size = 0x4, offset = 0x4, fixed_abs, tag = 'smem constant byte address 0x4 - core index']
  #allocation1 [shape = 'u32[144,128]{1,0:T(1,128)}', space=vmem, size = 0x12000, scoped, tag = 'internal scratch']
  %s0 = inlined_call_operand.hbm [shape: f32[16,512], index: 0, kind: input, shape index: {}]
  %s1 = inlined_call_operand.hbm [shape: f32[512,1024], index: 1, kind: input, shape index: {}]
  %s2 = inlined_call_operand.hbm [shape: f32[512,1024], index: 2, kind: input, shape index: {}]
  %s3 = inlined_call_operand.hbm [shape: f32[1,1024], index: 3, kind: input, shape index: {}]
  %s4 = inlined_call_operand.hbm [shape: f32[1,1024], index: 4, kind: input, shape index: {}]
  %s5 = inlined_call_operand.hbm [shape: f32[1024,512], index: 5, kind: input, shape index: {}]
  %s6 = inlined_call_operand.hbm [shape: f32[1,512], index: 6, kind: input, shape index: {}]
  %s7 = inlined_call_operand.hbm [shape: f32[16,512], index: 7, kind: output, shape index: {}]
  %s8 = sld [smem:[#allocation0]]
  $region66: #{tpu_custom_call.1} parent=0
    _
  %s10 = ssub.s32 1, %s8
  %s11 = scalar_select 0, %s10, %s8
  $region1: #{tpu_custom_call.1} parent=0
    #allocation2 [shape = 'u8[32768]{0}', space=vmem, size = 0x8000, scoped, tag = 'input window, operand 0, single buffered']
    #allocation3 [shape = 's32[1]{0}', space=sflag, size = 0x4, scoped, tag = 'scoped memory for tpu_custom_call.1']
    #allocation4 [shape = 's32[1]{0}', space=sflag, size = 0x4, scoped, tag = 'scoped memory for tpu_custom_call.1']
    #allocation5 [shape = 'u8[2097152]{0}', space=vmem, size = 0x200000, scoped, tag = 'input window, operand 1, single buffered']
    #allocation6 [shape = 's32[1]{0}', space=sflag, size = 0x4, scoped, tag = 'scoped memory for tpu_custom_call.1']
    #allocation7 [shape = 'u8[2097152]{0}', space=vmem, size = 0x200000, scoped, tag = 'input window, operand 2, single buffered']
    #allocation8 [shape = 'u8[4096]{0}', space=vmem, size = 0x1000, scoped, tag = 'input window, operand 3, single buffered']
    #allocation9 [shape = 's32[1]{0}', space=sflag, size = 0x4, scoped, tag = 'scoped memory for tpu_custom_call.1']
    #allocation10 [shape = 'u8[4096]{0}', space=vmem, size = 0x1000, scoped, tag = 'input window, operand 4, single buffered']
    #allocation11 [shape = 'u8[2097152]{0}', space=vmem, size = 0x200000, scoped, tag = 'input window, operand 5, single buffered']
    #allocation12 [shape = 's32[1]{0}', space=sflag, size = 0x4, scoped, tag = 'scoped memory for tpu_custom_call.1']
    #allocation13 [shape = 'u8[2048]{0}', space=vmem, size = 0x800, scoped, tag = 'input window, operand 6, single buffered']
    #allocation14 [shape = 'u8[32768]{0}', space=vmem, size = 0x8000, scoped, tag = 'output window, operand 0, single buffered']
    %12 = vsyncpa [#allocation3], 0
    %13 = vsyncpa [#allocation6], 0
    %14 = vsyncpa [#allocation9], 0
    %15 = vsyncpa [#allocation12], 0
    %16 = vsyncpa [#allocation4], 0
    // Predicated region
    $region2: #{tpu_custom_call.1} parent=1 // pred_check
      _
    $region3: #{tpu_custom_call.1} parent=1 // pred_check_branch
      %18 = sbr.rel (0) target = $region5
    $region4: #{tpu_custom_call.1} parent=1 // pred_region
      %s20 = ssub.s32 1024, 1024
      %21 = vsyncadd [#allocation3], %s20
      %s22 = sshll.u32 [#allocation2], 4
      %s23 = int_to_ptr.vmem [resolvable:$true] %s22
      %28 = dma.hbm_to_vmem [thread:$0]  %s0, 1024, %s23, [#allocation3], 512, 512, 32
    $region5: #{tpu_custom_call.1} parent=1 // pred_fallthru
      _
    // Predicated region
    $region6: #{tpu_custom_call.1} parent=1 // pred_check
      _
    $region7: #{tpu_custom_call.1} parent=1 // pred_check_branch
      %30 = sbr.rel (0) target = $region9
    $region8: #{tpu_custom_call.1} parent=1 // pred_region
      %s32 = ssub.s32 65536, 65536
      %33 = vsyncadd [#allocation6], %s32
      %s34 = sshll.u32 [#allocation5], 4
      %s35 = int_to_ptr.vmem [resolvable:$true] %s34
      %40 = dma.hbm_to_vmem [thread:$0]  %s1, 65536, %s35, [#allocation6], 1024, 1024, 64
    $region9: #{tpu_custom_call.1} parent=1 // pred_fallthru
      _
    // Predicated region
    $region10: #{tpu_custom_call.1} parent=1 // pred_check
      _
    $region11: #{tpu_custom_call.1} parent=1 // pred_check_branch
      %42 = sbr.rel (0) target = $region13
    $region12: #{tpu_custom_call.1} parent=1 // pred_region
      %s44 = ssub.s32 65536, 65536
      %45 = vsyncadd [#allocation6], %s44
      %s46 = sshll.u32 [#allocation7], 4
      %s47 = int_to_ptr.vmem [resolvable:$true] %s46
      %52 = dma.hbm_to_vmem [thread:$0]  %s2, 65536, %s47, [#allocation6], 1024, 1024, 64
    $region13: #{tpu_custom_call.1} parent=1 // pred_fallthru
      _
    // Predicated region
    $region14: #{tpu_custom_call.1} parent=1 // pred_check
      _
    $region15: #{tpu_custom_call.1} parent=1 // pred_check_branch
      %54 = sbr.rel (0) target = $region17
    $region16: #{tpu_custom_call.1} parent=1 // pred_region
      %s56 = ssub.s32 128, 128
      %57 = vsyncadd [#allocation9], %s56
      %s59 = sshll.u32 [#allocation8], 4
      %s60 = int_to_ptr.vmem [resolvable:$true] %s59
      %62 = dma.hbm_to_vmem [thread:$0]  %s3, 128, %s60, [#allocation9]
    $region17: #{tpu_custom_call.1} parent=1 // pred_fallthru
      _
    // Predicated region
    $region18: #{tpu_custom_call.1} parent=1 // pred_check
      _
    $region19: #{tpu_custom_call.1} parent=1 // pred_check_branch
      %64 = sbr.rel (0) target = $region21
    $region20: #{tpu_custom_call.1} parent=1 // pred_region
      %s66 = ssub.s32 128, 128
      %67 = vsyncadd [#allocation9], %s66
      %s69 = sshll.u32 [#allocation10], 4
      %s70 = int_to_ptr.vmem [resolvable:$true] %s69
      %72 = dma.hbm_to_vmem [thread:$0]  %s4, 128, %s70, [#allocation9]
    $region21: #{tpu_custom_call.1} parent=1 // pred_fallthru
      _
    // Predicated region
    $region22: #{tpu_custom_call.1} parent=1 // pred_check
      _
    $region23: #{tpu_custom_call.1} parent=1 // pred_check_branch
      %74 = sbr.rel (0) target = $region25
    $region24: #{tpu_custom_call.1} parent=1 // pred_region
      %s76 = ssub.s32 65536, 65536
      %77 = vsyncadd [#allocation12], %s76
      %s78 = sshll.u32 [#allocation11], 4
      %s79 = int_to_ptr.vmem [resolvable:$true] %s78
      %84 = dma.hbm_to_vmem [thread:$0]  %s5, 65536, %s79, [#allocation12], 512, 512, 32
    $region25: #{tpu_custom_call.1} parent=1 // pred_fallthru
      _
    // Predicated region
    $region26: #{tpu_custom_call.1} parent=1 // pred_check
      _
    $region27: #{tpu_custom_call.1} parent=1 // pred_check_branch
      %86 = sbr.rel (0) target = $region29
    $region28: #{tpu_custom_call.1} parent=1 // pred_region
      %s88 = ssub.s32 64, 64
      %89 = vsyncadd [#allocation12], %s88
      %s91 = sshll.u32 [#allocation13], 4
      %s92 = int_to_ptr.vmem [resolvable:$true] %s91
      %94 = dma.hbm_to_vmem [thread:$0]  %s6, 64, %s92, [#allocation12]
    $region29: #{tpu_custom_call.1} parent=1 // pred_fallthru
      _
    // Predicated region
    $region30: #{tpu_custom_call.1} parent=1 // pred_check
      _
    $region31: #{tpu_custom_call.1} parent=1 // pred_check_branch
      %96 = sbr.rel (0) target = $region33
    $region32: #{tpu_custom_call.1} parent=1 // pred_region
      %97 = dma.done [#allocation3], 1024
    $region33: #{tpu_custom_call.1} parent=1 // pred_fallthru
      _
    // Predicated region
    $region34: #{tpu_custom_call.1} parent=1 // pred_check
      _
    $region35: #{tpu_custom_call.1} parent=1 // pred_check_branch
      %99 = sbr.rel (0) target = $region37
    $region36: #{tpu_custom_call.1} parent=1 // pred_region
      %100 = dma.done [#allocation6], 65536
    $region37: #{tpu_custom_call.1} parent=1 // pred_fallthru
      _
    // Predicated region
    $region38: #{tpu_custom_call.1} parent=1 // pred_check
      _
    $region39: #{tpu_custom_call.1} parent=1 // pred_check_branch
      %102 = sbr.rel (0) target = $region41
    $region40: #{tpu_custom_call.1} parent=1 // pred_region
      %103 = dma.done [#allocation6], 65536
    $region41: #{tpu_custom_call.1} parent=1 // pred_fallthru
      _
    // Predicated region
    $region42: #{tpu_custom_call.1} parent=1 // pred_check
      _
    $region43: #{tpu_custom_call.1} parent=1 // pred_check_branch
      %105 = sbr.rel (0) target = $region45
    $region44: #{tpu_custom_call.1} parent=1 // pred_region
      %106 = dma.done [#allocation9], 128
    $region45: #{tpu_custom_call.1} parent=1 // pred_fallthru
      _
    // Predicated region
    $region46: #{tpu_custom_call.1} parent=1 // pred_check
      _
    $region47: #{tpu_custom_call.1} parent=1 // pred_check_branch
      %108 = sbr.rel (0) target = $region49
    $region48: #{tpu_custom_call.1} parent=1 // pred_region
      %109 = dma.done [#allocation9], 128
    $region49: #{tpu_custom_call.1} parent=1 // pred_fallthru
      _
    // Predicated region
    $region50: #{tpu_custom_call.1} parent=1 // pred_check
      _
    $region51: #{tpu_custom_call.1} parent=1 // pred_check_branch
      %111 = sbr.rel (0) target = $region53
    $region52: #{tpu_custom_call.1} parent=1 // pred_region
      %112 = dma.done [#allocation12], 65536
    $region53: #{tpu_custom_call.1} parent=1 // pred_fallthru
      _
    // Predicated region
    $region54: #{tpu_custom_call.1} parent=1 // pred_check
      _
    $region55: #{tpu_custom_call.1} parent=1 // pred_check_branch
      %114 = sbr.rel (0) target = $region57
    $region56: #{tpu_custom_call.1} parent=1 // pred_region
      %115 = dma.done [#allocation12], 64
    $region57: #{tpu_custom_call.1} parent=1 // pred_fallthru
      _
    %v116 = vld [vmem:[#allocation2] sm:$0xff]
    %v117 = vld [vmem:[#allocation2 + $0x8] sm:$0xff]
    %v118 = vld [vmem:[#allocation2 + $0x10] sm:$0xff]
    %v119 = vld [vmem:[#allocation2 + $0x18] sm:$0xff]
    %v120 = vld [vmem:[#allocation2 + $0x20] sm:$0xff]
    %v121 = vld [vmem:[#allocation2 + $0x28] sm:$0xff]
    %v122 = vld [vmem:[#allocation2 + $0x30] sm:$0xff]
    %v123 = vld [vmem:[#allocation2 + $0x38] sm:$0xff]
    %v124 = vld [vmem:[#allocation5] sm:$0xff]
    %v125 = vld [vmem:[#allocation5 + $0x8] sm:$0xff]
    %v126 = vld [vmem:[#allocation5 + $0x10] sm:$0xff]
    %v127 = vld [vmem:[#allocation5 + $0x18] sm:$0xff]
    %v128 = vld [vmem:[#allocation5 + $0x20] sm:$0xff]
    %v129 = vld [vmem:[#allocation5 + $0x28] sm:$0xff]
    %v130 = vld [vmem:[#allocation5 + $0x30] sm:$0xff]
    %v131 = vld [vmem:[#allocation5 + $0x38] sm:$0xff]
    %v132 = vld [vmem:[#allocation5 + $0x40] sm:$0xff]
    %v133 = vld [vmem:[#allocation5 + $0x48] sm:$0xff]
    %v134 = vld [vmem:[#allocation5 + $0x50] sm:$0xff]
    %v135 = vld [vmem:[#allocation5 + $0x58] sm:$0xff]
    %v136 = vld [vmem:[#allocation5 + $0x60] sm:$0xff]
    %v137 = vld [vmem:[#allocation5 + $0x68] sm:$0xff]
    %v138 = vld [vmem:[#allocation5 + $0x70] sm:$0xff]
    %v139 = vld [vmem:[#allocation5 + $0x78] sm:$0xff]
    %v140 = vld [vmem:[#allocation5 + $0x80] sm:$0xff]
    %v141 = vld [vmem:[#allocation5 + $0x88] sm:$0xff]
    %v142 = vld [vmem:[#allocation5 + $0x90] sm:$0xff]
    %v143 = vld [vmem:[#allocation5 + $0x98] sm:$0xff]
    %v144 = vld [vmem:[#allocation5 + $0xa0] sm:$0xff]
    %v145 = vld [vmem:[#allocation5 + $0xa8] sm:$0xff]
    %v146 = vld [vmem:[#allocation5 + $0xb0] sm:$0xff]
    %v147 = vld [vmem:[#allocation5 + $0xb8] sm:$0xff]
    %v148 = vld [vmem:[#allocation5 + $0xc0] sm:$0xff]
    %v149 = vld [vmem:[#allocation5 + $0xc8] sm:$0xff]
    %v150 = vld [vmem:[#allocation5 + $0xd0] sm:$0xff]
    %v151 = vld [vmem:[#allocation5 + $0xd8] sm:$0xff]
    %v152 = vld [vmem:[#allocation5 + $0xe0] sm:$0xff]
    %v153 = vld [vmem:[#allocation5 + $0xe8] sm:$0xff]
    %v154 = vld [vmem:[#allocation5 + $0xf0] sm:$0xff]
    %v155 = vld [vmem:[#allocation5 + $0xf8] sm:$0xff]
    %v156 = vld [vmem:[#allocation5 + $0x100] sm:$0xff]
    %v157 = vld [vmem:[#allocation5 + $0x108] sm:$0xff]
    %v158 = vld [vmem:[#allocation5 + $0x110] sm:$0xff]
    %v159 = vld [vmem:[#allocation5 + $0x118] sm:$0xff]
    %v160 = vld [vmem:[#allocation5 + $0x120] sm:$0xff]
    %v161 = vld [vmem:[#allocation5 + $0x128] sm:$0xff]
    %v162 = vld [vmem:[#allocation5 + $0x130] sm:$0xff]
    %v163 = vld [vmem:[#allocation5 + $0x138] sm:$0xff]
    %v164 = vld [vmem:[#allocation5 + $0x140] sm:$0xff]
    %v165 = vld [vmem:[#allocation5 + $0x148] sm:$0xff]
    %v166 = vld [vmem:[#allocation5 + $0x150] sm:$0xff]
    %v167 = vld [vmem:[#allocation5 + $0x158] sm:$0xff]
    %v168 = vld [vmem:[#allocation5 + $0x160] sm:$0xff]
    %v169 = vld [vmem:[#allocation5 + $0x168] sm:$0xff]
    %v170 = vld [vmem:[#allocation5 + $0x170] sm:$0xff]
    %v171 = vld [vmem:[#allocation5 + $0x178] sm:$0xff]
    %v172 = vld [vmem:[#allocation5 + $0x180] sm:$0xff]
    %v173 = vld [vmem:[#allocation5 + $0x188] sm:$0xff]
    %v174 = vld [vmem:[#allocation5 + $0x190] sm:$0xff]
    %v175 = vld [vmem:[#allocation5 + $0x198] sm:$0xff]
    %v176 = vld [vmem:[#allocation5 + $0x1a0] sm:$0xff]
    %v177 = vld [vmem:[#allocation5 + $0x1a8] sm:$0xff]
    %v178 = vld [vmem:[#allocation5 + $0x1b0] sm:$0xff]
    %v179 = vld [vmem:[#allocation5 + $0x1b8] sm:$0xff]
    %v180 = vld [vmem:[#allocation5 + $0x1c0] sm:$0xff]
    %v181 = vld [vmem:[#allocation5 + $0x1c8] sm:$0xff]
    %v182 = vld [vmem:[#allocation5 + $0x1d0] sm:$0xff]
    %v183 = vld [vmem:[#allocation5 + $0x1d8] sm:$0xff]
    %v184 = vld [vmem:[#allocation5 + $0x1e0] sm:$0xff]
    %v185 = vld [vmem:[#allocation5 + $0x1e8] sm:$0xff]
    %v186 = vld [vmem:[#allocation5 + $0x1f0] sm:$0xff]
    %v187 = vld [vmem:[#allocation5 + $0x1f8] sm:$0xff]
    %v188 = vld [vmem:[#allocation5 + $0x200] sm:$0xff]
    %v189 = vld [vmem:[#allocation5 + $0x208] sm:$0xff]
    %v190 = vld [vmem:[#allocation5 + $0x210] sm:$0xff]
    %v191 = vld [vmem:[#allocation5 + $0x218] sm:$0xff]
    %v192 = vld [vmem:[#allocation5 + $0x220] sm:$0xff]
    %v193 = vld [vmem:[#allocation5 + $0x228] sm:$0xff]
    %v194 = vld [vmem:[#allocation5 + $0x230] sm:$0xff]
    %v195 = vld [vmem:[#allocation5 + $0x238] sm:$0xff]
    %v196 = vld [vmem:[#allocation5 + $0x240] sm:$0xff]
    %v197 = vld [vmem:[#allocation5 + $0x248] sm:$0xff]
    %v198 = vld [vmem:[#allocation5 + $0x250] sm:$0xff]
    %v199 = vld [vmem:[#allocation5 + $0x258] sm:$0xff]
    %v200 = vld [vmem:[#allocation5 + $0x260] sm:$0xff]
    %v201 = vld [vmem:[#allocation5 + $0x268] sm:$0xff]
    %v202 = vld [vmem:[#allocation5 + $0x270] sm:$0xff]
    %v203 = vld [vmem:[#allocation5 + $0x278] sm:$0xff]
    %v204 = vld [vmem:[#allocation5 + $0x280] sm:$0xff]
    %v205 = vld [vmem:[#allocation5 + $0x288] sm:$0xff]
    %v206 = vld [vmem:[#allocation5 + $0x290] sm:$0xff]
    %v207 = vld [vmem:[#allocation5 + $0x298] sm:$0xff]
    %v208 = vld [vmem:[#allocation5 + $0x2a0] sm:$0xff]
    %v209 = vld [vmem:[#allocation5 + $0x2a8] sm:$0xff]
    %v210 = vld [vmem:[#allocation5 + $0x2b0] sm:$0xff]
    %v211 = vld [vmem:[#allocation5 + $0x2b8] sm:$0xff]
    %v212 = vld [vmem:[#allocation5 + $0x2c0] sm:$0xff]
    %v213 = vld [vmem:[#allocation5 + $0x2c8] sm:$0xff]
    %v214 = vld [vmem:[#allocation5 + $0x2d0] sm:$0xff]
    %v215 = vld [vmem:[#allocation5 + $0x2d8] sm:$0xff]
    %v216 = vld [vmem:[#allocation5 + $0x2e0] sm:$0xff]
    %v217 = vld [vmem:[#allocation5 + $0x2e8] sm:$0xff]
    %v218 = vld [vmem:[#allocation5 + $0x2f0] sm:$0xff]
    %v219 = vld [vmem:[#allocation5 + $0x2f8] sm:$0xff]
    %v220 = vld [vmem:[#allocation5 + $0x300] sm:$0xff]
    %v221 = vld [vmem:[#allocation5 + $0x308] sm:$0xff]
    %v222 = vld [vmem:[#allocation5 + $0x310] sm:$0xff]
    %v223 = vld [vmem:[#allocation5 + $0x318] sm:$0xff]
    %v224 = vld [vmem:[#allocation5 + $0x320] sm:$0xff]
    %v225 = vld [vmem:[#allocation5 + $0x328] sm:$0xff]
    %v226 = vld [vmem:[#allocation5 + $0x330] sm:$0xff]
    %v227 = vld [vmem:[#allocation5 + $0x338] sm:$0xff]
    %v228 = vld [vmem:[#allocation5 + $0x340] sm:$0xff]
    %v229 = vld [vmem:[#allocation5 + $0x348] sm:$0xff]
    %v230 = vld [vmem:[#allocation5 + $0x350] sm:$0xff]
    %v231 = vld [vmem:[#allocation5 + $0x358] sm:$0xff]
    %v232 = vld [vmem:[#allocation5 + $0x360] sm:$0xff]
    %v233 = vld [vmem:[#allocation5 + $0x368] sm:$0xff]
    %v234 = vld [vmem:[#allocation5 + $0x370] sm:$0xff]
    %v235 = vld [vmem:[#allocation5 + $0x378] sm:$0xff]
    %v236 = vld [vmem:[#allocation5 + $0x380] sm:$0xff]
    %v237 = vld [vmem:[#allocation5 + $0x388] sm:$0xff]
    %v238 = vld [vmem:[#allocation5 + $0x390] sm:$0xff]
    %v239 = vld [vmem:[#allocation5 + $0x398] sm:$0xff]
    %v240 = vld [vmem:[#allocation5 + $0x3a0] sm:$0xff]
    %v241 = vld [vmem:[#allocation5 + $0x3a8] sm:$0xff]
    %v242 = vld [vmem:[#allocation5 + $0x3b0] sm:$0xff]
    %v243 = vld [vmem:[#allocation5 + $0x3b8] sm:$0xff]
    %v244 = vld [vmem:[#allocation5 + $0x3c0] sm:$0xff]
    %v245 = vld [vmem:[#allocation5 + $0x3c8] sm:$0xff]
    %v246 = vld [vmem:[#allocation5 + $0x3d0] sm:$0xff]
    %v247 = vld [vmem:[#allocation5 + $0x3d8] sm:$0xff]
    %v248 = vld [vmem:[#allocation5 + $0x3e0] sm:$0xff]
    %v249 = vld [vmem:[#allocation5 + $0x3e8] sm:$0xff]
    %v250 = vld [vmem:[#allocation5 + $0x3f0] sm:$0xff]
    %v251 = vld [vmem:[#allocation5 + $0x3f8] sm:$0xff]
    %v252 = vld [vmem:[#allocation5 + $0x400] sm:$0xff]
    %v253 = vld [vmem:[#allocation5 + $0x408] sm:$0xff]
    %v254 = vld [vmem:[#allocation5 + $0x410] sm:$0xff]
    %v255 = vld [vmem:[#allocation5 + $0x418] sm:$0xff]
    %v256 = vld [vmem:[#allocation5 + $0x420] sm:$0xff]
    %v257 = vld [vmem:[#allocation5 + $0x428] sm:$0xff]
    %v258 = vld [vmem:[#allocation5 + $0x430] sm:$0xff]
    %v259 = vld [vmem:[#allocation5 + $0x438] sm:$0xff]
    %v260 = vld [vmem:[#allocation5 + $0x440] sm:$0xff]
    %v261 = vld [vmem:[#allocation5 + $0x448] sm:$0xff]
    %v262 = vld [vmem:[#allocation5 + $0x450] sm:$0xff]
    %v263 = vld [vmem:[#allocation5 + $0x458] sm:$0xff]
    %v264 = vld [vmem:[#allocation5 + $0x460] sm:$0xff]
    %v265 = vld [vmem:[#allocation5 + $0x468] sm:$0xff]
    %v266 = vld [vmem:[#allocation5 + $0x470] sm:$0xff]
    %v267 = vld [vmem:[#allocation5 + $0x478] sm:$0xff]
    %v268 = vld [vmem:[#allocation5 + $0x480] sm:$0xff]
    %v269 = vld [vmem:[#allocation5 + $0x488] sm:$0xff]
    %v270 = vld [vmem:[#allocation5 + $0x490] sm:$0xff]
    %v271 = vld [vmem:[#allocation5 + $0x498] sm:$0xff]
    %v272 = vld [vmem:[#allocation5 + $0x4a0] sm:$0xff]
    %v273 = vld [vmem:[#allocation5 + $0x4a8] sm:$0xff]
    %v274 = vld [vmem:[#allocation5 + $0x4b0] sm:$0xff]
    %v275 = vld [vmem:[#allocation5 + $0x4b8] sm:$0xff]
    %v276 = vld [vmem:[#allocation5 + $0x4c0] sm:$0xff]
    %v277 = vld [vmem:[#allocation5 + $0x4c8] sm:$0xff]
    %v278 = vld [vmem:[#allocation5 + $0x4d0] sm:$0xff]
    %v279 = vld [vmem:[#allocation5 + $0x4d8] sm:$0xff]
    %v280 = vld [vmem:[#allocation5 + $0x4e0] sm:$0xff]
    %v281 = vld [vmem:[#allocation5 + $0x4e8] sm:$0xff]
    %v282 = vld [vmem:[#allocation5 + $0x4f0] sm:$0xff]
    %v283 = vld [vmem:[#allocation5 + $0x4f8] sm:$0xff]
    %v284 = vld [vmem:[#allocation5 + $0x500] sm:$0xff]
    %v285 = vld [vmem:[#allocation5 + $0x508] sm:$0xff]
    %v286 = vld [vmem:[#allocation5 + $0x510] sm:$0xff]
    %v287 = vld [vmem:[#allocation5 + $0x518] sm:$0xff]
    %v288 = vld [vmem:[#allocation5 + $0x520] sm:$0xff]
    %v289 = vld [vmem:[#allocation5 + $0x528] sm:$0xff]
    %v290 = vld [vmem:[#allocation5 + $0x530] sm:$0xff]
    %v291 = vld [vmem:[#allocation5 + $0x538] sm:$0xff]
    %v292 = vld [vmem:[#allocation5 + $0x540] sm:$0xff]
    %v293 = vld [vmem:[#allocation5 + $0x548] sm:$0xff]
    %v294 = vld [vmem:[#allocation5 + $0x550] sm:$0xff]
    %v295 = vld [vmem:[#allocation5 + $0x558] sm:$0xff]
    %v296 = vld [vmem:[#allocation5 + $0x560] sm:$0xff]
    %v297 = vld [vmem:[#allocation5 + $0x568] sm:$0xff]
    %v298 = vld [vmem:[#allocation5 + $0x570] sm:$0xff]
    %v299 = vld [vmem:[#allocation5 + $0x578] sm:$0xff]
    %v300 = vld [vmem:[#allocation5 + $0x580] sm:$0xff]
    %v301 = vld [vmem:[#allocation5 + $0x588] sm:$0xff]
    %v302 = vld [vmem:[#allocation5 + $0x590] sm:$0xff]
    %v303 = vld [vmem:[#allocation5 + $0x598] sm:$0xff]
    %v304 = vld [vmem:[#allocation5 + $0x5a0] sm:$0xff]
    %v305 = vld [vmem:[#allocation5 + $0x5a8] sm:$0xff]
    %v306 = vld [vmem:[#allocation5 + $0x5b0] sm:$0xff]
    %v307 = vld [vmem:[#allocation5 + $0x5b8] sm:$0xff]
    %v308 = vld [vmem:[#allocation5 + $0x5c0] sm:$0xff]
    %v309 = vld [vmem:[#allocation5 + $0x5c8] sm:$0xff]
    %v310 = vld [vmem:[#allocation5 + $0x5d0] sm:$0xff]
    %v311 = vld [vmem:[#allocation5 + $0x5d8] sm:$0xff]
    %v312 = vld [vmem:[#allocation5 + $0x5e0] sm:$0xff]
    %v313 = vld [vmem:[#allocation5 + $0x5e8] sm:$0xff]
    %v314 = vld [vmem:[#allocation5 + $0x5f0] sm:$0xff]
    %v315 = vld [vmem:[#allocation5 + $0x5f8] sm:$0xff]
    %v316 = vld [vmem:[#allocation5 + $0x600] sm:$0xff]
    %v317 = vld [vmem:[#allocation5 + $0x608] sm:$0xff]
    %v318 = vld [vmem:[#allocation5 + $0x610] sm:$0xff]
    %v319 = vld [vmem:[#allocation5 + $0x618] sm:$0xff]
    %v320 = vld [vmem:[#allocation5 + $0x620] sm:$0xff]
    %v321 = vld [vmem:[#allocation5 + $0x628] sm:$0xff]
    %v322 = vld [vmem:[#allocation5 + $0x630] sm:$0xff]
    %v323 = vld [vmem:[#allocation5 + $0x638] sm:$0xff]
    %v324 = vld [vmem:[#allocation5 + $0x640] sm:$0xff]
    %v325 = vld [vmem:[#allocation5 + $0x648] sm:$0xff]
    %v326 = vld [vmem:[#allocation5 + $0x650] sm:$0xff]
    %v327 = vld [vmem:[#allocation5 + $0x658] sm:$0xff]
    %v328 = vld [vmem:[#allocation5 + $0x660] sm:$0xff]
    %v329 = vld [vmem:[#allocation5 + $0x668] sm:$0xff]
    %v330 = vld [vmem:[#allocation5 + $0x670] sm:$0xff]
    %v331 = vld [vmem:[#allocation5 + $0x678] sm:$0xff]
    %v332 = vld [vmem:[#allocation5 + $0x680] sm:$0xff]
    %v333 = vld [vmem:[#allocation5 + $0x688] sm:$0xff]
    %v334 = vld [vmem:[#allocation5 + $0x690] sm:$0xff]
    %v335 = vld [vmem:[#allocation5 + $0x698] sm:$0xff]
    %v336 = vld [vmem:[#allocation5 + $0x6a0] sm:$0xff]
    %v337 = vld [vmem:[#allocation5 + $0x6a8] sm:$0xff]
    %v338 = vld [vmem:[#allocation5 + $0x6b0] sm:$0xff]
    %v339 = vld [vmem:[#allocation5 + $0x6b8] sm:$0xff]
    %v340 = vld [vmem:[#allocation5 + $0x6c0] sm:$0xff]
    %v341 = vld [vmem:[#allocation5 + $0x6c8] sm:$0xff]
    %v342 = vld [vmem:[#allocation5 + $0x6d0] sm:$0xff]
    %v343 = vld [vmem:[#allocation5 + $0x6d8] sm:$0xff]
    %v344 = vld [vmem:[#allocation5 + $0x6e0] sm:$0xff]
    %v345 = vld [vmem:[#allocation5 + $0x6e8] sm:$0xff]
    %v346 = vld [vmem:[#allocation5 + $0x6f0] sm:$0xff]
    %v347 = vld [vmem:[#allocation5 + $0x6f8] sm:$0xff]
    %v348 = vld [vmem:[#allocation5 + $0x700] sm:$0xff]
    %v349 = vld [vmem:[#allocation5 + $0x708] sm:$0xff]
    %v350 = vld [vmem:[#allocation5 + $0x710] sm:$0xff]
    %v351 = vld [vmem:[#allocation5 + $0x718] sm:$0xff]
    %v352 = vld [vmem:[#allocation5 + $0x720] sm:$0xff]
    %v353 = vld [vmem:[#allocation5 + $0x728] sm:$0xff]
    %v354 = vld [vmem:[#allocation5 + $0x730] sm:$0xff]
    %v355 = vld [vmem:[#allocation5 + $0x738] sm:$0xff]
    %v356 = vld [vmem:[#allocation5 + $0x740] sm:$0xff]
    %v357 = vld [vmem:[#allocation5 + $0x748] sm:$0xff]
    %v358 = vld [vmem:[#allocation5 + $0x750] sm:$0xff]
    %v359 = vld [vmem:[#allocation5 + $0x758] sm:$0xff]
    %v360 = vld [vmem:[#allocation5 + $0x760] sm:$0xff]
    %v361 = vld [vmem:[#allocation5 + $0x768] sm:$0xff]
    %v362 = vld [vmem:[#allocation5 + $0x770] sm:$0xff]
    %v363 = vld [vmem:[#allocation5 + $0x778] sm:$0xff]
    %v364 = vld [vmem:[#allocation5 + $0x780] sm:$0xff]
    %v365 = vld [vmem:[#allocation5 + $0x788] sm:$0xff]
    %v366 = vld [vmem:[#allocation5 + $0x790] sm:$0xff]
    %v367 = vld [vmem:[#allocation5 + $0x798] sm:$0xff]
    %v368 = vld [vmem:[#allocation5 + $0x7a0] sm:$0xff]
    %v369 = vld [vmem:[#allocation5 + $0x7a8] sm:$0xff]
    %v370 = vld [vmem:[#allocation5 + $0x7b0] sm:$0xff]
    %v371 = vld [vmem:[#allocation5 + $0x7b8] sm:$0xff]
    %v372 = vld [vmem:[#allocation5 + $0x7c0] sm:$0xff]
    %v373 = vld [vmem:[#allocation5 + $0x7c8] sm:$0xff]
    %v374 = vld [vmem:[#allocation5 + $0x7d0] sm:$0xff]
    %v375 = vld [vmem:[#allocation5 + $0x7d8] sm:$0xff]
    %v376 = vld [vmem:[#allocation5 + $0x7e0] sm:$0xff]
    %v377 = vld [vmem:[#allocation5 + $0x7e8] sm:$0xff]
    %v378 = vld [vmem:[#allocation5 + $0x7f0] sm:$0xff]
    %v379 = vld [vmem:[#allocation5 + $0x7f8] sm:$0xff]
    %v380 = vld [vmem:[#allocation5 + $0x800] sm:$0xff]
    %v381 = vld [vmem:[#allocation5 + $0x808] sm:$0xff]
    %v382 = vld [vmem:[#allocation5 + $0x810] sm:$0xff]
    %v383 = vld [vmem:[#allocation5 + $0x818] sm:$0xff]
    %v384 = vld [vmem:[#allocation5 + $0x820] sm:$0xff]
    %v385 = vld [vmem:[#allocation5 + $0x828] sm:$0xff]
    %v386 = vld [vmem:[#allocation5 + $0x830] sm:$0xff]
    %v387 = vld [vmem:[#allocation5 + $0x838] sm:$0xff]
    %v388 = vld [vmem:[#allocation5 + $0x840] sm:$0xff]
    %v389 = vld [vmem:[#allocation5 + $0x848] sm:$0xff]
    %v390 = vld [vmem:[#allocation5 + $0x850] sm:$0xff]
    %v391 = vld [vmem:[#allocation5 + $0x858] sm:$0xff]
    %v392 = vld [vmem:[#allocation5 + $0x860] sm:$0xff]
    %v393 = vld [vmem:[#allocation5 + $0x868] sm:$0xff]
    %v394 = vld [vmem:[#allocation5 + $0x870] sm:$0xff]
    %v395 = vld [vmem:[#allocation5 + $0x878] sm:$0xff]
    %v396 = vld [vmem:[#allocation5 + $0x880] sm:$0xff]
    %v397 = vld [vmem:[#allocation5 + $0x888] sm:$0xff]
    %v398 = vld [vmem:[#allocation5 + $0x890] sm:$0xff]
    %v399 = vld [vmem:[#allocation5 + $0x898] sm:$0xff]
    %v400 = vld [vmem:[#allocation5 + $0x8a0] sm:$0xff]
    %v401 = vld [vmem:[#allocation5 + $0x8a8] sm:$0xff]
    %v402 = vld [vmem:[#allocation5 + $0x8b0] sm:$0xff]
    %v403 = vld [vmem:[#allocation5 + $0x8b8] sm:$0xff]
    %v404 = vld [vmem:[#allocation5 + $0x8c0] sm:$0xff]
    %v405 = vld [vmem:[#allocation5 + $0x8c8] sm:$0xff]
    %v406 = vld [vmem:[#allocation5 + $0x8d0] sm:$0xff]
    %v407 = vld [vmem:[#allocation5 + $0x8d8] sm:$0xff]
    %v408 = vld [vmem:[#allocation5 + $0x8e0] sm:$0xff]
    %v409 = vld [vmem:[#allocation5 + $0x8e8] sm:$0xff]
    %v410 = vld [vmem:[#allocation5 + $0x8f0] sm:$0xff]
    %v411 = vld [vmem:[#allocation5 + $0x8f8] sm:$0xff]
    %v412 = vld [vmem:[#allocation5 + $0x900] sm:$0xff]
    %v413 = vld [vmem:[#allocation5 + $0x908] sm:$0xff]
    %v414 = vld [vmem:[#allocation5 + $0x910] sm:$0xff]
    %v415 = vld [vmem:[#allocation5 + $0x918] sm:$0xff]
    %v416 = vld [vmem:[#allocation5 + $0x920] sm:$0xff]
    %v417 = vld [vmem:[#allocation5 + $0x928] sm:$0xff]
    %v418 = vld [vmem:[#allocation5 + $0x930] sm:$0xff]
    %v419 = vld [vmem:[#allocation5 + $0x938] sm:$0xff]
    %v420 = vld [vmem:[#allocation5 + $0x940] sm:$0xff]
    %v421 = vld [vmem:[#allocation5 + $0x948] sm:$0xff]
    %v422 = vld [vmem:[#allocation5 + $0x950] sm:$0xff]
    %v423 = vld [vmem:[#allocation5 + $0x958] sm:$0xff]
    %v424 = vld [vmem:[#allocation5 + $0x960] sm:$0xff]
    %v425 = vld [vmem:[#allocation5 + $0x968] sm:$0xff]
    %v426 = vld [vmem:[#allocation5 + $0x970] sm:$0xff]
    %v427 = vld [vmem:[#allocation5 + $0x978] sm:$0xff]
    %v428 = vld [vmem:[#allocation5 + $0x980] sm:$0xff]
    %v429 = vld [vmem:[#allocation5 + $0x988] sm:$0xff]
    %v430 = vld [vmem:[#allocation5 + $0x990] sm:$0xff]
    %v431 = vld [vmem:[#allocation5 + $0x998] sm:$0xff]
    %v432 = vld [vmem:[#allocation5 + $0x9a0] sm:$0xff]
    %v433 = vld [vmem:[#allocation5 + $0x9a8] sm:$0xff]
    %v434 = vld [vmem:[#allocation5 + $0x9b0] sm:$0xff]
    %v435 = vld [vmem:[#allocation5 + $0x9b8] sm:$0xff]
    %v436 = vld [vmem:[#allocation5 + $0x9c0] sm:$0xff]
    %v437 = vld [vmem:[#allocation5 + $0x9c8] sm:$0xff]
    %v438 = vld [vmem:[#allocation5 + $0x9d0] sm:$0xff]
    %v439 = vld [vmem:[#allocation5 + $0x9d8] sm:$0xff]
    %v440 = vld [vmem:[#allocation5 + $0x9e0] sm:$0xff]
    %v441 = vld [vmem:[#allocation5 + $0x9e8] sm:$0xff]
    %v442 = vld [vmem:[#allocation5 + $0x9f0] sm:$0xff]
    %v443 = vld [vmem:[#allocation5 + $0x9f8] sm:$0xff]
    %v444 = vld [vmem:[#allocation5 + $0xa00] sm:$0xff]
    %v445 = vld [vmem:[#allocation5 + $0xa08] sm:$0xff]
    %v446 = vld [vmem:[#allocation5 + $0xa10] sm:$0xff]
    %v447 = vld [vmem:[#allocation5 + $0xa18] sm:$0xff]
    %v448 = vld [vmem:[#allocation5 + $0xa20] sm:$0xff]
    %v449 = vld [vmem:[#allocation5 + $0xa28] sm:$0xff]
    %v450 = vld [vmem:[#allocation5 + $0xa30] sm:$0xff]
    %v451 = vld [vmem:[#allocation5 + $0xa38] sm:$0xff]
    %v452 = vld [vmem:[#allocation5 + $0xa40] sm:$0xff]
    %v453 = vld [vmem:[#allocation5 + $0xa48] sm:$0xff]
    %v454 = vld [vmem:[#allocation5 + $0xa50] sm:$0xff]
    %v455 = vld [vmem:[#allocation5 + $0xa58] sm:$0xff]
    %v456 = vld [vmem:[#allocation5 + $0xa60] sm:$0xff]
    %v457 = vld [vmem:[#allocation5 + $0xa68] sm:$0xff]
    %v458 = vld [vmem:[#allocation5 + $0xa70] sm:$0xff]
    %v459 = vld [vmem:[#allocation5 + $0xa78] sm:$0xff]
    %v460 = vld [vmem:[#allocation5 + $0xa80] sm:$0xff]
    %v461 = vld [vmem:[#allocation5 + $0xa88] sm:$0xff]
    %v462 = vld [vmem:[#allocation5 + $0xa90] sm:$0xff]
    %v463 = vld [vmem:[#allocation5 + $0xa98] sm:$0xff]
    %v464 = vld [vmem:[#allocation5 + $0xaa0] sm:$0xff]
    %v465 = vld [vmem:[#allocation5 + $0xaa8] sm:$0xff]
    %v466 = vld [vmem:[#allocation5 + $0xab0] sm:$0xff]
    %v467 = vld [vmem:[#allocation5 + $0xab8] sm:$0xff]
    %v468 = vld [vmem:[#allocation5 + $0xac0] sm:$0xff]
    %v469 = vld [vmem:[#allocation5 + $0xac8] sm:$0xff]
    %v470 = vld [vmem:[#allocation5 + $0xad0] sm:$0xff]
    %v471 = vld [vmem:[#allocation5 + $0xad8] sm:$0xff]
    %v472 = vld [vmem:[#allocation5 + $0xae0] sm:$0xff]
    %v473 = vld [vmem:[#allocation5 + $0xae8] sm:$0xff]
    %v474 = vld [vmem:[#allocation5 + $0xaf0] sm:$0xff]
    %v475 = vld [vmem:[#allocation5 + $0xaf8] sm:$0xff]
    %v476 = vld [vmem:[#allocation5 + $0xb00] sm:$0xff]
    %v477 = vld [vmem:[#allocation5 + $0xb08] sm:$0xff]
    %v478 = vld [vmem:[#allocation5 + $0xb10] sm:$0xff]
    %v479 = vld [vmem:[#allocation5 + $0xb18] sm:$0xff]
    %v480 = vld [vmem:[#allocation5 + $0xb20] sm:$0xff]
    %v481 = vld [vmem:[#allocation5 + $0xb28] sm:$0xff]
    %v482 = vld [vmem:[#allocation5 + $0xb30] sm:$0xff]
    %v483 = vld [vmem:[#allocation5 + $0xb38] sm:$0xff]
    %v484 = vld [vmem:[#allocation5 + $0xb40] sm:$0xff]
    %v485 = vld [vmem:[#allocation5 + $0xb48] sm:$0xff]
    %v486 = vld [vmem:[#allocation5 + $0xb50] sm:$0xff]
    %v487 = vld [vmem:[#allocation5 + $0xb58] sm:$0xff]
    %v488 = vld [vmem:[#allocation5 + $0xb60] sm:$0xff]
    %v489 = vld [vmem:[#allocation5 + $0xb68] sm:$0xff]
    %v490 = vld [vmem:[#allocation5 + $0xb70] sm:$0xff]
    %v491 = vld [vmem:[#allocation5 + $0xb78] sm:$0xff]
    %v492 = vld [vmem:[#allocation5 + $0xb80] sm:$0xff]
    %v493 = vld [vmem:[#allocation5 + $0xb88] sm:$0xff]
    %v494 = vld [vmem:[#allocation5 + $0xb90] sm:$0xff]
    %v495 = vld [vmem:[#allocation5 + $0xb98] sm:$0xff]
    %v496 = vld [vmem:[#allocation5 + $0xba0] sm:$0xff]
    %v497 = vld [vmem:[#allocation5 + $0xba8] sm:$0xff]
    %v498 = vld [vmem:[#allocation5 + $0xbb0] sm:$0xff]
    %v499 = vld [vmem:[#allocation5 + $0xbb8] sm:$0xff]
    %v500 = vld [vmem:[#allocation5 + $0xbc0] sm:$0xff]
    %v501 = vld [vmem:[#allocation5 + $0xbc8] sm:$0xff]
    %v502 = vld [vmem:[#allocation5 + $0xbd0] sm:$0xff]
    %v503 = vld [vmem:[#allocation5 + $0xbd8] sm:$0xff]
    %v504 = vld [vmem:[#allocation5 + $0xbe0] sm:$0xff]
    %v505 = vld [vmem:[#allocation5 + $0xbe8] sm:$0xff]
    %v506 = vld [vmem:[#allocation5 + $0xbf0] sm:$0xff]
    %v507 = vld [vmem:[#allocation5 + $0xbf8] sm:$0xff]
    %v508 = vld [vmem:[#allocation5 + $0xc00] sm:$0xff]
    %v509 = vld [vmem:[#allocation5 + $0xc08] sm:$0xff]
    %v510 = vld [vmem:[#allocation5 + $0xc10] sm:$0xff]
    %v511 = vld [vmem:[#allocation5 + $0xc18] sm:$0xff]
    %v512 = vld [vmem:[#allocation5 + $0xc20] sm:$0xff]
    %v513 = vld [vmem:[#allocation5 + $0xc28] sm:$0xff]
    %v514 = vld [vmem:[#allocation5 + $0xc30] sm:$0xff]
    %v515 = vld [vmem:[#allocation5 + $0xc38] sm:$0xff]
    %v516 = vld [vmem:[#allocation5 + $0xc40] sm:$0xff]
    %v517 = vld [vmem:[#allocation5 + $0xc48] sm:$0xff]
    %v518 = vld [vmem:[#allocation5 + $0xc50] sm:$0xff]
    %v519 = vld [vmem:[#allocation5 + $0xc58] sm:$0xff]
    %v520 = vld [vmem:[#allocation5 + $0xc60] sm:$0xff]
    %v521 = vld [vmem:[#allocation5 + $0xc68] sm:$0xff]
    %v522 = vld [vmem:[#allocation5 + $0xc70] sm:$0xff]
    %v523 = vld [vmem:[#allocation5 + $0xc78] sm:$0xff]
    %v524 = vld [vmem:[#allocation5 + $0xc80] sm:$0xff]
    %v525 = vld [vmem:[#allocation5 + $0xc88] sm:$0xff]
    %v526 = vld [vmem:[#allocation5 + $0xc90] sm:$0xff]
    %v527 = vld [vmem:[#allocation5 + $0xc98] sm:$0xff]
    %v528 = vld [vmem:[#allocation5 + $0xca0] sm:$0xff]
    %v529 = vld [vmem:[#allocation5 + $0xca8] sm:$0xff]
    %v530 = vld [vmem:[#allocation5 + $0xcb0] sm:$0xff]
    %v531 = vld [vmem:[#allocation5 + $0xcb8] sm:$0xff]
    %v532 = vld [vmem:[#allocation5 + $0xcc0] sm:$0xff]
    %v533 = vld [vmem:[#allocation5 + $0xcc8] sm:$0xff]
    %v534 = vld [vmem:[#allocation5 + $0xcd0] sm:$0xff]
    %v535 = vld [vmem:[#allocation5 + $0xcd8] sm:$0xff]
    %v536 = vld [vmem:[#allocation5 + $0xce0] sm:$0xff]
    %v537 = vld [vmem:[#allocation5 + $0xce8] sm:$0xff]
    %v538 = vld [vmem:[#allocation5 + $0xcf0] sm:$0xff]
    %v539 = vld [vmem:[#allocation5 + $0xcf8] sm:$0xff]
    %v540 = vld [vmem:[#allocation5 + $0xd00] sm:$0xff]
    %v541 = vld [vmem:[#allocation5 + $0xd08] sm:$0xff]
    %v542 = vld [vmem:[#allocation5 + $0xd10] sm:$0xff]
    %v543 = vld [vmem:[#allocation5 + $0xd18] sm:$0xff]
    %v544 = vld [vmem:[#allocation5 + $0xd20] sm:$0xff]
    %v545 = vld [vmem:[#allocation5 + $0xd28] sm:$0xff]
    %v546 = vld [vmem:[#allocation5 + $0xd30] sm:$0xff]
    %v547 = vld [vmem:[#allocation5 + $0xd38] sm:$0xff]
    %v548 = vld [vmem:[#allocation5 + $0xd40] sm:$0xff]
    %v549 = vld [vmem:[#allocation5 + $0xd48] sm:$0xff]
    %v550 = vld [vmem:[#allocation5 + $0xd50] sm:$0xff]
    %v551 = vld [vmem:[#allocation5 + $0xd58] sm:$0xff]
    %v552 = vld [vmem:[#allocation5 + $0xd60] sm:$0xff]
    %v553 = vld [vmem:[#allocation5 + $0xd68] sm:$0xff]
    %v554 = vld [vmem:[#allocation5 + $0xd70] sm:$0xff]
    %v555 = vld [vmem:[#allocation5 + $0xd78] sm:$0xff]
    %v556 = vld [vmem:[#allocation5 + $0xd80] sm:$0xff]
    %v557 = vld [vmem:[#allocation5 + $0xd88] sm:$0xff]
    %v558 = vld [vmem:[#allocation5 + $0xd90] sm:$0xff]
    %v559 = vld [vmem:[#allocation5 + $0xd98] sm:$0xff]
    %v560 = vld [vmem:[#allocation5 + $0xda0] sm:$0xff]
    %v561 = vld [vmem:[#allocation5 + $0xda8] sm:$0xff]
    %v562 = vld [vmem:[#allocation5 + $0xdb0] sm:$0xff]
    %v563 = vld [vmem:[#allocation5 + $0xdb8] sm:$0xff]
    %v564 = vld [vmem:[#allocation5 + $0xdc0] sm:$0xff]
    %v565 = vld [vmem:[#allocation5 + $0xdc8] sm:$0xff]
    %v566 = vld [vmem:[#allocation5 + $0xdd0] sm:$0xff]
    %v567 = vld [vmem:[#allocation5 + $0xdd8] sm:$0xff]
    %v568 = vld [vmem:[#allocation5 + $0xde0] sm:$0xff]
    %v569 = vld [vmem:[#allocation5 + $0xde8] sm:$0xff]
    %v570 = vld [vmem:[#allocation5 + $0xdf0] sm:$0xff]
    %v571 = vld [vmem:[#allocation5 + $0xdf8] sm:$0xff]
    %v572 = vld [vmem:[#allocation5 + $0xe00] sm:$0xff]
    %v573 = vld [vmem:[#allocation5 + $0xe08] sm:$0xff]
    %v574 = vld [vmem:[#allocation5 + $0xe10] sm:$0xff]
    %v575 = vld [vmem:[#allocation5 + $0xe18] sm:$0xff]
    %v576 = vld [vmem:[#allocation5 + $0xe20] sm:$0xff]
    %v577 = vld [vmem:[#allocation5 + $0xe28] sm:$0xff]
    %v578 = vld [vmem:[#allocation5 + $0xe30] sm:$0xff]
    %v579 = vld [vmem:[#allocation5 + $0xe38] sm:$0xff]
    %v580 = vld [vmem:[#allocation5 + $0xe40] sm:$0xff]
    %v581 = vld [vmem:[#allocation5 + $0xe48] sm:$0xff]
    %v582 = vld [vmem:[#allocation5 + $0xe50] sm:$0xff]
    %v583 = vld [vmem:[#allocation5 + $0xe58] sm:$0xff]
    %v584 = vld [vmem:[#allocation5 + $0xe60] sm:$0xff]
    %v585 = vld [vmem:[#allocation5 + $0xe68] sm:$0xff]
    %v586 = vld [vmem:[#allocation5 + $0xe70] sm:$0xff]
    %v587 = vld [vmem:[#allocation5 + $0xe78] sm:$0xff]
    %v588 = vld [vmem:[#allocation5 + $0xe80] sm:$0xff]
    %v589 = vld [vmem:[#allocation5 + $0xe88] sm:$0xff]
    %v590 = vld [vmem:[#allocation5 + $0xe90] sm:$0xff]
    %v591 = vld [vmem:[#allocation5 + $0xe98] sm:$0xff]
    %v592 = vld [vmem:[#allocation5 + $0xea0] sm:$0xff]
    %v593 = vld [vmem:[#allocation5 + $0xea8] sm:$0xff]
    %v594 = vld [vmem:[#allocation5 + $0xeb0] sm:$0xff]
    %v595 = vld [vmem:[#allocation5 + $0xeb8] sm:$0xff]
    %v596 = vld [vmem:[#allocation5 + $0xec0] sm:$0xff]
    %v597 = vld [vmem:[#allocation5 + $0xec8] sm:$0xff]
    %v598 = vld [vmem:[#allocation5 + $0xed0] sm:$0xff]
    %v599 = vld [vmem:[#allocation5 + $0xed8] sm:$0xff]
    %v600 = vld [vmem:[#allocation5 + $0xee0] sm:$0xff]
    %v601 = vld [vmem:[#allocation5 + $0xee8] sm:$0xff]
    %v602 = vld [vmem:[#allocation5 + $0xef0] sm:$0xff]
    %v603 = vld [vmem:[#allocation5 + $0xef8] sm:$0xff]
    %v604 = vld [vmem:[#allocation5 + $0xf00] sm:$0xff]
    %v605 = vld [vmem:[#allocation5 + $0xf08] sm:$0xff]
    %v606 = vld [vmem:[#allocation5 + $0xf10] sm:$0xff]
    %v607 = vld [vmem:[#allocation5 + $0xf18] sm:$0xff]
    %v608 = vld [vmem:[#allocation5 + $0xf20] sm:$0xff]
    %v609 = vld [vmem:[#allocation5 + $0xf28] sm:$0xff]
    %v610 = vld [vmem:[#allocation5 + $0xf30] sm:$0xff]
    %v611 = vld [vmem:[#allocation5 + $0xf38] sm:$0xff]
    %v612 = vld [vmem:[#allocation5 + $0xf40] sm:$0xff]
    %v613 = vld [vmem:[#allocation5 + $0xf48] sm:$0xff]
    %v614 = vld [vmem:[#allocation5 + $0xf50] sm:$0xff]
    %v615 = vld [vmem:[#allocation5 + $0xf58] sm:$0xff]
    %v616 = vld [vmem:[#allocation5 + $0xf60] sm:$0xff]
    %v617 = vld [vmem:[#allocation5 + $0xf68] sm:$0xff]
    %v618 = vld [vmem:[#allocation5 + $0xf70] sm:$0xff]
    %v619 = vld [vmem:[#allocation5 + $0xf78] sm:$0xff]
    %v620 = vld [vmem:[#allocation5 + $0xf80] sm:$0xff]
    %v621 = vld [vmem:[#allocation5 + $0xf88] sm:$0xff]
    %v622 = vld [vmem:[#allocation5 + $0xf90] sm:$0xff]
    %v623 = vld [vmem:[#allocation5 + $0xf98] sm:$0xff]
    %v624 = vld [vmem:[#allocation5 + $0xfa0] sm:$0xff]
    %v625 = vld [vmem:[#allocation5 + $0xfa8] sm:$0xff]
    %v626 = vld [vmem:[#allocation5 + $0xfb0] sm:$0xff]
    %v627 = vld [vmem:[#allocation5 + $0xfb8] sm:$0xff]
    %v628 = vld [vmem:[#allocation5 + $0xfc0] sm:$0xff]
    %v629 = vld [vmem:[#allocation5 + $0xfc8] sm:$0xff]
    %v630 = vld [vmem:[#allocation5 + $0xfd0] sm:$0xff]
    %v631 = vld [vmem:[#allocation5 + $0xfd8] sm:$0xff]
    %v632 = vld [vmem:[#allocation5 + $0xfe0] sm:$0xff]
    %v633 = vld [vmem:[#allocation5 + $0xfe8] sm:$0xff]
    %v634 = vld [vmem:[#allocation5 + $0xff0] sm:$0xff]
    %v635 = vld [vmem:[#allocation5 + $0xff8] sm:$0xff]
    %v636 = vld [vmem:[#allocation8] sm:$0xff]
    %v638 = vlaneseq
    %v639 = vshrl.u32 %v638, 7
    %v640 = vsub.s32 0, %v639
    %v641 = vrot.slane %v636, %v640
    %v642 = vlaneseq
    %v643 = vshrl.u32 %v642, 7
    %v644 = vsub.s32 1, %v643
    %v645 = vrot.slane %v636, %v644
    %v646 = vlaneseq
    %v647 = vshrl.u32 %v646, 7
    %v648 = vsub.s32 2, %v647
    %v649 = vrot.slane %v636, %v648
    %v650 = vlaneseq
    %v651 = vshrl.u32 %v650, 7
    %v652 = vsub.s32 3, %v651
    %v653 = vrot.slane %v636, %v652
    %v654 = vlaneseq
    %v655 = vshrl.u32 %v654, 7
    %v656 = vsub.s32 4, %v655
    %v657 = vrot.slane %v636, %v656
    %v658 = vlaneseq
    %v659 = vshrl.u32 %v658, 7
    %v660 = vsub.s32 5, %v659
    %v661 = vrot.slane %v636, %v660
    %v662 = vlaneseq
    %v663 = vshrl.u32 %v662, 7
    %v664 = vsub.s32 6, %v663
    %v665 = vrot.slane %v636, %v664
    %v666 = vlaneseq
    %v667 = vshrl.u32 %v666, 7
    %v668 = vsub.s32 7, %v667
    %v669 = vrot.slane %v636, %v668
    %678 = vmatprep.subr.mxu0 %v245
    %679 = vmatpush1.msra.mxu0 %v244
    %680 = vmatprep.subr.mxu0 %v237
    %681 = vmatpush1.msra.mxu0 %v236
    %682 = vmatprep.subr.mxu0 %v229
    %683 = vmatpush1.msra.mxu0 %v228
    %684 = vmatprep.subr.mxu0 %v221
    %685 = vmatpush1.msra.mxu0 %v220
    %686 = vmatprep.subr.mxu0 %v213
    %687 = vmatpush1.msra.mxu0 %v212
    %688 = vmatprep.subr.mxu0 %v205
    %689 = vmatpush1.msra.mxu0 %v204
    %690 = vmatprep.subr.mxu0 %v197
    %691 = vmatpush1.msra.mxu0 %v196
    %692 = vmatprep.subr.mxu0 %v189
    %693 = vmatpush1.msra.mxu0 %v188
    %694 = vmatprep.subr.mxu0 %v181
    %695 = vmatpush1.msra.mxu0 %v180
    %696 = vmatprep.subr.mxu0 %v173
    %697 = vmatpush1.msra.mxu0 %v172
    %698 = vmatprep.subr.mxu0 %v165
    %699 = vmatpush1.msra.mxu0 %v164
    %700 = vmatprep.subr.mxu0 %v157
    %701 = vmatpush1.msra.mxu0 %v156
    %702 = vmatprep.subr.mxu0 %v149
    %703 = vmatpush1.msra.mxu0 %v148
    %704 = vmatprep.subr.mxu0 %v141
    %705 = vmatpush1.msra.mxu0 %v140
    %706 = vmatprep.subr.mxu0 %v133
    %707 = vmatpush1.msra.mxu0 %v132
    %708 = vmatprep.subr.mxu0 %v125
    %709 = vmatpush1.msra.mxu0 %v124
    %710 = vmatprep.subr.mxu0 %v373
    %711 = vmatpush2.msra.mxu0 %v372
    %712 = vmatprep.subr.mxu0 %v365
    %713 = vmatpush2.msra.mxu0 %v364
    %714 = vmatprep.subr.mxu0 %v357
    %715 = vmatpush2.msra.mxu0 %v356
    %716 = vmatprep.subr.mxu0 %v349
    %717 = vmatpush2.msra.mxu0 %v348
    %718 = vmatprep.subr.mxu0 %v341
    %719 = vmatpush2.msra.mxu0 %v340
    %720 = vmatprep.subr.mxu0 %v333
    %721 = vmatpush2.msra.mxu0 %v332
    %722 = vmatprep.subr.mxu0 %v325
    %723 = vmatpush2.msra.mxu0 %v324
    %724 = vmatprep.subr.mxu0 %v317
    %725 = vmatpush2.msra.mxu0 %v316
    %726 = vmatprep.subr.mxu0 %v309
    %727 = vmatpush2.msra.mxu0 %v308
    %728 = vmatprep.subr.mxu0 %v301
    %729 = vmatpush2.msra.mxu0 %v300
    %730 = vmatprep.subr.mxu0 %v293
    %731 = vmatpush2.msra.mxu0 %v292
    %732 = vmatprep.subr.mxu0 %v285
    %733 = vmatpush2.msra.mxu0 %v284
    %734 = vmatprep.subr.mxu0 %v277
    %735 = vmatpush2.msra.mxu0 %v276
    %736 = vmatprep.subr.mxu0 %v269
    %737 = vmatpush2.msra.mxu0 %v268
    %738 = vmatprep.subr.mxu0 %v261
    %739 = vmatpush2.msra.mxu0 %v260
    %740 = vmatprep.subr.mxu0 %v253
    %741 = vmatpush2.msra.mxu0 %v252
    %742 = vmatprep.mubr.f32.mxu0 %v117
    %743 = vmatmul.mubr.f32.gmra.mxu0 %v116
    %v744 = vpop.f32.mrf.mxu0
    %v745 = vadd.f32 %v641, %v744
    %v746 = vpop.f32.mrf.mxu0
    %v747 = vadd.f32 %v645, %v746
    %748 = vmatprep.mubr.f32.mxu0 %v121
    %749 = vmatmul.mubr.f32.gmra.mxu0 %v120
    %v750 = vpop.f32.mrf.mxu0
    %v751 = vadd.f32 %v641, %v750
    %v752 = vpop.f32.mrf.mxu0
    %v753 = vadd.f32 %v645, %v752
    %754 = vdwg.mxu0
    %755 = vmatprep.subr.mxu0 %v501
    %756 = vmatpush1.msra.mxu0 %v500
    %757 = vmatprep.subr.mxu0 %v493
    %758 = vmatpush1.msra.mxu0 %v492
    %759 = vmatprep.subr.mxu0 %v485
    %760 = vmatpush1.msra.mxu0 %v484
    %761 = vmatprep.subr.mxu0 %v477
    %762 = vmatpush1.msra.mxu0 %v476
    %763 = vmatprep.subr.mxu0 %v469
    %764 = vmatpush1.msra.mxu0 %v468
    %765 = vmatprep.subr.mxu0 %v461
    %766 = vmatpush1.msra.mxu0 %v460
    %767 = vmatprep.subr.mxu0 %v453
    %768 = vmatpush1.msra.mxu0 %v452
    %769 = vmatprep.subr.mxu0 %v445
    %770 = vmatpush1.msra.mxu0 %v444
    %771 = vmatprep.subr.mxu0 %v437
    %772 = vmatpush1.msra.mxu0 %v436
    %773 = vmatprep.subr.mxu0 %v429
    %774 = vmatpush1.msra.mxu0 %v428
    %775 = vmatprep.subr.mxu0 %v421
    %776 = vmatpush1.msra.mxu0 %v420
    %777 = vmatprep.subr.mxu0 %v413
    %778 = vmatpush1.msra.mxu0 %v412
    %779 = vmatprep.subr.mxu0 %v405
    %780 = vmatpush1.msra.mxu0 %v404
    %781 = vmatprep.subr.mxu0 %v397
    %782 = vmatpush1.msra.mxu0 %v396
    %783 = vmatprep.subr.mxu0 %v389
    %784 = vmatpush1.msra.mxu0 %v388
    %785 = vmatprep.subr.mxu0 %v381
    %786 = vmatpush1.msra.mxu0 %v380
    %787 = vmatprep.subr.mxu0 %v629
    %788 = vmatpush2.msra.mxu0 %v628
    %789 = vmatprep.subr.mxu0 %v621
    %790 = vmatpush2.msra.mxu0 %v620
    %791 = vmatprep.subr.mxu0 %v613
    %792 = vmatpush2.msra.mxu0 %v612
    %793 = vmatprep.subr.mxu0 %v605
    %794 = vmatpush2.msra.mxu0 %v604
    %795 = vmatprep.subr.mxu0 %v597
    %796 = vmatpush2.msra.mxu0 %v596
    %797 = vmatprep.subr.mxu0 %v589
    %798 = vmatpush2.msra.mxu0 %v588
    %799 = vmatprep.subr.mxu0 %v581
    %800 = vmatpush2.msra.mxu0 %v580
    %801 = vmatprep.subr.mxu0 %v573
    %802 = vmatpush2.msra.mxu0 %v572
    %803 = vmatprep.subr.mxu0 %v565
    %804 = vmatpush2.msra.mxu0 %v564
    %805 = vmatprep.subr.mxu0 %v557
    %806 = vmatpush2.msra.mxu0 %v556
    %807 = vmatprep.subr.mxu0 %v549
    %808 = vmatpush2.msra.mxu0 %v548
    %809 = vmatprep.subr.mxu0 %v541
    %810 = vmatpush2.msra.mxu0 %v540
    %811 = vmatprep.subr.mxu0 %v533
    %812 = vmatpush2.msra.mxu0 %v532
    %813 = vmatprep.subr.mxu0 %v525
    %814 = vmatpush2.msra.mxu0 %v524
    %815 = vmatprep.subr.mxu0 %v517
    %816 = vmatpush2.msra.mxu0 %v516
    %817 = vmatprep.subr.mxu0 %v509
    %818 = vmatpush2.msra.mxu0 %v508
    %819 = vmatprep.mubr.f32.mxu0 %v119
    %820 = vmatmul.mubr.f32.gmra.mxu0 %v118
    %v821 = vpop.f32.mrf.mxu0
    %v822 = vadd.f32 %v745, %v821
    %v823 = vpop.f32.mrf.mxu0
    %v824 = vadd.f32 %v747, %v823
    %825 = vmatprep.mubr.f32.mxu0 %v123
    %826 = vmatmul.mubr.f32.gmra.mxu0 %v122
    %v827 = vpop.f32.mrf.mxu0
    %v828 = vadd.f32 %v751, %v827
    %v829 = vpop.f32.mrf.mxu0
    %v830 = vadd.f32 %v753, %v829
    %831 = vdwg.mxu0
    %832 = vmatprep.subr.mxu0 %v247
    %833 = vmatpush1.msra.mxu0 %v246
    %834 = vmatprep.subr.mxu0 %v239
    %835 = vmatpush1.msra.mxu0 %v238
    %836 = vmatprep.subr.mxu0 %v231
    %837 = vmatpush1.msra.mxu0 %v230
    %838 = vmatprep.subr.mxu0 %v223
    %839 = vmatpush1.msra.mxu0 %v222
    %840 = vmatprep.subr.mxu0 %v215
    %841 = vmatpush1.msra.mxu0 %v214
    %842 = vmatprep.subr.mxu0 %v207
    %843 = vmatpush1.msra.mxu0 %v206
    %844 = vmatprep.subr.mxu0 %v199
    %845 = vmatpush1.msra.mxu0 %v198
    %846 = vmatprep.subr.mxu0 %v191
    %847 = vmatpush1.msra.mxu0 %v190
    %848 = vmatprep.subr.mxu0 %v183
    %849 = vmatpush1.msra.mxu0 %v182
    %850 = vmatprep.subr.mxu0 %v175
    %851 = vmatpush1.msra.mxu0 %v174
    %852 = vmatprep.subr.mxu0 %v167
    %853 = vmatpush1.msra.mxu0 %v166
    %854 = vmatprep.subr.mxu0 %v159
    %855 = vmatpush1.msra.mxu0 %v158
    %856 = vmatprep.subr.mxu0 %v151
    %857 = vmatpush1.msra.mxu0 %v150
    %858 = vmatprep.subr.mxu0 %v143
    %859 = vmatpush1.msra.mxu0 %v142
    %860 = vmatprep.subr.mxu0 %v135
    %861 = vmatpush1.msra.mxu0 %v134
    %862 = vmatprep.subr.mxu0 %v127
    %863 = vmatpush1.msra.mxu0 %v126
    %864 = vmatprep.subr.mxu0 %v375
    %865 = vmatpush2.msra.mxu0 %v374
    %866 = vmatprep.subr.mxu0 %v367
    %867 = vmatpush2.msra.mxu0 %v366
    %868 = vmatprep.subr.mxu0 %v359
    %869 = vmatpush2.msra.mxu0 %v358
    %870 = vmatprep.subr.mxu0 %v351
    %871 = vmatpush2.msra.mxu0 %v350
    %872 = vmatprep.subr.mxu0 %v343
    %873 = vmatpush2.msra.mxu0 %v342
    %874 = vmatprep.subr.mxu0 %v335
    %875 = vmatpush2.msra.mxu0 %v334
    %876 = vmatprep.subr.mxu0 %v327
    %877 = vmatpush2.msra.mxu0 %v326
    %878 = vmatprep.subr.mxu0 %v319
    %879 = vmatpush2.msra.mxu0 %v318
    %880 = vmatprep.subr.mxu0 %v311
    %881 = vmatpush2.msra.mxu0 %v310
    %882 = vmatprep.subr.mxu0 %v303
    %883 = vmatpush2.msra.mxu0 %v302
    %884 = vmatprep.subr.mxu0 %v295
    %885 = vmatpush2.msra.mxu0 %v294
    %886 = vmatprep.subr.mxu0 %v287
    %887 = vmatpush2.msra.mxu0 %v286
    %888 = vmatprep.subr.mxu0 %v279
    %889 = vmatpush2.msra.mxu0 %v278
    %890 = vmatprep.subr.mxu0 %v271
    %891 = vmatpush2.msra.mxu0 %v270
    %892 = vmatprep.subr.mxu0 %v263
    %893 = vmatpush2.msra.mxu0 %v262
    %894 = vmatprep.subr.mxu0 %v255
    %895 = vmatpush2.msra.mxu0 %v254
    %896 = vmatprep.mubr.f32.mxu0 %v117
    %897 = vmatmul.mubr.f32.gmra.mxu0 %v116
    %v898 = vpop.f32.mrf.mxu0
    %v899 = vadd.f32 %v649, %v898
    %v900 = vpop.f32.mrf.mxu0
    %v901 = vadd.f32 %v653, %v900
    %902 = vmatprep.mubr.f32.mxu0 %v121
    %903 = vmatmul.mubr.f32.gmra.mxu0 %v120
    %v904 = vpop.f32.mrf.mxu0
    %v905 = vadd.f32 %v649, %v904
    %v906 = vpop.f32.mrf.mxu0
    %v907 = vadd.f32 %v653, %v906
    %908 = vdwg.mxu0
    %909 = vmatprep.subr.mxu0 %v503
    %910 = vmatpush1.msra.mxu0 %v502
    %911 = vmatprep.subr.mxu0 %v495
    %912 = vmatpush1.msra.mxu0 %v494
    %913 = vmatprep.subr.mxu0 %v487
    %914 = vmatpush1.msra.mxu0 %v486
    %915 = vmatprep.subr.mxu0 %v479
    %916 = vmatpush1.msra.mxu0 %v478
    %917 = vmatprep.subr.mxu0 %v471
    %918 = vmatpush1.msra.mxu0 %v470
    %919 = vmatprep.subr.mxu0 %v463
    %920 = vmatpush1.msra.mxu0 %v462
    %921 = vmatprep.subr.mxu0 %v455
    %922 = vmatpush1.msra.mxu0 %v454
    %923 = vmatprep.subr.mxu0 %v447
    %924 = vmatpush1.msra.mxu0 %v446
    %925 = vmatprep.subr.mxu0 %v439
    %926 = vmatpush1.msra.mxu0 %v438
    %927 = vmatprep.subr.mxu0 %v431
    %928 = vmatpush1.msra.mxu0 %v430
    %929 = vmatprep.subr.mxu0 %v423
    %930 = vmatpush1.msra.mxu0 %v422
    %931 = vmatprep.subr.mxu0 %v415
    %932 = vmatpush1.msra.mxu0 %v414
    %933 = vmatprep.subr.mxu0 %v407
    %934 = vmatpush1.msra.mxu0 %v406
    %935 = vmatprep.subr.mxu0 %v399
    %936 = vmatpush1.msra.mxu0 %v398
    %937 = vmatprep.subr.mxu0 %v391
    %938 = vmatpush1.msra.mxu0 %v390
    %939 = vmatprep.subr.mxu0 %v383
    %940 = vmatpush1.msra.mxu0 %v382
    %941 = vmatprep.subr.mxu0 %v631
    %942 = vmatpush2.msra.mxu0 %v630
    %943 = vmatprep.subr.mxu0 %v623
    %944 = vmatpush2.msra.mxu0 %v622
    %945 = vmatprep.subr.mxu0 %v615
    %946 = vmatpush2.msra.mxu0 %v614
    %947 = vmatprep.subr.mxu0 %v607
    %948 = vmatpush2.msra.mxu0 %v606
    %949 = vmatprep.subr.mxu0 %v599
    %950 = vmatpush2.msra.mxu0 %v598
    %951 = vmatprep.subr.mxu0 %v591
    %952 = vmatpush2.msra.mxu0 %v590
    %953 = vmatprep.subr.mxu0 %v583
    %954 = vmatpush2.msra.mxu0 %v582
    %955 = vmatprep.subr.mxu0 %v575
    %956 = vmatpush2.msra.mxu0 %v574
    %957 = vmatprep.subr.mxu0 %v567
    %958 = vmatpush2.msra.mxu0 %v566
    %959 = vmatprep.subr.mxu0 %v559
    %960 = vmatpush2.msra.mxu0 %v558
    %961 = vmatprep.subr.mxu0 %v551
    %962 = vmatpush2.msra.mxu0 %v550
    %963 = vmatprep.subr.mxu0 %v543
    %964 = vmatpush2.msra.mxu0 %v542
    %965 = vmatprep.subr.mxu0 %v535
    %966 = vmatpush2.msra.mxu0 %v534
    %967 = vmatprep.subr.mxu0 %v527
    %968 = vmatpush2.msra.mxu0 %v526
    %969 = vmatprep.subr.mxu0 %v519
    %970 = vmatpush2.msra.mxu0 %v518
    %971 = vmatprep.subr.mxu0 %v511
    %972 = vmatpush2.msra.mxu0 %v510
    %973 = vmatprep.mubr.f32.mxu0 %v119
    %974 = vmatmul.mubr.f32.gmra.mxu0 %v118
    %v975 = vpop.f32.mrf.mxu0
    %v976 = vadd.f32 %v899, %v975
    %v977 = vpop.f32.mrf.mxu0
    %v978 = vadd.f32 %v901, %v977
    %979 = vmatprep.mubr.f32.mxu0 %v123
    %980 = vmatmul.mubr.f32.gmra.mxu0 %v122
    %v981 = vpop.f32.mrf.mxu0
    %v982 = vadd.f32 %v905, %v981
    %v983 = vpop.f32.mrf.mxu0
    %v984 = vadd.f32 %v907, %v983
    %985 = vdwg.mxu0
    %986 = vmatprep.subr.mxu0 %v249
    %987 = vmatpush1.msra.mxu0 %v248
    %988 = vmatprep.subr.mxu0 %v241
    %989 = vmatpush1.msra.mxu0 %v240
    %990 = vmatprep.subr.mxu0 %v233
    %991 = vmatpush1.msra.mxu0 %v232
    %992 = vmatprep.subr.mxu0 %v225
    %993 = vmatpush1.msra.mxu0 %v224
    %994 = vmatprep.subr.mxu0 %v217
    %995 = vmatpush1.msra.mxu0 %v216
    %996 = vmatprep.subr.mxu0 %v209
    %997 = vmatpush1.msra.mxu0 %v208
    %998 = vmatprep.subr.mxu0 %v201
    %999 = vmatpush1.msra.mxu0 %v200
    %1000 = vmatprep.subr.mxu0 %v193
    %1001 = vmatpush1.msra.mxu0 %v192
    %1002 = vmatprep.subr.mxu0 %v185
    %1003 = vmatpush1.msra.mxu0 %v184
    %1004 = vmatprep.subr.mxu0 %v177
    %1005 = vmatpush1.msra.mxu0 %v176
    %1006 = vmatprep.subr.mxu0 %v169
    %1007 = vmatpush1.msra.mxu0 %v168
    %1008 = vmatprep.subr.mxu0 %v161
    %1009 = vmatpush1.msra.mxu0 %v160
    %1010 = vmatprep.subr.mxu0 %v153
    %1011 = vmatpush1.msra.mxu0 %v152
    %1012 = vmatprep.subr.mxu0 %v145
    %1013 = vmatpush1.msra.mxu0 %v144
    %1014 = vmatprep.subr.mxu0 %v137
    %1015 = vmatpush1.msra.mxu0 %v136
    %1016 = vmatprep.subr.mxu0 %v129
    %1017 = vmatpush1.msra.mxu0 %v128
    %1018 = vmatprep.subr.mxu0 %v377
    %1019 = vmatpush2.msra.mxu0 %v376
    %1020 = vmatprep.subr.mxu0 %v369
    %1021 = vmatpush2.msra.mxu0 %v368
    %1022 = vmatprep.subr.mxu0 %v361
    %1023 = vmatpush2.msra.mxu0 %v360
    %1024 = vmatprep.subr.mxu0 %v353
    %1025 = vmatpush2.msra.mxu0 %v352
    %1026 = vmatprep.subr.mxu0 %v345
    %1027 = vmatpush2.msra.mxu0 %v344
    %1028 = vmatprep.subr.mxu0 %v337
    %1029 = vmatpush2.msra.mxu0 %v336
    %1030 = vmatprep.subr.mxu0 %v329
    %1031 = vmatpush2.msra.mxu0 %v328
    %1032 = vmatprep.subr.mxu0 %v321
    %1033 = vmatpush2.msra.mxu0 %v320
    %1034 = vmatprep.subr.mxu0 %v313
    %1035 = vmatpush2.msra.mxu0 %v312
    %1036 = vmatprep.subr.mxu0 %v305
    %1037 = vmatpush2.msra.mxu0 %v304
    %1038 = vmatprep.subr.mxu0 %v297
    %1039 = vmatpush2.msra.mxu0 %v296
    %1040 = vmatprep.subr.mxu0 %v289
    %1041 = vmatpush2.msra.mxu0 %v288
    %1042 = vmatprep.subr.mxu0 %v281
    %1043 = vmatpush2.msra.mxu0 %v280
    %1044 = vmatprep.subr.mxu0 %v273
    %1045 = vmatpush2.msra.mxu0 %v272
    %1046 = vmatprep.subr.mxu0 %v265
    %1047 = vmatpush2.msra.mxu0 %v264
    %1048 = vmatprep.subr.mxu0 %v257
    %1049 = vmatpush2.msra.mxu0 %v256
    %1050 = vmatprep.mubr.f32.mxu0 %v117
    %1051 = vmatmul.mubr.f32.gmra.mxu0 %v116
    %v1052 = vpop.f32.mrf.mxu0
    %v1053 = vadd.f32 %v657, %v1052
    %v1054 = vpop.f32.mrf.mxu0
    %v1055 = vadd.f32 %v661, %v1054
    %1056 = vmatprep.mubr.f32.mxu0 %v121
    %1057 = vmatmul.mubr.f32.gmra.mxu0 %v120
    %v1058 = vpop.f32.mrf.mxu0
    %v1059 = vadd.f32 %v657, %v1058
    %v1060 = vpop.f32.mrf.mxu0
    %v1061 = vadd.f32 %v661, %v1060
    %1062 = vdwg.mxu0
    %1063 = vmatprep.subr.mxu0 %v505
    %1064 = vmatpush1.msra.mxu0 %v504
    %1065 = vmatprep.subr.mxu0 %v497
    %1066 = vmatpush1.msra.mxu0 %v496
    %1067 = vmatprep.subr.mxu0 %v489
    %1068 = vmatpush1.msra.mxu0 %v488
    %1069 = vmatprep.subr.mxu0 %v481
    %1070 = vmatpush1.msra.mxu0 %v480
    %1071 = vmatprep.subr.mxu0 %v473
    %1072 = vmatpush1.msra.mxu0 %v472
    %1073 = vmatprep.subr.mxu0 %v465
    %1074 = vmatpush1.msra.mxu0 %v464
    %1075 = vmatprep.subr.mxu0 %v457
    %1076 = vmatpush1.msra.mxu0 %v456
    %1077 = vmatprep.subr.mxu0 %v449
    %1078 = vmatpush1.msra.mxu0 %v448
    %1079 = vmatprep.subr.mxu0 %v441
    %1080 = vmatpush1.msra.mxu0 %v440
    %1081 = vmatprep.subr.mxu0 %v433
    %1082 = vmatpush1.msra.mxu0 %v432
    %1083 = vmatprep.subr.mxu0 %v425
    %1084 = vmatpush1.msra.mxu0 %v424
    %1085 = vmatprep.subr.mxu0 %v417
    %1086 = vmatpush1.msra.mxu0 %v416
    %1087 = vmatprep.subr.mxu0 %v409
    %1088 = vmatpush1.msra.mxu0 %v408
    %1089 = vmatprep.subr.mxu0 %v401
    %1090 = vmatpush1.msra.mxu0 %v400
    %1091 = vmatprep.subr.mxu0 %v393
    %1092 = vmatpush1.msra.mxu0 %v392
    %1093 = vmatprep.subr.mxu0 %v385
    %1094 = vmatpush1.msra.mxu0 %v384
    %1095 = vmatprep.subr.mxu0 %v633
    %1096 = vmatpush2.msra.mxu0 %v632
    %1097 = vmatprep.subr.mxu0 %v625
    %1098 = vmatpush2.msra.mxu0 %v624
    %1099 = vmatprep.subr.mxu0 %v617
    %1100 = vmatpush2.msra.mxu0 %v616
    %1101 = vmatprep.subr.mxu0 %v609
    %1102 = vmatpush2.msra.mxu0 %v608
    %1103 = vmatprep.subr.mxu0 %v601
    %1104 = vmatpush2.msra.mxu0 %v600
    %1105 = vmatprep.subr.mxu0 %v593
    %1106 = vmatpush2.msra.mxu0 %v592
    %1107 = vmatprep.subr.mxu0 %v585
    %1108 = vmatpush2.msra.mxu0 %v584
    %1109 = vmatprep.subr.mxu0 %v577
    %1110 = vmatpush2.msra.mxu0 %v576
    %1111 = vmatprep.subr.mxu0 %v569
    %1112 = vmatpush2.msra.mxu0 %v568
    %1113 = vmatprep.subr.mxu0 %v561
    %1114 = vmatpush2.msra.mxu0 %v560
    %1115 = vmatprep.subr.mxu0 %v553
    %1116 = vmatpush2.msra.mxu0 %v552
    %1117 = vmatprep.subr.mxu0 %v545
    %1118 = vmatpush2.msra.mxu0 %v544
    %1119 = vmatprep.subr.mxu0 %v537
    %1120 = vmatpush2.msra.mxu0 %v536
    %1121 = vmatprep.subr.mxu0 %v529
    %1122 = vmatpush2.msra.mxu0 %v528
    %1123 = vmatprep.subr.mxu0 %v521
    %1124 = vmatpush2.msra.mxu0 %v520
    %1125 = vmatprep.subr.mxu0 %v513
    %1126 = vmatpush2.msra.mxu0 %v512
    %1127 = vmatprep.mubr.f32.mxu0 %v119
    %1128 = vmatmul.mubr.f32.gmra.mxu0 %v118
    %v1129 = vpop.f32.mrf.mxu0
    %v1130 = vadd.f32 %v1053, %v1129
    %v1131 = vpop.f32.mrf.mxu0
    %v1132 = vadd.f32 %v1055, %v1131
    %1133 = vmatprep.mubr.f32.mxu0 %v123
    %1134 = vmatmul.mubr.f32.gmra.mxu0 %v122
    %v1135 = vpop.f32.mrf.mxu0
    %v1136 = vadd.f32 %v1059, %v1135
    %v1137 = vpop.f32.mrf.mxu0
    %v1138 = vadd.f32 %v1061, %v1137
    %1139 = vdwg.mxu0
    %1140 = vmatprep.subr.mxu0 %v251
    %1141 = vmatpush1.msra.mxu0 %v250
    %1142 = vmatprep.subr.mxu0 %v243
    %1143 = vmatpush1.msra.mxu0 %v242
    %1144 = vmatprep.subr.mxu0 %v235
    %1145 = vmatpush1.msra.mxu0 %v234
    %1146 = vmatprep.subr.mxu0 %v227
    %1147 = vmatpush1.msra.mxu0 %v226
    %1148 = vmatprep.subr.mxu0 %v219
    %1149 = vmatpush1.msra.mxu0 %v218
    %1150 = vmatprep.subr.mxu0 %v211
    %1151 = vmatpush1.msra.mxu0 %v210
    %1152 = vmatprep.subr.mxu0 %v203
    %1153 = vmatpush1.msra.mxu0 %v202
    %1154 = vmatprep.subr.mxu0 %v195
    %1155 = vmatpush1.msra.mxu0 %v194
    %1156 = vmatprep.subr.mxu0 %v187
    %1157 = vmatpush1.msra.mxu0 %v186
    %1158 = vmatprep.subr.mxu0 %v179
    %1159 = vmatpush1.msra.mxu0 %v178
    %1160 = vmatprep.subr.mxu0 %v171
    %1161 = vmatpush1.msra.mxu0 %v170
    %1162 = vmatprep.subr.mxu0 %v163
    %1163 = vmatpush1.msra.mxu0 %v162
    %1164 = vmatprep.subr.mxu0 %v155
    %1165 = vmatpush1.msra.mxu0 %v154
    %1166 = vmatprep.subr.mxu0 %v147
    %1167 = vmatpush1.msra.mxu0 %v146
    %1168 = vmatprep.subr.mxu0 %v139
    %1169 = vmatpush1.msra.mxu0 %v138
    %1170 = vmatprep.subr.mxu0 %v131
    %1171 = vmatpush1.msra.mxu0 %v130
    %1172 = vmatprep.subr.mxu0 %v379
    %1173 = vmatpush2.msra.mxu0 %v378
    %1174 = vmatprep.subr.mxu0 %v371
    %1175 = vmatpush2.msra.mxu0 %v370
    %1176 = vmatprep.subr.mxu0 %v363
    %1177 = vmatpush2.msra.mxu0 %v362
    %1178 = vmatprep.subr.mxu0 %v355
    %1179 = vmatpush2.msra.mxu0 %v354
    %1180 = vmatprep.subr.mxu0 %v347
    %1181 = vmatpush2.msra.mxu0 %v346
    %1182 = vmatprep.subr.mxu0 %v339
    %1183 = vmatpush2.msra.mxu0 %v338
    %1184 = vmatprep.subr.mxu0 %v331
    %1185 = vmatpush2.msra.mxu0 %v330
    %1186 = vmatprep.subr.mxu0 %v323
    %1187 = vmatpush2.msra.mxu0 %v322
    %1188 = vmatprep.subr.mxu0 %v315
    %1189 = vmatpush2.msra.mxu0 %v314
    %1190 = vmatprep.subr.mxu0 %v307
    %1191 = vmatpush2.msra.mxu0 %v306
    %1192 = vmatprep.subr.mxu0 %v299
    %1193 = vmatpush2.msra.mxu0 %v298
    %1194 = vmatprep.subr.mxu0 %v291
    %1195 = vmatpush2.msra.mxu0 %v290
    %1196 = vmatprep.subr.mxu0 %v283
    %1197 = vmatpush2.msra.mxu0 %v282
    %1198 = vmatprep.subr.mxu0 %v275
    %1199 = vmatpush2.msra.mxu0 %v274
    %1200 = vmatprep.subr.mxu0 %v267
    %1201 = vmatpush2.msra.mxu0 %v266
    %1202 = vmatprep.subr.mxu0 %v259
    %1203 = vmatpush2.msra.mxu0 %v258
    %1204 = vmatprep.mubr.f32.mxu0 %v117
    %1205 = vmatmul.mubr.f32.gmra.mxu0 %v116
    %v1206 = vpop.f32.mrf.mxu0
    %v1207 = vadd.f32 %v665, %v1206
    %v1208 = vpop.f32.mrf.mxu0
    %v1209 = vadd.f32 %v669, %v1208
    %1210 = vmatprep.mubr.f32.mxu0 %v121
    %1211 = vmatmul.mubr.f32.gmra.mxu0 %v120
    %v1212 = vpop.f32.mrf.mxu0
    %v1213 = vadd.f32 %v665, %v1212
    %v1214 = vpop.f32.mrf.mxu0
    %v1215 = vadd.f32 %v669, %v1214
    %1216 = vdwg.mxu0
    %1217 = vmatprep.subr.mxu0 %v507
    %1218 = vmatpush1.msra.mxu0 %v506
    %1219 = vmatprep.subr.mxu0 %v499
    %1220 = vmatpush1.msra.mxu0 %v498
    %1221 = vmatprep.subr.mxu0 %v491
    %1222 = vmatpush1.msra.mxu0 %v490
    %1223 = vmatprep.subr.mxu0 %v483
    %1224 = vmatpush1.msra.mxu0 %v482
    %1225 = vmatprep.subr.mxu0 %v475
    %1226 = vmatpush1.msra.mxu0 %v474
    %1227 = vmatprep.subr.mxu0 %v467
    %1228 = vmatpush1.msra.mxu0 %v466
    %1229 = vmatprep.subr.mxu0 %v459
    %1230 = vmatpush1.msra.mxu0 %v458
    %1231 = vmatprep.subr.mxu0 %v451
    %1232 = vmatpush1.msra.mxu0 %v450
    %1233 = vmatprep.subr.mxu0 %v443
    %1234 = vmatpush1.msra.mxu0 %v442
    %1235 = vmatprep.subr.mxu0 %v435
    %1236 = vmatpush1.msra.mxu0 %v434
    %1237 = vmatprep.subr.mxu0 %v427
    %1238 = vmatpush1.msra.mxu0 %v426
    %1239 = vmatprep.subr.mxu0 %v419
    %1240 = vmatpush1.msra.mxu0 %v418
    %1241 = vmatprep.subr.mxu0 %v411
    %1242 = vmatpush1.msra.mxu0 %v410
    %1243 = vmatprep.subr.mxu0 %v403
    %1244 = vmatpush1.msra.mxu0 %v402
    %1245 = vmatprep.subr.mxu0 %v395
    %1246 = vmatpush1.msra.mxu0 %v394
    %1247 = vmatprep.subr.mxu0 %v387
    %1248 = vmatpush1.msra.mxu0 %v386
    %1249 = vmatprep.subr.mxu0 %v635
    %1250 = vmatpush2.msra.mxu0 %v634
    %1251 = vmatprep.subr.mxu0 %v627
    %1252 = vmatpush2.msra.mxu0 %v626
    %1253 = vmatprep.subr.mxu0 %v619
    %1254 = vmatpush2.msra.mxu0 %v618
    %1255 = vmatprep.subr.mxu0 %v611
    %1256 = vmatpush2.msra.mxu0 %v610
    %1257 = vmatprep.subr.mxu0 %v603
    %1258 = vmatpush2.msra.mxu0 %v602
    %1259 = vmatprep.subr.mxu0 %v595
    %1260 = vmatpush2.msra.mxu0 %v594
    %1261 = vmatprep.subr.mxu0 %v587
    %1262 = vmatpush2.msra.mxu0 %v586
    %1263 = vmatprep.subr.mxu0 %v579
    %1264 = vmatpush2.msra.mxu0 %v578
    %1265 = vmatprep.subr.mxu0 %v571
    %1266 = vmatpush2.msra.mxu0 %v570
    %1267 = vmatprep.subr.mxu0 %v563
    %1268 = vmatpush2.msra.mxu0 %v562
    %1269 = vmatprep.subr.mxu0 %v555
    %1270 = vmatpush2.msra.mxu0 %v554
    %1271 = vmatprep.subr.mxu0 %v547
    %1272 = vmatpush2.msra.mxu0 %v546
    %1273 = vmatprep.subr.mxu0 %v539
    %1274 = vmatpush2.msra.mxu0 %v538
    %1275 = vmatprep.subr.mxu0 %v531
    %1276 = vmatpush2.msra.mxu0 %v530
    %1277 = vmatprep.subr.mxu0 %v523
    %1278 = vmatpush2.msra.mxu0 %v522
    %1279 = vmatprep.subr.mxu0 %v515
    %1280 = vmatpush2.msra.mxu0 %v514
    %1281 = vmatprep.mubr.f32.mxu0 %v119
    %1282 = vmatmul.mubr.f32.gmra.mxu0 %v118
    %v1283 = vpop.f32.mrf.mxu0
    %v1284 = vadd.f32 %v1207, %v1283
    %v1285 = vpop.f32.mrf.mxu0
    %v1286 = vadd.f32 %v1209, %v1285
    %1287 = vmatprep.mubr.f32.mxu0 %v123
    %1288 = vmatmul.mubr.f32.gmra.mxu0 %v122
    %v1289 = vpop.f32.mrf.mxu0
    %v1290 = vadd.f32 %v1213, %v1289
    %v1291 = vpop.f32.mrf.mxu0
    %v1292 = vadd.f32 %v1215, %v1291
    %1293 = vdwg.mxu0
    %v1294 = vld [vmem:[#allocation7] sm:$0xff]
    %v1295 = vld [vmem:[#allocation7 + $0x8] sm:$0xff]
    %v1296 = vld [vmem:[#allocation7 + $0x10] sm:$0xff]
    %v1297 = vld [vmem:[#allocation7 + $0x18] sm:$0xff]
    %v1298 = vld [vmem:[#allocation7 + $0x20] sm:$0xff]
    %v1299 = vld [vmem:[#allocation7 + $0x28] sm:$0xff]
    %v1300 = vld [vmem:[#allocation7 + $0x30] sm:$0xff]
    %v1301 = vld [vmem:[#allocation7 + $0x38] sm:$0xff]
    %v1302 = vld [vmem:[#allocation7 + $0x40] sm:$0xff]
    %v1303 = vld [vmem:[#allocation7 + $0x48] sm:$0xff]
    %v1304 = vld [vmem:[#allocation7 + $0x50] sm:$0xff]
    %v1305 = vld [vmem:[#allocation7 + $0x58] sm:$0xff]
    %v1306 = vld [vmem:[#allocation7 + $0x60] sm:$0xff]
    %v1307 = vld [vmem:[#allocation7 + $0x68] sm:$0xff]
    %v1308 = vld [vmem:[#allocation7 + $0x70] sm:$0xff]
    %v1309 = vld [vmem:[#allocation7 + $0x78] sm:$0xff]
    %v1310 = vld [vmem:[#allocation7 + $0x80] sm:$0xff]
    %v1311 = vld [vmem:[#allocation7 + $0x88] sm:$0xff]
    %v1312 = vld [vmem:[#allocation7 + $0x90] sm:$0xff]
    %v1313 = vld [vmem:[#allocation7 + $0x98] sm:$0xff]
    %v1314 = vld [vmem:[#allocation7 + $0xa0] sm:$0xff]
    %v1315 = vld [vmem:[#allocation7 + $0xa8] sm:$0xff]
    %v1316 = vld [vmem:[#allocation7 + $0xb0] sm:$0xff]
    %v1317 = vld [vmem:[#allocation7 + $0xb8] sm:$0xff]
    %v1318 = vld [vmem:[#allocation7 + $0xc0] sm:$0xff]
    %v1319 = vld [vmem:[#allocation7 + $0xc8] sm:$0xff]
    %v1320 = vld [vmem:[#allocation7 + $0xd0] sm:$0xff]
    %v1321 = vld [vmem:[#allocation7 + $0xd8] sm:$0xff]
    %v1322 = vld [vmem:[#allocation7 + $0xe0] sm:$0xff]
    %v1323 = vld [vmem:[#allocation7 + $0xe8] sm:$0xff]
    %v1324 = vld [vmem:[#allocation7 + $0xf0] sm:$0xff]
    %v1325 = vld [vmem:[#allocation7 + $0xf8] sm:$0xff]
    %v1326 = vld [vmem:[#allocation7 + $0x100] sm:$0xff]
    %v1327 = vld [vmem:[#allocation7 + $0x108] sm:$0xff]
    %v1328 = vld [vmem:[#allocation7 + $0x110] sm:$0xff]
    %v1329 = vld [vmem:[#allocation7 + $0x118] sm:$0xff]
    %v1330 = vld [vmem:[#allocation7 + $0x120] sm:$0xff]
    %v1331 = vld [vmem:[#allocation7 + $0x128] sm:$0xff]
    %v1332 = vld [vmem:[#allocation7 + $0x130] sm:$0xff]
    %v1333 = vld [vmem:[#allocation7 + $0x138] sm:$0xff]
    %v1334 = vld [vmem:[#allocation7 + $0x140] sm:$0xff]
    %v1335 = vld [vmem:[#allocation7 + $0x148] sm:$0xff]
    %v1336 = vld [vmem:[#allocation7 + $0x150] sm:$0xff]
    %v1337 = vld [vmem:[#allocation7 + $0x158] sm:$0xff]
    %v1338 = vld [vmem:[#allocation7 + $0x160] sm:$0xff]
    %v1339 = vld [vmem:[#allocation7 + $0x168] sm:$0xff]
    %v1340 = vld [vmem:[#allocation7 + $0x170] sm:$0xff]
    %v1341 = vld [vmem:[#allocation7 + $0x178] sm:$0xff]
    %v1342 = vld [vmem:[#allocation7 + $0x180] sm:$0xff]
    %v1343 = vld [vmem:[#allocation7 + $0x188] sm:$0xff]
    %v1344 = vld [vmem:[#allocation7 + $0x190] sm:$0xff]
    %v1345 = vld [vmem:[#allocation7 + $0x198] sm:$0xff]
    %v1346 = vld [vmem:[#allocation7 + $0x1a0] sm:$0xff]
    %v1347 = vld [vmem:[#allocation7 + $0x1a8] sm:$0xff]
    %v1348 = vld [vmem:[#allocation7 + $0x1b0] sm:$0xff]
    %v1349 = vld [vmem:[#allocation7 + $0x1b8] sm:$0xff]
    %v1350 = vld [vmem:[#allocation7 + $0x1c0] sm:$0xff]
    %v1351 = vld [vmem:[#allocation7 + $0x1c8] sm:$0xff]
    %v1352 = vld [vmem:[#allocation7 + $0x1d0] sm:$0xff]
    %v1353 = vld [vmem:[#allocation7 + $0x1d8] sm:$0xff]
    %v1354 = vld [vmem:[#allocation7 + $0x1e0] sm:$0xff]
    %v1355 = vld [vmem:[#allocation7 + $0x1e8] sm:$0xff]
    %v1356 = vld [vmem:[#allocation7 + $0x1f0] sm:$0xff]
    %v1357 = vld [vmem:[#allocation7 + $0x1f8] sm:$0xff]
    %v1358 = vld [vmem:[#allocation7 + $0x200] sm:$0xff]
    %v1359 = vld [vmem:[#allocation7 + $0x208] sm:$0xff]
    %v1360 = vld [vmem:[#allocation7 + $0x210] sm:$0xff]
    %v1361 = vld [vmem:[#allocation7 + $0x218] sm:$0xff]
    %v1362 = vld [vmem:[#allocation7 + $0x220] sm:$0xff]
    %v1363 = vld [vmem:[#allocation7 + $0x228] sm:$0xff]
    %v1364 = vld [vmem:[#allocation7 + $0x230] sm:$0xff]
    %v1365 = vld [vmem:[#allocation7 + $0x238] sm:$0xff]
    %v1366 = vld [vmem:[#allocation7 + $0x240] sm:$0xff]
    %v1367 = vld [vmem:[#allocation7 + $0x248] sm:$0xff]
    %v1368 = vld [vmem:[#allocation7 + $0x250] sm:$0xff]
    %v1369 = vld [vmem:[#allocation7 + $0x258] sm:$0xff]
    %v1370 = vld [vmem:[#allocation7 + $0x260] sm:$0xff]
    %v1371 = vld [vmem:[#allocation7 + $0x268] sm:$0xff]
    %v1372 = vld [vmem:[#allocation7 + $0x270] sm:$0xff]
    %v1373 = vld [vmem:[#allocation7 + $0x278] sm:$0xff]
    %v1374 = vld [vmem:[#allocation7 + $0x280] sm:$0xff]
    %v1375 = vld [vmem:[#allocation7 + $0x288] sm:$0xff]
    %v1376 = vld [vmem:[#allocation7 + $0x290] sm:$0xff]
    %v1377 = vld [vmem:[#allocation7 + $0x298] sm:$0xff]
    %v1378 = vld [vmem:[#allocation7 + $0x2a0] sm:$0xff]
    %v1379 = vld [vmem:[#allocation7 + $0x2a8] sm:$0xff]
    %v1380 = vld [vmem:[#allocation7 + $0x2b0] sm:$0xff]
    %v1381 = vld [vmem:[#allocation7 + $0x2b8] sm:$0xff]
    %v1382 = vld [vmem:[#allocation7 + $0x2c0] sm:$0xff]
    %v1383 = vld [vmem:[#allocation7 + $0x2c8] sm:$0xff]
    %v1384 = vld [vmem:[#allocation7 + $0x2d0] sm:$0xff]
    %v1385 = vld [vmem:[#allocation7 + $0x2d8] sm:$0xff]
    %v1386 = vld [vmem:[#allocation7 + $0x2e0] sm:$0xff]
    %v1387 = vld [vmem:[#allocation7 + $0x2e8] sm:$0xff]
    %v1388 = vld [vmem:[#allocation7 + $0x2f0] sm:$0xff]
    %v1389 = vld [vmem:[#allocation7 + $0x2f8] sm:$0xff]
    %v1390 = vld [vmem:[#allocation7 + $0x300] sm:$0xff]
    %v1391 = vld [vmem:[#allocation7 + $0x308] sm:$0xff]
    %v1392 = vld [vmem:[#allocation7 + $0x310] sm:$0xff]
    %v1393 = vld [vmem:[#allocation7 + $0x318] sm:$0xff]
    %v1394 = vld [vmem:[#allocation7 + $0x320] sm:$0xff]
    %v1395 = vld [vmem:[#allocation7 + $0x328] sm:$0xff]
    %v1396 = vld [vmem:[#allocation7 + $0x330] sm:$0xff]
    %v1397 = vld [vmem:[#allocation7 + $0x338] sm:$0xff]
    %v1398 = vld [vmem:[#allocation7 + $0x340] sm:$0xff]
    %v1399 = vld [vmem:[#allocation7 + $0x348] sm:$0xff]
    %v1400 = vld [vmem:[#allocation7 + $0x350] sm:$0xff]
    %v1401 = vld [vmem:[#allocation7 + $0x358] sm:$0xff]
    %v1402 = vld [vmem:[#allocation7 + $0x360] sm:$0xff]
    %v1403 = vld [vmem:[#allocation7 + $0x368] sm:$0xff]
    %v1404 = vld [vmem:[#allocation7 + $0x370] sm:$0xff]
    %v1405 = vld [vmem:[#allocation7 + $0x378] sm:$0xff]
    %v1406 = vld [vmem:[#allocation7 + $0x380] sm:$0xff]
    %v1407 = vld [vmem:[#allocation7 + $0x388] sm:$0xff]
    %v1408 = vld [vmem:[#allocation7 + $0x390] sm:$0xff]
    %v1409 = vld [vmem:[#allocation7 + $0x398] sm:$0xff]
    %v1410 = vld [vmem:[#allocation7 + $0x3a0] sm:$0xff]
    %v1411 = vld [vmem:[#allocation7 + $0x3a8] sm:$0xff]
    %v1412 = vld [vmem:[#allocation7 + $0x3b0] sm:$0xff]
    %v1413 = vld [vmem:[#allocation7 + $0x3b8] sm:$0xff]
    %v1414 = vld [vmem:[#allocation7 + $0x3c0] sm:$0xff]
    %v1415 = vld [vmem:[#allocation7 + $0x3c8] sm:$0xff]
    %v1416 = vld [vmem:[#allocation7 + $0x3d0] sm:$0xff]
    %v1417 = vld [vmem:[#allocation7 + $0x3d8] sm:$0xff]
    %v1418 = vld [vmem:[#allocation7 + $0x3e0] sm:$0xff]
    %v1419 = vld [vmem:[#allocation7 + $0x3e8] sm:$0xff]
    %v1420 = vld [vmem:[#allocation7 + $0x3f0] sm:$0xff]
    %v1421 = vld [vmem:[#allocation7 + $0x3f8] sm:$0xff]
    %v1422 = vld [vmem:[#allocation7 + $0x400] sm:$0xff]
    %v1423 = vld [vmem:[#allocation7 + $0x408] sm:$0xff]
    %v1424 = vld [vmem:[#allocation7 + $0x410] sm:$0xff]
    %v1425 = vld [vmem:[#allocation7 + $0x418] sm:$0xff]
    %v1426 = vld [vmem:[#allocation7 + $0x420] sm:$0xff]
    %v1427 = vld [vmem:[#allocation7 + $0x428] sm:$0xff]
    %v1428 = vld [vmem:[#allocation7 + $0x430] sm:$0xff]
    %v1429 = vld [vmem:[#allocation7 + $0x438] sm:$0xff]
    %v1430 = vld [vmem:[#allocation7 + $0x440] sm:$0xff]
    %v1431 = vld [vmem:[#allocation7 + $0x448] sm:$0xff]
    %v1432 = vld [vmem:[#allocation7 + $0x450] sm:$0xff]
    %v1433 = vld [vmem:[#allocation7 + $0x458] sm:$0xff]
    %v1434 = vld [vmem:[#allocation7 + $0x460] sm:$0xff]
    %v1435 = vld [vmem:[#allocation7 + $0x468] sm:$0xff]
    %v1436 = vld [vmem:[#allocation7 + $0x470] sm:$0xff]
    %v1437 = vld [vmem:[#allocation7 + $0x478] sm:$0xff]
    %v1438 = vld [vmem:[#allocation7 + $0x480] sm:$0xff]
    %v1439 = vld [vmem:[#allocation7 + $0x488] sm:$0xff]
    %v1440 = vld [vmem:[#allocation7 + $0x490] sm:$0xff]
    %v1441 = vld [vmem:[#allocation7 + $0x498] sm:$0xff]
    %v1442 = vld [vmem:[#allocation7 + $0x4a0] sm:$0xff]
    %v1443 = vld [vmem:[#allocation7 + $0x4a8] sm:$0xff]
    %v1444 = vld [vmem:[#allocation7 + $0x4b0] sm:$0xff]
    %v1445 = vld [vmem:[#allocation7 + $0x4b8] sm:$0xff]
    %v1446 = vld [vmem:[#allocation7 + $0x4c0] sm:$0xff]
    %v1447 = vld [vmem:[#allocation7 + $0x4c8] sm:$0xff]
    %v1448 = vld [vmem:[#allocation7 + $0x4d0] sm:$0xff]
    %v1449 = vld [vmem:[#allocation7 + $0x4d8] sm:$0xff]
    %v1450 = vld [vmem:[#allocation7 + $0x4e0] sm:$0xff]
    %v1451 = vld [vmem:[#allocation7 + $0x4e8] sm:$0xff]
    %v1452 = vld [vmem:[#allocation7 + $0x4f0] sm:$0xff]
    %v1453 = vld [vmem:[#allocation7 + $0x4f8] sm:$0xff]
    %v1454 = vld [vmem:[#allocation7 + $0x500] sm:$0xff]
    %v1455 = vld [vmem:[#allocation7 + $0x508] sm:$0xff]
    %v1456 = vld [vmem:[#allocation7 + $0x510] sm:$0xff]
    %v1457 = vld [vmem:[#allocation7 + $0x518] sm:$0xff]
    %v1458 = vld [vmem:[#allocation7 + $0x520] sm:$0xff]
    %v1459 = vld [vmem:[#allocation7 + $0x528] sm:$0xff]
    %v1460 = vld [vmem:[#allocation7 + $0x530] sm:$0xff]
    %v1461 = vld [vmem:[#allocation7 + $0x538] sm:$0xff]
    %v1462 = vld [vmem:[#allocation7 + $0x540] sm:$0xff]
    %v1463 = vld [vmem:[#allocation7 + $0x548] sm:$0xff]
    %v1464 = vld [vmem:[#allocation7 + $0x550] sm:$0xff]
    %v1465 = vld [vmem:[#allocation7 + $0x558] sm:$0xff]
    %v1466 = vld [vmem:[#allocation7 + $0x560] sm:$0xff]
    %v1467 = vld [vmem:[#allocation7 + $0x568] sm:$0xff]
    %v1468 = vld [vmem:[#allocation7 + $0x570] sm:$0xff]
    %v1469 = vld [vmem:[#allocation7 + $0x578] sm:$0xff]
    %v1470 = vld [vmem:[#allocation7 + $0x580] sm:$0xff]
    %v1471 = vld [vmem:[#allocation7 + $0x588] sm:$0xff]
    %v1472 = vld [vmem:[#allocation7 + $0x590] sm:$0xff]
    %v1473 = vld [vmem:[#allocation7 + $0x598] sm:$0xff]
    %v1474 = vld [vmem:[#allocation7 + $0x5a0] sm:$0xff]
    %v1475 = vld [vmem:[#allocation7 + $0x5a8] sm:$0xff]
    %v1476 = vld [vmem:[#allocation7 + $0x5b0] sm:$0xff]
    %v1477 = vld [vmem:[#allocation7 + $0x5b8] sm:$0xff]
    %v1478 = vld [vmem:[#allocation7 + $0x5c0] sm:$0xff]
    %v1479 = vld [vmem:[#allocation7 + $0x5c8] sm:$0xff]
    %v1480 = vld [vmem:[#allocation7 + $0x5d0] sm:$0xff]
    %v1481 = vld [vmem:[#allocation7 + $0x5d8] sm:$0xff]
    %v1482 = vld [vmem:[#allocation7 + $0x5e0] sm:$0xff]
    %v1483 = vld [vmem:[#allocation7 + $0x5e8] sm:$0xff]
    %v1484 = vld [vmem:[#allocation7 + $0x5f0] sm:$0xff]
    %v1485 = vld [vmem:[#allocation7 + $0x5f8] sm:$0xff]
    %v1486 = vld [vmem:[#allocation7 + $0x600] sm:$0xff]
    %v1487 = vld [vmem:[#allocation7 + $0x608] sm:$0xff]
    %v1488 = vld [vmem:[#allocation7 + $0x610] sm:$0xff]
    %v1489 = vld [vmem:[#allocation7 + $0x618] sm:$0xff]
    %v1490 = vld [vmem:[#allocation7 + $0x620] sm:$0xff]
    %v1491 = vld [vmem:[#allocation7 + $0x628] sm:$0xff]
    %v1492 = vld [vmem:[#allocation7 + $0x630] sm:$0xff]
    %v1493 = vld [vmem:[#allocation7 + $0x638] sm:$0xff]
    %v1494 = vld [vmem:[#allocation7 + $0x640] sm:$0xff]
    %v1495 = vld [vmem:[#allocation7 + $0x648] sm:$0xff]
    %v1496 = vld [vmem:[#allocation7 + $0x650] sm:$0xff]
    %v1497 = vld [vmem:[#allocation7 + $0x658] sm:$0xff]
    %v1498 = vld [vmem:[#allocation7 + $0x660] sm:$0xff]
    %v1499 = vld [vmem:[#allocation7 + $0x668] sm:$0xff]
    %v1500 = vld [vmem:[#allocation7 + $0x670] sm:$0xff]
    %v1501 = vld [vmem:[#allocation7 + $0x678] sm:$0xff]
    %v1502 = vld [vmem:[#allocation7 + $0x680] sm:$0xff]
    %v1503 = vld [vmem:[#allocation7 + $0x688] sm:$0xff]
    %v1504 = vld [vmem:[#allocation7 + $0x690] sm:$0xff]
    %v1505 = vld [vmem:[#allocation7 + $0x698] sm:$0xff]
    %v1506 = vld [vmem:[#allocation7 + $0x6a0] sm:$0xff]
    %v1507 = vld [vmem:[#allocation7 + $0x6a8] sm:$0xff]
    %v1508 = vld [vmem:[#allocation7 + $0x6b0] sm:$0xff]
    %v1509 = vld [vmem:[#allocation7 + $0x6b8] sm:$0xff]
    %v1510 = vld [vmem:[#allocation7 + $0x6c0] sm:$0xff]
    %v1511 = vld [vmem:[#allocation7 + $0x6c8] sm:$0xff]
    %v1512 = vld [vmem:[#allocation7 + $0x6d0] sm:$0xff]
    %v1513 = vld [vmem:[#allocation7 + $0x6d8] sm:$0xff]
    %v1514 = vld [vmem:[#allocation7 + $0x6e0] sm:$0xff]
    %v1515 = vld [vmem:[#allocation7 + $0x6e8] sm:$0xff]
    %v1516 = vld [vmem:[#allocation7 + $0x6f0] sm:$0xff]
    %v1517 = vld [vmem:[#allocation7 + $0x6f8] sm:$0xff]
    %v1518 = vld [vmem:[#allocation7 + $0x700] sm:$0xff]
    %v1519 = vld [vmem:[#allocation7 + $0x708] sm:$0xff]
    %v1520 = vld [vmem:[#allocation7 + $0x710] sm:$0xff]
    %v1521 = vld [vmem:[#allocation7 + $0x718] sm:$0xff]
    %v1522 = vld [vmem:[#allocation7 + $0x720] sm:$0xff]
    %v1523 = vld [vmem:[#allocation7 + $0x728] sm:$0xff]
    %v1524 = vld [vmem:[#allocation7 + $0x730] sm:$0xff]
    %v1525 = vld [vmem:[#allocation7 + $0x738] sm:$0xff]
    %v1526 = vld [vmem:[#allocation7 + $0x740] sm:$0xff]
    %v1527 = vld [vmem:[#allocation7 + $0x748] sm:$0xff]
    %v1528 = vld [vmem:[#allocation7 + $0x750] sm:$0xff]
    %v1529 = vld [vmem:[#allocation7 + $0x758] sm:$0xff]
    %v1530 = vld [vmem:[#allocation7 + $0x760] sm:$0xff]
    %v1531 = vld [vmem:[#allocation7 + $0x768] sm:$0xff]
    %v1532 = vld [vmem:[#allocation7 + $0x770] sm:$0xff]
    %v1533 = vld [vmem:[#allocation7 + $0x778] sm:$0xff]
    %v1534 = vld [vmem:[#allocation7 + $0x780] sm:$0xff]
    %v1535 = vld [vmem:[#allocation7 + $0x788] sm:$0xff]
    %v1536 = vld [vmem:[#allocation7 + $0x790] sm:$0xff]
    %v1537 = vld [vmem:[#allocation7 + $0x798] sm:$0xff]
    %v1538 = vld [vmem:[#allocation7 + $0x7a0] sm:$0xff]
    %v1539 = vld [vmem:[#allocation7 + $0x7a8] sm:$0xff]
    %v1540 = vld [vmem:[#allocation7 + $0x7b0] sm:$0xff]
    %v1541 = vld [vmem:[#allocation7 + $0x7b8] sm:$0xff]
    %v1542 = vld [vmem:[#allocation7 + $0x7c0] sm:$0xff]
    %v1543 = vld [vmem:[#allocation7 + $0x7c8] sm:$0xff]
    %v1544 = vld [vmem:[#allocation7 + $0x7d0] sm:$0xff]
    %v1545 = vld [vmem:[#allocation7 + $0x7d8] sm:$0xff]
    %v1546 = vld [vmem:[#allocation7 + $0x7e0] sm:$0xff]
    %v1547 = vld [vmem:[#allocation7 + $0x7e8] sm:$0xff]
    %v1548 = vld [vmem:[#allocation7 + $0x7f0] sm:$0xff]
    %v1549 = vld [vmem:[#allocation7 + $0x7f8] sm:$0xff]
    %v1550 = vld [vmem:[#allocation7 + $0x800] sm:$0xff]
    %v1551 = vld [vmem:[#allocation7 + $0x808] sm:$0xff]
    %v1552 = vld [vmem:[#allocation7 + $0x810] sm:$0xff]
    %v1553 = vld [vmem:[#allocation7 + $0x818] sm:$0xff]
    %v1554 = vld [vmem:[#allocation7 + $0x820] sm:$0xff]
    %v1555 = vld [vmem:[#allocation7 + $0x828] sm:$0xff]
    %v1556 = vld [vmem:[#allocation7 + $0x830] sm:$0xff]
    %v1557 = vld [vmem:[#allocation7 + $0x838] sm:$0xff]
    %v1558 = vld [vmem:[#allocation7 + $0x840] sm:$0xff]
    %v1559 = vld [vmem:[#allocation7 + $0x848] sm:$0xff]
    %v1560 = vld [vmem:[#allocation7 + $0x850] sm:$0xff]
    %v1561 = vld [vmem:[#allocation7 + $0x858] sm:$0xff]
    %v1562 = vld [vmem:[#allocation7 + $0x860] sm:$0xff]
    %v1563 = vld [vmem:[#allocation7 + $0x868] sm:$0xff]
    %v1564 = vld [vmem:[#allocation7 + $0x870] sm:$0xff]
    %v1565 = vld [vmem:[#allocation7 + $0x878] sm:$0xff]
    %v1566 = vld [vmem:[#allocation7 + $0x880] sm:$0xff]
    %v1567 = vld [vmem:[#allocation7 + $0x888] sm:$0xff]
    %v1568 = vld [vmem:[#allocation7 + $0x890] sm:$0xff]
    %v1569 = vld [vmem:[#allocation7 + $0x898] sm:$0xff]
    %v1570 = vld [vmem:[#allocation7 + $0x8a0] sm:$0xff]
    %v1571 = vld [vmem:[#allocation7 + $0x8a8] sm:$0xff]
    %v1572 = vld [vmem:[#allocation7 + $0x8b0] sm:$0xff]
    %v1573 = vld [vmem:[#allocation7 + $0x8b8] sm:$0xff]
    %v1574 = vld [vmem:[#allocation7 + $0x8c0] sm:$0xff]
    %v1575 = vld [vmem:[#allocation7 + $0x8c8] sm:$0xff]
    %v1576 = vld [vmem:[#allocation7 + $0x8d0] sm:$0xff]
    %v1577 = vld [vmem:[#allocation7 + $0x8d8] sm:$0xff]
    %v1578 = vld [vmem:[#allocation7 + $0x8e0] sm:$0xff]
    %v1579 = vld [vmem:[#allocation7 + $0x8e8] sm:$0xff]
    %v1580 = vld [vmem:[#allocation7 + $0x8f0] sm:$0xff]
    %v1581 = vld [vmem:[#allocation7 + $0x8f8] sm:$0xff]
    %v1582 = vld [vmem:[#allocation7 + $0x900] sm:$0xff]
    %v1583 = vld [vmem:[#allocation7 + $0x908] sm:$0xff]
    %v1584 = vld [vmem:[#allocation7 + $0x910] sm:$0xff]
    %v1585 = vld [vmem:[#allocation7 + $0x918] sm:$0xff]
    %v1586 = vld [vmem:[#allocation7 + $0x920] sm:$0xff]
    %v1587 = vld [vmem:[#allocation7 + $0x928] sm:$0xff]
    %v1588 = vld [vmem:[#allocation7 + $0x930] sm:$0xff]
    %v1589 = vld [vmem:[#allocation7 + $0x938] sm:$0xff]
    %v1590 = vld [vmem:[#allocation7 + $0x940] sm:$0xff]
    %v1591 = vld [vmem:[#allocation7 + $0x948] sm:$0xff]
    %v1592 = vld [vmem:[#allocation7 + $0x950] sm:$0xff]
    %v1593 = vld [vmem:[#allocation7 + $0x958] sm:$0xff]
    %v1594 = vld [vmem:[#allocation7 + $0x960] sm:$0xff]
    %v1595 = vld [vmem:[#allocation7 + $0x968] sm:$0xff]
    %v1596 = vld [vmem:[#allocation7 + $0x970] sm:$0xff]
    %v1597 = vld [vmem:[#allocation7 + $0x978] sm:$0xff]
    %v1598 = vld [vmem:[#allocation7 + $0x980] sm:$0xff]
    %v1599 = vld [vmem:[#allocation7 + $0x988] sm:$0xff]
    %v1600 = vld [vmem:[#allocation7 + $0x990] sm:$0xff]
    %v1601 = vld [vmem:[#allocation7 + $0x998] sm:$0xff]
    %v1602 = vld [vmem:[#allocation7 + $0x9a0] sm:$0xff]
    %v1603 = vld [vmem:[#allocation7 + $0x9a8] sm:$0xff]
    %v1604 = vld [vmem:[#allocation7 + $0x9b0] sm:$0xff]
    %v1605 = vld [vmem:[#allocation7 + $0x9b8] sm:$0xff]
    %v1606 = vld [vmem:[#allocation7 + $0x9c0] sm:$0xff]
    %v1607 = vld [vmem:[#allocation7 + $0x9c8] sm:$0xff]
    %v1608 = vld [vmem:[#allocation7 + $0x9d0] sm:$0xff]
    %v1609 = vld [vmem:[#allocation7 + $0x9d8] sm:$0xff]
    %v1610 = vld [vmem:[#allocation7 + $0x9e0] sm:$0xff]
    %v1611 = vld [vmem:[#allocation7 + $0x9e8] sm:$0xff]
    %v1612 = vld [vmem:[#allocation7 + $0x9f0] sm:$0xff]
    %v1613 = vld [vmem:[#allocation7 + $0x9f8] sm:$0xff]
    %v1614 = vld [vmem:[#allocation7 + $0xa00] sm:$0xff]
    %v1615 = vld [vmem:[#allocation7 + $0xa08] sm:$0xff]
    %v1616 = vld [vmem:[#allocation7 + $0xa10] sm:$0xff]
    %v1617 = vld [vmem:[#allocation7 + $0xa18] sm:$0xff]
    %v1618 = vld [vmem:[#allocation7 + $0xa20] sm:$0xff]
    %v1619 = vld [vmem:[#allocation7 + $0xa28] sm:$0xff]
    %v1620 = vld [vmem:[#allocation7 + $0xa30] sm:$0xff]
    %v1621 = vld [vmem:[#allocation7 + $0xa38] sm:$0xff]
    %v1622 = vld [vmem:[#allocation7 + $0xa40] sm:$0xff]
    %v1623 = vld [vmem:[#allocation7 + $0xa48] sm:$0xff]
    %v1624 = vld [vmem:[#allocation7 + $0xa50] sm:$0xff]
    %v1625 = vld [vmem:[#allocation7 + $0xa58] sm:$0xff]
    %v1626 = vld [vmem:[#allocation7 + $0xa60] sm:$0xff]
    %v1627 = vld [vmem:[#allocation7 + $0xa68] sm:$0xff]
    %v1628 = vld [vmem:[#allocation7 + $0xa70] sm:$0xff]
    %v1629 = vld [vmem:[#allocation7 + $0xa78] sm:$0xff]
    %v1630 = vld [vmem:[#allocation7 + $0xa80] sm:$0xff]
    %v1631 = vld [vmem:[#allocation7 + $0xa88] sm:$0xff]
    %v1632 = vld [vmem:[#allocation7 + $0xa90] sm:$0xff]
    %v1633 = vld [vmem:[#allocation7 + $0xa98] sm:$0xff]
    %v1634 = vld [vmem:[#allocation7 + $0xaa0] sm:$0xff]
    %v1635 = vld [vmem:[#allocation7 + $0xaa8] sm:$0xff]
    %v1636 = vld [vmem:[#allocation7 + $0xab0] sm:$0xff]
    %v1637 = vld [vmem:[#allocation7 + $0xab8] sm:$0xff]
    %v1638 = vld [vmem:[#allocation7 + $0xac0] sm:$0xff]
    %v1639 = vld [vmem:[#allocation7 + $0xac8] sm:$0xff]
    %v1640 = vld [vmem:[#allocation7 + $0xad0] sm:$0xff]
    %v1641 = vld [vmem:[#allocation7 + $0xad8] sm:$0xff]
    %v1642 = vld [vmem:[#allocation7 + $0xae0] sm:$0xff]
    %v1643 = vld [vmem:[#allocation7 + $0xae8] sm:$0xff]
    %v1644 = vld [vmem:[#allocation7 + $0xaf0] sm:$0xff]
    %v1645 = vld [vmem:[#allocation7 + $0xaf8] sm:$0xff]
    %v1646 = vld [vmem:[#allocation7 + $0xb00] sm:$0xff]
    %v1647 = vld [vmem:[#allocation7 + $0xb08] sm:$0xff]
    %v1648 = vld [vmem:[#allocation7 + $0xb10] sm:$0xff]
    %v1649 = vld [vmem:[#allocation7 + $0xb18] sm:$0xff]
    %v1650 = vld [vmem:[#allocation7 + $0xb20] sm:$0xff]
    %v1651 = vld [vmem:[#allocation7 + $0xb28] sm:$0xff]
    %v1652 = vld [vmem:[#allocation7 + $0xb30] sm:$0xff]
    %v1653 = vld [vmem:[#allocation7 + $0xb38] sm:$0xff]
    %v1654 = vld [vmem:[#allocation7 + $0xb40] sm:$0xff]
    %v1655 = vld [vmem:[#allocation7 + $0xb48] sm:$0xff]
    %v1656 = vld [vmem:[#allocation7 + $0xb50] sm:$0xff]
    %v1657 = vld [vmem:[#allocation7 + $0xb58] sm:$0xff]
    %v1658 = vld [vmem:[#allocation7 + $0xb60] sm:$0xff]
    %v1659 = vld [vmem:[#allocation7 + $0xb68] sm:$0xff]
    %v1660 = vld [vmem:[#allocation7 + $0xb70] sm:$0xff]
    %v1661 = vld [vmem:[#allocation7 + $0xb78] sm:$0xff]
    %v1662 = vld [vmem:[#allocation7 + $0xb80] sm:$0xff]
    %v1663 = vld [vmem:[#allocation7 + $0xb88] sm:$0xff]
    %v1664 = vld [vmem:[#allocation7 + $0xb90] sm:$0xff]
    %v1665 = vld [vmem:[#allocation7 + $0xb98] sm:$0xff]
    %v1666 = vld [vmem:[#allocation7 + $0xba0] sm:$0xff]
    %v1667 = vld [vmem:[#allocation7 + $0xba8] sm:$0xff]
    %v1668 = vld [vmem:[#allocation7 + $0xbb0] sm:$0xff]
    %v1669 = vld [vmem:[#allocation7 + $0xbb8] sm:$0xff]
    %v1670 = vld [vmem:[#allocation7 + $0xbc0] sm:$0xff]
    %v1671 = vld [vmem:[#allocation7 + $0xbc8] sm:$0xff]
    %v1672 = vld [vmem:[#allocation7 + $0xbd0] sm:$0xff]
    %v1673 = vld [vmem:[#allocation7 + $0xbd8] sm:$0xff]
    %v1674 = vld [vmem:[#allocation7 + $0xbe0] sm:$0xff]
    %v1675 = vld [vmem:[#allocation7 + $0xbe8] sm:$0xff]
    %v1676 = vld [vmem:[#allocation7 + $0xbf0] sm:$0xff]
    %v1677 = vld [vmem:[#allocation7 + $0xbf8] sm:$0xff]
    %v1678 = vld [vmem:[#allocation7 + $0xc00] sm:$0xff]
    %v1679 = vld [vmem:[#allocation7 + $0xc08] sm:$0xff]
    %v1680 = vld [vmem:[#allocation7 + $0xc10] sm:$0xff]
    %v1681 = vld [vmem:[#allocation7 + $0xc18] sm:$0xff]
    %v1682 = vld [vmem:[#allocation7 + $0xc20] sm:$0xff]
    %v1683 = vld [vmem:[#allocation7 + $0xc28] sm:$0xff]
    %v1684 = vld [vmem:[#allocation7 + $0xc30] sm:$0xff]
    %v1685 = vld [vmem:[#allocation7 + $0xc38] sm:$0xff]
    %v1686 = vld [vmem:[#allocation7 + $0xc40] sm:$0xff]
    %v1687 = vld [vmem:[#allocation7 + $0xc48] sm:$0xff]
    %v1688 = vld [vmem:[#allocation7 + $0xc50] sm:$0xff]
    %v1689 = vld [vmem:[#allocation7 + $0xc58] sm:$0xff]
    %v1690 = vld [vmem:[#allocation7 + $0xc60] sm:$0xff]
    %v1691 = vld [vmem:[#allocation7 + $0xc68] sm:$0xff]
    %v1692 = vld [vmem:[#allocation7 + $0xc70] sm:$0xff]
    %v1693 = vld [vmem:[#allocation7 + $0xc78] sm:$0xff]
    %v1694 = vld [vmem:[#allocation7 + $0xc80] sm:$0xff]
    %v1695 = vld [vmem:[#allocation7 + $0xc88] sm:$0xff]
    %v1696 = vld [vmem:[#allocation7 + $0xc90] sm:$0xff]
    %v1697 = vld [vmem:[#allocation7 + $0xc98] sm:$0xff]
    %v1698 = vld [vmem:[#allocation7 + $0xca0] sm:$0xff]
    %v1699 = vld [vmem:[#allocation7 + $0xca8] sm:$0xff]
    %v1700 = vld [vmem:[#allocation7 + $0xcb0] sm:$0xff]
    %v1701 = vld [vmem:[#allocation7 + $0xcb8] sm:$0xff]
    %v1702 = vld [vmem:[#allocation7 + $0xcc0] sm:$0xff]
    %v1703 = vld [vmem:[#allocation7 + $0xcc8] sm:$0xff]
    %v1704 = vld [vmem:[#allocation7 + $0xcd0] sm:$0xff]
    %v1705 = vld [vmem:[#allocation7 + $0xcd8] sm:$0xff]
    %v1706 = vld [vmem:[#allocation7 + $0xce0] sm:$0xff]
    %v1707 = vld [vmem:[#allocation7 + $0xce8] sm:$0xff]
    %v1708 = vld [vmem:[#allocation7 + $0xcf0] sm:$0xff]
    %v1709 = vld [vmem:[#allocation7 + $0xcf8] sm:$0xff]
    %v1710 = vld [vmem:[#allocation7 + $0xd00] sm:$0xff]
    %v1711 = vld [vmem:[#allocation7 + $0xd08] sm:$0xff]
    %v1712 = vld [vmem:[#allocation7 + $0xd10] sm:$0xff]
    %v1713 = vld [vmem:[#allocation7 + $0xd18] sm:$0xff]
    %v1714 = vld [vmem:[#allocation7 + $0xd20] sm:$0xff]
    %v1715 = vld [vmem:[#allocation7 + $0xd28] sm:$0xff]
    %v1716 = vld [vmem:[#allocation7 + $0xd30] sm:$0xff]
    %v1717 = vld [vmem:[#allocation7 + $0xd38] sm:$0xff]
    %v1718 = vld [vmem:[#allocation7 + $0xd40] sm:$0xff]
    %v1719 = vld [vmem:[#allocation7 + $0xd48] sm:$0xff]
    %v1720 = vld [vmem:[#allocation7 + $0xd50] sm:$0xff]
    %v1721 = vld [vmem:[#allocation7 + $0xd58] sm:$0xff]
    %v1722 = vld [vmem:[#allocation7 + $0xd60] sm:$0xff]
    %v1723 = vld [vmem:[#allocation7 + $0xd68] sm:$0xff]
    %v1724 = vld [vmem:[#allocation7 + $0xd70] sm:$0xff]
    %v1725 = vld [vmem:[#allocation7 + $0xd78] sm:$0xff]
    %v1726 = vld [vmem:[#allocation7 + $0xd80] sm:$0xff]
    %v1727 = vld [vmem:[#allocation7 + $0xd88] sm:$0xff]
    %v1728 = vld [vmem:[#allocation7 + $0xd90] sm:$0xff]
    %v1729 = vld [vmem:[#allocation7 + $0xd98] sm:$0xff]
    %v1730 = vld [vmem:[#allocation7 + $0xda0] sm:$0xff]
    %v1731 = vld [vmem:[#allocation7 + $0xda8] sm:$0xff]
    %v1732 = vld [vmem:[#allocation7 + $0xdb0] sm:$0xff]
    %v1733 = vld [vmem:[#allocation7 + $0xdb8] sm:$0xff]
    %v1734 = vld [vmem:[#allocation7 + $0xdc0] sm:$0xff]
    %v1735 = vld [vmem:[#allocation7 + $0xdc8] sm:$0xff]
    %v1736 = vld [vmem:[#allocation7 + $0xdd0] sm:$0xff]
    %v1737 = vld [vmem:[#allocation7 + $0xdd8] sm:$0xff]
    %v1738 = vld [vmem:[#allocation7 + $0xde0] sm:$0xff]
    %v1739 = vld [vmem:[#allocation7 + $0xde8] sm:$0xff]
    %v1740 = vld [vmem:[#allocation7 + $0xdf0] sm:$0xff]
    %v1741 = vld [vmem:[#allocation7 + $0xdf8] sm:$0xff]
    %v1742 = vld [vmem:[#allocation7 + $0xe00] sm:$0xff]
    %v1743 = vld [vmem:[#allocation7 + $0xe08] sm:$0xff]
    %v1744 = vld [vmem:[#allocation7 + $0xe10] sm:$0xff]
    %v1745 = vld [vmem:[#allocation7 + $0xe18] sm:$0xff]
    %v1746 = vld [vmem:[#allocation7 + $0xe20] sm:$0xff]
    %v1747 = vld [vmem:[#allocation7 + $0xe28] sm:$0xff]
    %v1748 = vld [vmem:[#allocation7 + $0xe30] sm:$0xff]
    %v1749 = vld [vmem:[#allocation7 + $0xe38] sm:$0xff]
    %v1750 = vld [vmem:[#allocation7 + $0xe40] sm:$0xff]
    %v1751 = vld [vmem:[#allocation7 + $0xe48] sm:$0xff]
    %v1752 = vld [vmem:[#allocation7 + $0xe50] sm:$0xff]
    %v1753 = vld [vmem:[#allocation7 + $0xe58] sm:$0xff]
    %v1754 = vld [vmem:[#allocation7 + $0xe60] sm:$0xff]
    %v1755 = vld [vmem:[#allocation7 + $0xe68] sm:$0xff]
    %v1756 = vld [vmem:[#allocation7 + $0xe70] sm:$0xff]
    %v1757 = vld [vmem:[#allocation7 + $0xe78] sm:$0xff]
    %v1758 = vld [vmem:[#allocation7 + $0xe80] sm:$0xff]
    %v1759 = vld [vmem:[#allocation7 + $0xe88] sm:$0xff]
    %v1760 = vld [vmem:[#allocation7 + $0xe90] sm:$0xff]
    %v1761 = vld [vmem:[#allocation7 + $0xe98] sm:$0xff]
    %v1762 = vld [vmem:[#allocation7 + $0xea0] sm:$0xff]
    %v1763 = vld [vmem:[#allocation7 + $0xea8] sm:$0xff]
    %v1764 = vld [vmem:[#allocation7 + $0xeb0] sm:$0xff]
    %v1765 = vld [vmem:[#allocation7 + $0xeb8] sm:$0xff]
    %v1766 = vld [vmem:[#allocation7 + $0xec0] sm:$0xff]
    %v1767 = vld [vmem:[#allocation7 + $0xec8] sm:$0xff]
    %v1768 = vld [vmem:[#allocation7 + $0xed0] sm:$0xff]
    %v1769 = vld [vmem:[#allocation7 + $0xed8] sm:$0xff]
    %v1770 = vld [vmem:[#allocation7 + $0xee0] sm:$0xff]
    %v1771 = vld [vmem:[#allocation7 + $0xee8] sm:$0xff]
    %v1772 = vld [vmem:[#allocation7 + $0xef0] sm:$0xff]
    %v1773 = vld [vmem:[#allocation7 + $0xef8] sm:$0xff]
    %v1774 = vld [vmem:[#allocation7 + $0xf00] sm:$0xff]
    %v1775 = vld [vmem:[#allocation7 + $0xf08] sm:$0xff]
    %v1776 = vld [vmem:[#allocation7 + $0xf10] sm:$0xff]
    %v1777 = vld [vmem:[#allocation7 + $0xf18] sm:$0xff]
    %v1778 = vld [vmem:[#allocation7 + $0xf20] sm:$0xff]
    %v1779 = vld [vmem:[#allocation7 + $0xf28] sm:$0xff]
    %v1780 = vld [vmem:[#allocation7 + $0xf30] sm:$0xff]
    %v1781 = vld [vmem:[#allocation7 + $0xf38] sm:$0xff]
    %v1782 = vld [vmem:[#allocation7 + $0xf40] sm:$0xff]
    %v1783 = vld [vmem:[#allocation7 + $0xf48] sm:$0xff]
    %v1784 = vld [vmem:[#allocation7 + $0xf50] sm:$0xff]
    %v1785 = vld [vmem:[#allocation7 + $0xf58] sm:$0xff]
    %v1786 = vld [vmem:[#allocation7 + $0xf60] sm:$0xff]
    %v1787 = vld [vmem:[#allocation7 + $0xf68] sm:$0xff]
    %v1788 = vld [vmem:[#allocation7 + $0xf70] sm:$0xff]
    %v1789 = vld [vmem:[#allocation7 + $0xf78] sm:$0xff]
    %v1790 = vld [vmem:[#allocation7 + $0xf80] sm:$0xff]
    %v1791 = vld [vmem:[#allocation7 + $0xf88] sm:$0xff]
    %v1792 = vld [vmem:[#allocation7 + $0xf90] sm:$0xff]
    %v1793 = vld [vmem:[#allocation7 + $0xf98] sm:$0xff]
    %v1794 = vld [vmem:[#allocation7 + $0xfa0] sm:$0xff]
    %v1795 = vld [vmem:[#allocation7 + $0xfa8] sm:$0xff]
    %v1796 = vld [vmem:[#allocation7 + $0xfb0] sm:$0xff]
    %v1797 = vld [vmem:[#allocation7 + $0xfb8] sm:$0xff]
    %v1798 = vld [vmem:[#allocation7 + $0xfc0] sm:$0xff]
    %v1799 = vld [vmem:[#allocation7 + $0xfc8] sm:$0xff]
    %v1800 = vld [vmem:[#allocation7 + $0xfd0] sm:$0xff]
    %v1801 = vld [vmem:[#allocation7 + $0xfd8] sm:$0xff]
    %v1802 = vld [vmem:[#allocation7 + $0xfe0] sm:$0xff]
    %v1803 = vld [vmem:[#allocation7 + $0xfe8] sm:$0xff]
    %v1804 = vld [vmem:[#allocation7 + $0xff0] sm:$0xff]
    %v1805 = vld [vmem:[#allocation7 + $0xff8] sm:$0xff]
    %v1806 = vld [vmem:[#allocation10] sm:$0xff]
    %v1808 = vlaneseq
    %v1809 = vshrl.u32 %v1808, 7
    %v1810 = vsub.s32 0, %v1809
    %v1811 = vrot.slane %v1806, %v1810
    %v1812 = vlaneseq
    %v1813 = vshrl.u32 %v1812, 7
    %v1814 = vsub.s32 1, %v1813
    %v1815 = vrot.slane %v1806, %v1814
    %v1816 = vlaneseq
    %v1817 = vshrl.u32 %v1816, 7
    %v1818 = vsub.s32 2, %v1817
    %v1819 = vrot.slane %v1806, %v1818
    %v1820 = vlaneseq
    %v1821 = vshrl.u32 %v1820, 7
    %v1822 = vsub.s32 3, %v1821
    %v1823 = vrot.slane %v1806, %v1822
    %v1824 = vlaneseq
    %v1825 = vshrl.u32 %v1824, 7
    %v1826 = vsub.s32 4, %v1825
    %v1827 = vrot.slane %v1806, %v1826
    %v1828 = vlaneseq
    %v1829 = vshrl.u32 %v1828, 7
    %v1830 = vsub.s32 5, %v1829
    %v1831 = vrot.slane %v1806, %v1830
    %v1832 = vlaneseq
    %v1833 = vshrl.u32 %v1832, 7
    %v1834 = vsub.s32 6, %v1833
    %v1835 = vrot.slane %v1806, %v1834
    %v1836 = vlaneseq
    %v1837 = vshrl.u32 %v1836, 7
    %v1838 = vsub.s32 7, %v1837
    %v1839 = vrot.slane %v1806, %v1838
    %1848 = vmatprep.subr.mxu0 %v1415
    %1849 = vmatpush1.msra.mxu0 %v1414
    %1850 = vmatprep.subr.mxu0 %v1407
    %1851 = vmatpush1.msra.mxu0 %v1406
    %1852 = vmatprep.subr.mxu0 %v1399
    %1853 = vmatpush1.msra.mxu0 %v1398
    %1854 = vmatprep.subr.mxu0 %v1391
    %1855 = vmatpush1.msra.mxu0 %v1390
    %1856 = vmatprep.subr.mxu0 %v1383
    %1857 = vmatpush1.msra.mxu0 %v1382
    %1858 = vmatprep.subr.mxu0 %v1375
    %1859 = vmatpush1.msra.mxu0 %v1374
    %1860 = vmatprep.subr.mxu0 %v1367
    %1861 = vmatpush1.msra.mxu0 %v1366
    %1862 = vmatprep.subr.mxu0 %v1359
    %1863 = vmatpush1.msra.mxu0 %v1358
    %1864 = vmatprep.subr.mxu0 %v1351
    %1865 = vmatpush1.msra.mxu0 %v1350
    %1866 = vmatprep.subr.mxu0 %v1343
    %1867 = vmatpush1.msra.mxu0 %v1342
    %1868 = vmatprep.subr.mxu0 %v1335
    %1869 = vmatpush1.msra.mxu0 %v1334
    %1870 = vmatprep.subr.mxu0 %v1327
    %1871 = vmatpush1.msra.mxu0 %v1326
    %1872 = vmatprep.subr.mxu0 %v1319
    %1873 = vmatpush1.msra.mxu0 %v1318
    %1874 = vmatprep.subr.mxu0 %v1311
    %1875 = vmatpush1.msra.mxu0 %v1310
    %1876 = vmatprep.subr.mxu0 %v1303
    %1877 = vmatpush1.msra.mxu0 %v1302
    %1878 = vmatprep.subr.mxu0 %v1295
    %1879 = vmatpush1.msra.mxu0 %v1294
    %1880 = vmatprep.subr.mxu0 %v1543
    %1881 = vmatpush2.msra.mxu0 %v1542
    %1882 = vmatprep.subr.mxu0 %v1535
    %1883 = vmatpush2.msra.mxu0 %v1534
    %1884 = vmatprep.subr.mxu0 %v1527
    %1885 = vmatpush2.msra.mxu0 %v1526
    %1886 = vmatprep.subr.mxu0 %v1519
    %1887 = vmatpush2.msra.mxu0 %v1518
    %1888 = vmatprep.subr.mxu0 %v1511
    %1889 = vmatpush2.msra.mxu0 %v1510
    %1890 = vmatprep.subr.mxu0 %v1503
    %1891 = vmatpush2.msra.mxu0 %v1502
    %1892 = vmatprep.subr.mxu0 %v1495
    %1893 = vmatpush2.msra.mxu0 %v1494
    %1894 = vmatprep.subr.mxu0 %v1487
    %1895 = vmatpush2.msra.mxu0 %v1486
    %1896 = vmatprep.subr.mxu0 %v1479
    %1897 = vmatpush2.msra.mxu0 %v1478
    %1898 = vmatprep.subr.mxu0 %v1471
    %1899 = vmatpush2.msra.mxu0 %v1470
    %1900 = vmatprep.subr.mxu0 %v1463
    %1901 = vmatpush2.msra.mxu0 %v1462
    %1902 = vmatprep.subr.mxu0 %v1455
    %1903 = vmatpush2.msra.mxu0 %v1454
    %1904 = vmatprep.subr.mxu0 %v1447
    %1905 = vmatpush2.msra.mxu0 %v1446
    %1906 = vmatprep.subr.mxu0 %v1439
    %1907 = vmatpush2.msra.mxu0 %v1438
    %1908 = vmatprep.subr.mxu0 %v1431
    %1909 = vmatpush2.msra.mxu0 %v1430
    %1910 = vmatprep.subr.mxu0 %v1423
    %1911 = vmatpush2.msra.mxu0 %v1422
    %1912 = vmatprep.mubr.f32.mxu0 %v117
    %1913 = vmatmul.mubr.f32.gmra.mxu0 %v116
    %v1914 = vpop.f32.mrf.mxu0
    %v1915 = vadd.f32 %v1811, %v1914
    %v1916 = vpop.f32.mrf.mxu0
    %v1917 = vadd.f32 %v1815, %v1916
    %1918 = vmatprep.mubr.f32.mxu0 %v121
    %1919 = vmatmul.mubr.f32.gmra.mxu0 %v120
    %v1920 = vpop.f32.mrf.mxu0
    %v1921 = vadd.f32 %v1811, %v1920
    %v1922 = vpop.f32.mrf.mxu0
    %v1923 = vadd.f32 %v1815, %v1922
    %1924 = vdwg.mxu0
    %1925 = vmatprep.subr.mxu0 %v1671
    %1926 = vmatpush1.msra.mxu0 %v1670
    %1927 = vmatprep.subr.mxu0 %v1663
    %1928 = vmatpush1.msra.mxu0 %v1662
    %1929 = vmatprep.subr.mxu0 %v1655
    %1930 = vmatpush1.msra.mxu0 %v1654
    %1931 = vmatprep.subr.mxu0 %v1647
    %1932 = vmatpush1.msra.mxu0 %v1646
    %1933 = vmatprep.subr.mxu0 %v1639
    %1934 = vmatpush1.msra.mxu0 %v1638
    %1935 = vmatprep.subr.mxu0 %v1631
    %1936 = vmatpush1.msra.mxu0 %v1630
    %1937 = vmatprep.subr.mxu0 %v1623
    %1938 = vmatpush1.msra.mxu0 %v1622
    %1939 = vmatprep.subr.mxu0 %v1615
    %1940 = vmatpush1.msra.mxu0 %v1614
    %1941 = vmatprep.subr.mxu0 %v1607
    %1942 = vmatpush1.msra.mxu0 %v1606
    %1943 = vmatprep.subr.mxu0 %v1599
    %1944 = vmatpush1.msra.mxu0 %v1598
    %1945 = vmatprep.subr.mxu0 %v1591
    %1946 = vmatpush1.msra.mxu0 %v1590
    %1947 = vmatprep.subr.mxu0 %v1583
    %1948 = vmatpush1.msra.mxu0 %v1582
    %1949 = vmatprep.subr.mxu0 %v1575
    %1950 = vmatpush1.msra.mxu0 %v1574
    %1951 = vmatprep.subr.mxu0 %v1567
    %1952 = vmatpush1.msra.mxu0 %v1566
    %1953 = vmatprep.subr.mxu0 %v1559
    %1954 = vmatpush1.msra.mxu0 %v1558
    %1955 = vmatprep.subr.mxu0 %v1551
    %1956 = vmatpush1.msra.mxu0 %v1550
    %1957 = vmatprep.subr.mxu0 %v1799
    %1958 = vmatpush2.msra.mxu0 %v1798
    %1959 = vmatprep.subr.mxu0 %v1791
    %1960 = vmatpush2.msra.mxu0 %v1790
    %1961 = vmatprep.subr.mxu0 %v1783
    %1962 = vmatpush2.msra.mxu0 %v1782
    %1963 = vmatprep.subr.mxu0 %v1775
    %1964 = vmatpush2.msra.mxu0 %v1774
    %1965 = vmatprep.subr.mxu0 %v1767
    %1966 = vmatpush2.msra.mxu0 %v1766
    %1967 = vmatprep.subr.mxu0 %v1759
    %1968 = vmatpush2.msra.mxu0 %v1758
    %1969 = vmatprep.subr.mxu0 %v1751
    %1970 = vmatpush2.msra.mxu0 %v1750
    %1971 = vmatprep.subr.mxu0 %v1743
    %1972 = vmatpush2.msra.mxu0 %v1742
    %1973 = vmatprep.subr.mxu0 %v1735
    %1974 = vmatpush2.msra.mxu0 %v1734
    %1975 = vmatprep.subr.mxu0 %v1727
    %1976 = vmatpush2.msra.mxu0 %v1726
    %1977 = vmatprep.subr.mxu0 %v1719
    %1978 = vmatpush2.msra.mxu0 %v1718
    %1979 = vmatprep.subr.mxu0 %v1711
    %1980 = vmatpush2.msra.mxu0 %v1710
    %1981 = vmatprep.subr.mxu0 %v1703
    %1982 = vmatpush2.msra.mxu0 %v1702
    %1983 = vmatprep.subr.mxu0 %v1695
    %1984 = vmatpush2.msra.mxu0 %v1694
    %1985 = vmatprep.subr.mxu0 %v1687
    %1986 = vmatpush2.msra.mxu0 %v1686
    %1987 = vmatprep.subr.mxu0 %v1679
    %1988 = vmatpush2.msra.mxu0 %v1678
    %1989 = vmatprep.mubr.f32.mxu0 %v119
    %1990 = vmatmul.mubr.f32.gmra.mxu0 %v118
    %v1991 = vpop.f32.mrf.mxu0
    %v1992 = vadd.f32 %v1915, %v1991
    %v1993 = vpop.f32.mrf.mxu0
    %v1994 = vadd.f32 %v1917, %v1993
    %1995 = vmatprep.mubr.f32.mxu0 %v123
    %1996 = vmatmul.mubr.f32.gmra.mxu0 %v122
    %v1997 = vpop.f32.mrf.mxu0
    %v1998 = vadd.f32 %v1921, %v1997
    %v1999 = vpop.f32.mrf.mxu0
    %v2000 = vadd.f32 %v1923, %v1999
    %2001 = vdwg.mxu0
    %2002 = vmatprep.subr.mxu0 %v1417
    %2003 = vmatpush1.msra.mxu0 %v1416
    %2004 = vmatprep.subr.mxu0 %v1409
    %2005 = vmatpush1.msra.mxu0 %v1408
    %2006 = vmatprep.subr.mxu0 %v1401
    %2007 = vmatpush1.msra.mxu0 %v1400
    %2008 = vmatprep.subr.mxu0 %v1393
    %2009 = vmatpush1.msra.mxu0 %v1392
    %2010 = vmatprep.subr.mxu0 %v1385
    %2011 = vmatpush1.msra.mxu0 %v1384
    %2012 = vmatprep.subr.mxu0 %v1377
    %2013 = vmatpush1.msra.mxu0 %v1376
    %2014 = vmatprep.subr.mxu0 %v1369
    %2015 = vmatpush1.msra.mxu0 %v1368
    %2016 = vmatprep.subr.mxu0 %v1361
    %2017 = vmatpush1.msra.mxu0 %v1360
    %2018 = vmatprep.subr.mxu0 %v1353
    %2019 = vmatpush1.msra.mxu0 %v1352
    %2020 = vmatprep.subr.mxu0 %v1345
    %2021 = vmatpush1.msra.mxu0 %v1344
    %2022 = vmatprep.subr.mxu0 %v1337
    %2023 = vmatpush1.msra.mxu0 %v1336
    %2024 = vmatprep.subr.mxu0 %v1329
    %2025 = vmatpush1.msra.mxu0 %v1328
    %2026 = vmatprep.subr.mxu0 %v1321
    %2027 = vmatpush1.msra.mxu0 %v1320
    %2028 = vmatprep.subr.mxu0 %v1313
    %2029 = vmatpush1.msra.mxu0 %v1312
    %2030 = vmatprep.subr.mxu0 %v1305
    %2031 = vmatpush1.msra.mxu0 %v1304
    %2032 = vmatprep.subr.mxu0 %v1297
    %2033 = vmatpush1.msra.mxu0 %v1296
    %2034 = vmatprep.subr.mxu0 %v1545
    %2035 = vmatpush2.msra.mxu0 %v1544
    %2036 = vmatprep.subr.mxu0 %v1537
    %2037 = vmatpush2.msra.mxu0 %v1536
    %2038 = vmatprep.subr.mxu0 %v1529
    %2039 = vmatpush2.msra.mxu0 %v1528
    %2040 = vmatprep.subr.mxu0 %v1521
    %2041 = vmatpush2.msra.mxu0 %v1520
    %2042 = vmatprep.subr.mxu0 %v1513
    %2043 = vmatpush2.msra.mxu0 %v1512
    %2044 = vmatprep.subr.mxu0 %v1505
    %2045 = vmatpush2.msra.mxu0 %v1504
    %2046 = vmatprep.subr.mxu0 %v1497
    %2047 = vmatpush2.msra.mxu0 %v1496
    %2048 = vmatprep.subr.mxu0 %v1489
    %2049 = vmatpush2.msra.mxu0 %v1488
    %2050 = vmatprep.subr.mxu0 %v1481
    %2051 = vmatpush2.msra.mxu0 %v1480
    %2052 = vmatprep.subr.mxu0 %v1473
    %2053 = vmatpush2.msra.mxu0 %v1472
    %2054 = vmatprep.subr.mxu0 %v1465
    %2055 = vmatpush2.msra.mxu0 %v1464
    %2056 = vmatprep.subr.mxu0 %v1457
    %2057 = vmatpush2.msra.mxu0 %v1456
    %2058 = vmatprep.subr.mxu0 %v1449
    %2059 = vmatpush2.msra.mxu0 %v1448
    %2060 = vmatprep.subr.mxu0 %v1441
    %2061 = vmatpush2.msra.mxu0 %v1440
    %2062 = vmatprep.subr.mxu0 %v1433
    %2063 = vmatpush2.msra.mxu0 %v1432
    %2064 = vmatprep.subr.mxu0 %v1425
    %2065 = vmatpush2.msra.mxu0 %v1424
    %2066 = vmatprep.mubr.f32.mxu0 %v117
    %2067 = vmatmul.mubr.f32.gmra.mxu0 %v116
    %v2068 = vpop.f32.mrf.mxu0
    %v2069 = vadd.f32 %v1819, %v2068
    %v2070 = vpop.f32.mrf.mxu0
    %v2071 = vadd.f32 %v1823, %v2070
    %2072 = vmatprep.mubr.f32.mxu0 %v121
    %2073 = vmatmul.mubr.f32.gmra.mxu0 %v120
    %v2074 = vpop.f32.mrf.mxu0
    %v2075 = vadd.f32 %v1819, %v2074
    %v2076 = vpop.f32.mrf.mxu0
    %v2077 = vadd.f32 %v1823, %v2076
    %2078 = vdwg.mxu0
    %2079 = vmatprep.subr.mxu0 %v1673
    %2080 = vmatpush1.msra.mxu0 %v1672
    %2081 = vmatprep.subr.mxu0 %v1665
    %2082 = vmatpush1.msra.mxu0 %v1664
    %2083 = vmatprep.subr.mxu0 %v1657
    %2084 = vmatpush1.msra.mxu0 %v1656
    %2085 = vmatprep.subr.mxu0 %v1649
    %2086 = vmatpush1.msra.mxu0 %v1648
    %2087 = vmatprep.subr.mxu0 %v1641
    %2088 = vmatpush1.msra.mxu0 %v1640
    %2089 = vmatprep.subr.mxu0 %v1633
    %2090 = vmatpush1.msra.mxu0 %v1632
    %2091 = vmatprep.subr.mxu0 %v1625
    %2092 = vmatpush1.msra.mxu0 %v1624
    %2093 = vmatprep.subr.mxu0 %v1617
    %2094 = vmatpush1.msra.mxu0 %v1616
    %2095 = vmatprep.subr.mxu0 %v1609
    %2096 = vmatpush1.msra.mxu0 %v1608
    %2097 = vmatprep.subr.mxu0 %v1601
    %2098 = vmatpush1.msra.mxu0 %v1600
    %2099 = vmatprep.subr.mxu0 %v1593
    %2100 = vmatpush1.msra.mxu0 %v1592
    %2101 = vmatprep.subr.mxu0 %v1585
    %2102 = vmatpush1.msra.mxu0 %v1584
    %2103 = vmatprep.subr.mxu0 %v1577
    %2104 = vmatpush1.msra.mxu0 %v1576
    %2105 = vmatprep.subr.mxu0 %v1569
    %2106 = vmatpush1.msra.mxu0 %v1568
    %2107 = vmatprep.subr.mxu0 %v1561
    %2108 = vmatpush1.msra.mxu0 %v1560
    %2109 = vmatprep.subr.mxu0 %v1553
    %2110 = vmatpush1.msra.mxu0 %v1552
    %2111 = vmatprep.subr.mxu0 %v1801
    %2112 = vmatpush2.msra.mxu0 %v1800
    %2113 = vmatprep.subr.mxu0 %v1793
    %2114 = vmatpush2.msra.mxu0 %v1792
    %2115 = vmatprep.subr.mxu0 %v1785
    %2116 = vmatpush2.msra.mxu0 %v1784
    %2117 = vmatprep.subr.mxu0 %v1777
    %2118 = vmatpush2.msra.mxu0 %v1776
    %2119 = vmatprep.subr.mxu0 %v1769
    %2120 = vmatpush2.msra.mxu0 %v1768
    %2121 = vmatprep.subr.mxu0 %v1761
    %2122 = vmatpush2.msra.mxu0 %v1760
    %2123 = vmatprep.subr.mxu0 %v1753
    %2124 = vmatpush2.msra.mxu0 %v1752
    %2125 = vmatprep.subr.mxu0 %v1745
    %2126 = vmatpush2.msra.mxu0 %v1744
    %2127 = vmatprep.subr.mxu0 %v1737
    %2128 = vmatpush2.msra.mxu0 %v1736
    %2129 = vmatprep.subr.mxu0 %v1729
    %2130 = vmatpush2.msra.mxu0 %v1728
    %2131 = vmatprep.subr.mxu0 %v1721
    %2132 = vmatpush2.msra.mxu0 %v1720
    %2133 = vmatprep.subr.mxu0 %v1713
    %2134 = vmatpush2.msra.mxu0 %v1712
    %2135 = vmatprep.subr.mxu0 %v1705
    %2136 = vmatpush2.msra.mxu0 %v1704
    %2137 = vmatprep.subr.mxu0 %v1697
    %2138 = vmatpush2.msra.mxu0 %v1696
    %2139 = vmatprep.subr.mxu0 %v1689
    %2140 = vmatpush2.msra.mxu0 %v1688
    %2141 = vmatprep.subr.mxu0 %v1681
    %2142 = vmatpush2.msra.mxu0 %v1680
    %2143 = vmatprep.mubr.f32.mxu0 %v119
    %2144 = vmatmul.mubr.f32.gmra.mxu0 %v118
    %v2145 = vpop.f32.mrf.mxu0
    %v2146 = vadd.f32 %v2069, %v2145
    %v2147 = vpop.f32.mrf.mxu0
    %v2148 = vadd.f32 %v2071, %v2147
    %2149 = vmatprep.mubr.f32.mxu0 %v123
    %2150 = vmatmul.mubr.f32.gmra.mxu0 %v122
    %v2151 = vpop.f32.mrf.mxu0
    %v2152 = vadd.f32 %v2075, %v2151
    %v2153 = vpop.f32.mrf.mxu0
    %v2154 = vadd.f32 %v2077, %v2153
    %2155 = vdwg.mxu0
    %2156 = vmatprep.subr.mxu0 %v1419
    %2157 = vmatpush1.msra.mxu0 %v1418
    %2158 = vmatprep.subr.mxu0 %v1411
    %2159 = vmatpush1.msra.mxu0 %v1410
    %2160 = vmatprep.subr.mxu0 %v1403
    %2161 = vmatpush1.msra.mxu0 %v1402
    %2162 = vmatprep.subr.mxu0 %v1395
    %2163 = vmatpush1.msra.mxu0 %v1394
    %2164 = vmatprep.subr.mxu0 %v1387
    %2165 = vmatpush1.msra.mxu0 %v1386
    %2166 = vmatprep.subr.mxu0 %v1379
    %2167 = vmatpush1.msra.mxu0 %v1378
    %2168 = vmatprep.subr.mxu0 %v1371
    %2169 = vmatpush1.msra.mxu0 %v1370
    %2170 = vmatprep.subr.mxu0 %v1363
    %2171 = vmatpush1.msra.mxu0 %v1362
    %2172 = vmatprep.subr.mxu0 %v1355
    %2173 = vmatpush1.msra.mxu0 %v1354
    %2174 = vmatprep.subr.mxu0 %v1347
    %2175 = vmatpush1.msra.mxu0 %v1346
    %2176 = vmatprep.subr.mxu0 %v1339
    %2177 = vmatpush1.msra.mxu0 %v1338
    %2178 = vmatprep.subr.mxu0 %v1331
    %2179 = vmatpush1.msra.mxu0 %v1330
    %2180 = vmatprep.subr.mxu0 %v1323
    %2181 = vmatpush1.msra.mxu0 %v1322
    %2182 = vmatprep.subr.mxu0 %v1315
    %2183 = vmatpush1.msra.mxu0 %v1314
    %2184 = vmatprep.subr.mxu0 %v1307
    %2185 = vmatpush1.msra.mxu0 %v1306
    %2186 = vmatprep.subr.mxu0 %v1299
    %2187 = vmatpush1.msra.mxu0 %v1298
    %2188 = vmatprep.subr.mxu0 %v1547
    %2189 = vmatpush2.msra.mxu0 %v1546
    %2190 = vmatprep.subr.mxu0 %v1539
    %2191 = vmatpush2.msra.mxu0 %v1538
    %2192 = vmatprep.subr.mxu0 %v1531
    %2193 = vmatpush2.msra.mxu0 %v1530
    %2194 = vmatprep.subr.mxu0 %v1523
    %2195 = vmatpush2.msra.mxu0 %v1522
    %2196 = vmatprep.subr.mxu0 %v1515
    %2197 = vmatpush2.msra.mxu0 %v1514
    %2198 = vmatprep.subr.mxu0 %v1507
    %2199 = vmatpush2.msra.mxu0 %v1506
    %2200 = vmatprep.subr.mxu0 %v1499
    %2201 = vmatpush2.msra.mxu0 %v1498
    %2202 = vmatprep.subr.mxu0 %v1491
    %2203 = vmatpush2.msra.mxu0 %v1490
    %2204 = vmatprep.subr.mxu0 %v1483
    %2205 = vmatpush2.msra.mxu0 %v1482
    %2206 = vmatprep.subr.mxu0 %v1475
    %2207 = vmatpush2.msra.mxu0 %v1474
    %2208 = vmatprep.subr.mxu0 %v1467
    %2209 = vmatpush2.msra.mxu0 %v1466
    %2210 = vmatprep.subr.mxu0 %v1459
    %2211 = vmatpush2.msra.mxu0 %v1458
    %2212 = vmatprep.subr.mxu0 %v1451
    %2213 = vmatpush2.msra.mxu0 %v1450
    %2214 = vmatprep.subr.mxu0 %v1443
    %2215 = vmatpush2.msra.mxu0 %v1442
    %2216 = vmatprep.subr.mxu0 %v1435
    %2217 = vmatpush2.msra.mxu0 %v1434
    %2218 = vmatprep.subr.mxu0 %v1427
    %2219 = vmatpush2.msra.mxu0 %v1426
    %2220 = vmatprep.mubr.f32.mxu0 %v117
    %2221 = vmatmul.mubr.f32.gmra.mxu0 %v116
    %v2222 = vpop.f32.mrf.mxu0
    %v2223 = vadd.f32 %v1827, %v2222
    %v2224 = vpop.f32.mrf.mxu0
    %v2225 = vadd.f32 %v1831, %v2224
    %2226 = vmatprep.mubr.f32.mxu0 %v121
    %2227 = vmatmul.mubr.f32.gmra.mxu0 %v120
    %v2228 = vpop.f32.mrf.mxu0
    %v2229 = vadd.f32 %v1827, %v2228
    %v2230 = vpop.f32.mrf.mxu0
    %v2231 = vadd.f32 %v1831, %v2230
    %2232 = vdwg.mxu0
    %2233 = vmatprep.subr.mxu0 %v1675
    %2234 = vmatpush1.msra.mxu0 %v1674
    %2235 = vmatprep.subr.mxu0 %v1667
    %2236 = vmatpush1.msra.mxu0 %v1666
    %2237 = vmatprep.subr.mxu0 %v1659
    %2238 = vmatpush1.msra.mxu0 %v1658
    %2239 = vmatprep.subr.mxu0 %v1651
    %2240 = vmatpush1.msra.mxu0 %v1650
    %2241 = vmatprep.subr.mxu0 %v1643
    %2242 = vmatpush1.msra.mxu0 %v1642
    %2243 = vmatprep.subr.mxu0 %v1635
    %2244 = vmatpush1.msra.mxu0 %v1634
    %2245 = vmatprep.subr.mxu0 %v1627
    %2246 = vmatpush1.msra.mxu0 %v1626
    %2247 = vmatprep.subr.mxu0 %v1619
    %2248 = vmatpush1.msra.mxu0 %v1618
    %2249 = vmatprep.subr.mxu0 %v1611
    %2250 = vmatpush1.msra.mxu0 %v1610
    %2251 = vmatprep.subr.mxu0 %v1603
    %2252 = vmatpush1.msra.mxu0 %v1602
    %2253 = vmatprep.subr.mxu0 %v1595
    %2254 = vmatpush1.msra.mxu0 %v1594
    %2255 = vmatprep.subr.mxu0 %v1587
    %2256 = vmatpush1.msra.mxu0 %v1586
    %2257 = vmatprep.subr.mxu0 %v1579
    %2258 = vmatpush1.msra.mxu0 %v1578
    %2259 = vmatprep.subr.mxu0 %v1571
    %2260 = vmatpush1.msra.mxu0 %v1570
    %2261 = vmatprep.subr.mxu0 %v1563
    %2262 = vmatpush1.msra.mxu0 %v1562
    %2263 = vmatprep.subr.mxu0 %v1555
    %2264 = vmatpush1.msra.mxu0 %v1554
    %2265 = vmatprep.subr.mxu0 %v1803
    %2266 = vmatpush2.msra.mxu0 %v1802
    %2267 = vmatprep.subr.mxu0 %v1795
    %2268 = vmatpush2.msra.mxu0 %v1794
    %2269 = vmatprep.subr.mxu0 %v1787
    %2270 = vmatpush2.msra.mxu0 %v1786
    %2271 = vmatprep.subr.mxu0 %v1779
    %2272 = vmatpush2.msra.mxu0 %v1778
    %2273 = vmatprep.subr.mxu0 %v1771
    %2274 = vmatpush2.msra.mxu0 %v1770
    %2275 = vmatprep.subr.mxu0 %v1763
    %2276 = vmatpush2.msra.mxu0 %v1762
    %2277 = vmatprep.subr.mxu0 %v1755
    %2278 = vmatpush2.msra.mxu0 %v1754
    %2279 = vmatprep.subr.mxu0 %v1747
    %2280 = vmatpush2.msra.mxu0 %v1746
    %2281 = vmatprep.subr.mxu0 %v1739
    %2282 = vmatpush2.msra.mxu0 %v1738
    %2283 = vmatprep.subr.mxu0 %v1731
    %2284 = vmatpush2.msra.mxu0 %v1730
    %2285 = vmatprep.subr.mxu0 %v1723
    %2286 = vmatpush2.msra.mxu0 %v1722
    %2287 = vmatprep.subr.mxu0 %v1715
    %2288 = vmatpush2.msra.mxu0 %v1714
    %2289 = vmatprep.subr.mxu0 %v1707
    %2290 = vmatpush2.msra.mxu0 %v1706
    %2291 = vmatprep.subr.mxu0 %v1699
    %2292 = vmatpush2.msra.mxu0 %v1698
    %2293 = vmatprep.subr.mxu0 %v1691
    %2294 = vmatpush2.msra.mxu0 %v1690
    %2295 = vmatprep.subr.mxu0 %v1683
    %2296 = vmatpush2.msra.mxu0 %v1682
    %2297 = vmatprep.mubr.f32.mxu0 %v119
    %2298 = vmatmul.mubr.f32.gmra.mxu0 %v118
    %v2299 = vpop.f32.mrf.mxu0
    %v2300 = vadd.f32 %v2223, %v2299
    %v2301 = vpop.f32.mrf.mxu0
    %v2302 = vadd.f32 %v2225, %v2301
    %2303 = vmatprep.mubr.f32.mxu0 %v123
    %2304 = vmatmul.mubr.f32.gmra.mxu0 %v122
    %v2305 = vpop.f32.mrf.mxu0
    %v2306 = vadd.f32 %v2229, %v2305
    %v2307 = vpop.f32.mrf.mxu0
    %v2308 = vadd.f32 %v2231, %v2307
    %2309 = vdwg.mxu0
    %2310 = vmatprep.subr.mxu0 %v1421
    %2311 = vmatpush1.msra.mxu0 %v1420
    %2312 = vmatprep.subr.mxu0 %v1413
    %2313 = vmatpush1.msra.mxu0 %v1412
    %2314 = vmatprep.subr.mxu0 %v1405
    %2315 = vmatpush1.msra.mxu0 %v1404
    %2316 = vmatprep.subr.mxu0 %v1397
    %2317 = vmatpush1.msra.mxu0 %v1396
    %2318 = vmatprep.subr.mxu0 %v1389
    %2319 = vmatpush1.msra.mxu0 %v1388
    %2320 = vmatprep.subr.mxu0 %v1381
    %2321 = vmatpush1.msra.mxu0 %v1380
    %2322 = vmatprep.subr.mxu0 %v1373
    %2323 = vmatpush1.msra.mxu0 %v1372
    %2324 = vmatprep.subr.mxu0 %v1365
    %2325 = vmatpush1.msra.mxu0 %v1364
    %2326 = vmatprep.subr.mxu0 %v1357
    %2327 = vmatpush1.msra.mxu0 %v1356
    %2328 = vmatprep.subr.mxu0 %v1349
    %2329 = vmatpush1.msra.mxu0 %v1348
    %2330 = vmatprep.subr.mxu0 %v1341
    %2331 = vmatpush1.msra.mxu0 %v1340
    %2332 = vmatprep.subr.mxu0 %v1333
    %2333 = vmatpush1.msra.mxu0 %v1332
    %2334 = vmatprep.subr.mxu0 %v1325
    %2335 = vmatpush1.msra.mxu0 %v1324
    %2336 = vmatprep.subr.mxu0 %v1317
    %2337 = vmatpush1.msra.mxu0 %v1316
    %2338 = vmatprep.subr.mxu0 %v1309
    %2339 = vmatpush1.msra.mxu0 %v1308
    %2340 = vmatprep.subr.mxu0 %v1301
    %2341 = vmatpush1.msra.mxu0 %v1300
    %2342 = vmatprep.subr.mxu0 %v1549
    %2343 = vmatpush2.msra.mxu0 %v1548
    %2344 = vmatprep.subr.mxu0 %v1541
    %2345 = vmatpush2.msra.mxu0 %v1540
    %2346 = vmatprep.subr.mxu0 %v1533
    %2347 = vmatpush2.msra.mxu0 %v1532
    %2348 = vmatprep.subr.mxu0 %v1525
    %2349 = vmatpush2.msra.mxu0 %v1524
    %2350 = vmatprep.subr.mxu0 %v1517
    %2351 = vmatpush2.msra.mxu0 %v1516
    %2352 = vmatprep.subr.mxu0 %v1509
    %2353 = vmatpush2.msra.mxu0 %v1508
    %2354 = vmatprep.subr.mxu0 %v1501
    %2355 = vmatpush2.msra.mxu0 %v1500
    %2356 = vmatprep.subr.mxu0 %v1493
    %2357 = vmatpush2.msra.mxu0 %v1492
    %2358 = vmatprep.subr.mxu0 %v1485
    %2359 = vmatpush2.msra.mxu0 %v1484
    %2360 = vmatprep.subr.mxu0 %v1477
    %2361 = vmatpush2.msra.mxu0 %v1476
    %2362 = vmatprep.subr.mxu0 %v1469
    %2363 = vmatpush2.msra.mxu0 %v1468
    %2364 = vmatprep.subr.mxu0 %v1461
    %2365 = vmatpush2.msra.mxu0 %v1460
    %2366 = vmatprep.subr.mxu0 %v1453
    %2367 = vmatpush2.msra.mxu0 %v1452
    %2368 = vmatprep.subr.mxu0 %v1445
    %2369 = vmatpush2.msra.mxu0 %v1444
    %2370 = vmatprep.subr.mxu0 %v1437
    %2371 = vmatpush2.msra.mxu0 %v1436
    %2372 = vmatprep.subr.mxu0 %v1429
    %2373 = vmatpush2.msra.mxu0 %v1428
    %2374 = vmatprep.mubr.f32.mxu0 %v117
    %2375 = vmatmul.mubr.f32.gmra.mxu0 %v116
    %v2376 = vpop.f32.mrf.mxu0
    %v2377 = vadd.f32 %v1835, %v2376
    %v2378 = vpop.f32.mrf.mxu0
    %v2379 = vadd.f32 %v1839, %v2378
    %2380 = vmatprep.mubr.f32.mxu0 %v121
    %2381 = vmatmul.mubr.f32.gmra.mxu0 %v120
    %v2382 = vpop.f32.mrf.mxu0
    %v2383 = vadd.f32 %v1835, %v2382
    %v2384 = vpop.f32.mrf.mxu0
    %v2385 = vadd.f32 %v1839, %v2384
    %2386 = vdwg.mxu0
    %2387 = vmatprep.subr.mxu0 %v1677
    %2388 = vmatpush1.msra.mxu0 %v1676
    %2389 = vmatprep.subr.mxu0 %v1669
    %2390 = vmatpush1.msra.mxu0 %v1668
    %2391 = vmatprep.subr.mxu0 %v1661
    %2392 = vmatpush1.msra.mxu0 %v1660
    %2393 = vmatprep.subr.mxu0 %v1653
    %2394 = vmatpush1.msra.mxu0 %v1652
    %2395 = vmatprep.subr.mxu0 %v1645
    %2396 = vmatpush1.msra.mxu0 %v1644
    %2397 = vmatprep.subr.mxu0 %v1637
    %2398 = vmatpush1.msra.mxu0 %v1636
    %2399 = vmatprep.subr.mxu0 %v1629
    %2400 = vmatpush1.msra.mxu0 %v1628
    %2401 = vmatprep.subr.mxu0 %v1621
    %2402 = vmatpush1.msra.mxu0 %v1620
    %2403 = vmatprep.subr.mxu0 %v1613
    %2404 = vmatpush1.msra.mxu0 %v1612
    %2405 = vmatprep.subr.mxu0 %v1605
    %2406 = vmatpush1.msra.mxu0 %v1604
    %2407 = vmatprep.subr.mxu0 %v1597
    %2408 = vmatpush1.msra.mxu0 %v1596
    %2409 = vmatprep.subr.mxu0 %v1589
    %2410 = vmatpush1.msra.mxu0 %v1588
    %2411 = vmatprep.subr.mxu0 %v1581
    %2412 = vmatpush1.msra.mxu0 %v1580
    %2413 = vmatprep.subr.mxu0 %v1573
    %2414 = vmatpush1.msra.mxu0 %v1572
    %2415 = vmatprep.subr.mxu0 %v1565
    %2416 = vmatpush1.msra.mxu0 %v1564
    %2417 = vmatprep.subr.mxu0 %v1557
    %2418 = vmatpush1.msra.mxu0 %v1556
    %2419 = vmatprep.subr.mxu0 %v1805
    %2420 = vmatpush2.msra.mxu0 %v1804
    %2421 = vmatprep.subr.mxu0 %v1797
    %2422 = vmatpush2.msra.mxu0 %v1796
    %2423 = vmatprep.subr.mxu0 %v1789
    %2424 = vmatpush2.msra.mxu0 %v1788
    %2425 = vmatprep.subr.mxu0 %v1781
    %2426 = vmatpush2.msra.mxu0 %v1780
    %2427 = vmatprep.subr.mxu0 %v1773
    %2428 = vmatpush2.msra.mxu0 %v1772
    %2429 = vmatprep.subr.mxu0 %v1765
    %2430 = vmatpush2.msra.mxu0 %v1764
    %2431 = vmatprep.subr.mxu0 %v1757
    %2432 = vmatpush2.msra.mxu0 %v1756
    %2433 = vmatprep.subr.mxu0 %v1749
    %2434 = vmatpush2.msra.mxu0 %v1748
    %2435 = vmatprep.subr.mxu0 %v1741
    %2436 = vmatpush2.msra.mxu0 %v1740
    %2437 = vmatprep.subr.mxu0 %v1733
    %2438 = vmatpush2.msra.mxu0 %v1732
    %2439 = vmatprep.subr.mxu0 %v1725
    %2440 = vmatpush2.msra.mxu0 %v1724
    %2441 = vmatprep.subr.mxu0 %v1717
    %2442 = vmatpush2.msra.mxu0 %v1716
    %2443 = vmatprep.subr.mxu0 %v1709
    %2444 = vmatpush2.msra.mxu0 %v1708
    %2445 = vmatprep.subr.mxu0 %v1701
    %2446 = vmatpush2.msra.mxu0 %v1700
    %2447 = vmatprep.subr.mxu0 %v1693
    %2448 = vmatpush2.msra.mxu0 %v1692
    %2449 = vmatprep.subr.mxu0 %v1685
    %2450 = vmatpush2.msra.mxu0 %v1684
    %2451 = vmatprep.mubr.f32.mxu0 %v119
    %2452 = vmatmul.mubr.f32.gmra.mxu0 %v118
    %v2453 = vpop.f32.mrf.mxu0
    %v2454 = vadd.f32 %v2377, %v2453
    %v2455 = vpop.f32.mrf.mxu0
    %v2456 = vadd.f32 %v2379, %v2455
    %2457 = vmatprep.mubr.f32.mxu0 %v123
    %2458 = vmatmul.mubr.f32.gmra.mxu0 %v122
    %v2459 = vpop.f32.mrf.mxu0
    %v2460 = vadd.f32 %v2383, %v2459
    %v2461 = vpop.f32.mrf.mxu0
    %v2462 = vadd.f32 %v2385, %v2461
    %2463 = vdwg.mxu0
    %v2464 = vxor.u32 %v1992, 2147483648
    %v2465 = vxor.u32 %v1994, 2147483648
    %v2466 = vxor.u32 %v2146, 2147483648
    %v2467 = vxor.u32 %v2148, 2147483648
    %v2468 = vxor.u32 %v2300, 2147483648
    %v2469 = vxor.u32 %v2302, 2147483648
    %v2470 = vxor.u32 %v2454, 2147483648
    %v2471 = vxor.u32 %v2456, 2147483648
    %v2472 = vxor.u32 %v1998, 2147483648
    %v2473 = vxor.u32 %v2000, 2147483648
    %v2474 = vxor.u32 %v2152, 2147483648
    %v2475 = vxor.u32 %v2154, 2147483648
    %v2476 = vxor.u32 %v2306, 2147483648
    %v2477 = vxor.u32 %v2308, 2147483648
    %v2478 = vxor.u32 %v2460, 2147483648
    %v2479 = vxor.u32 %v2462, 2147483648
    %v2480 = vmul.f32 %v2464, 1.442695
    %v2481 = vpow.pop %v2480
    %v2482 = vmul.f32 %v2465, 1.442695
    %v2483 = vpow.pop %v2482
    %v2484 = vmul.f32 %v2466, 1.442695
    %v2485 = vpow.pop %v2484
    %v2486 = vmul.f32 %v2467, 1.442695
    %v2487 = vpow.pop %v2486
    %v2488 = vmul.f32 %v2468, 1.442695
    %v2489 = vpow.pop %v2488
    %v2490 = vmul.f32 %v2469, 1.442695
    %v2491 = vpow.pop %v2490
    %v2492 = vmul.f32 %v2470, 1.442695
    %v2493 = vpow.pop %v2492
    %v2494 = vmul.f32 %v2471, 1.442695
    %v2495 = vpow.pop %v2494
    %v2496 = vmul.f32 %v2472, 1.442695
    %v2497 = vpow.pop %v2496
    %v2498 = vmul.f32 %v2473, 1.442695
    %v2499 = vpow.pop %v2498
    %v2500 = vmul.f32 %v2474, 1.442695
    %v2501 = vpow.pop %v2500
    %v2502 = vmul.f32 %v2475, 1.442695
    %v2503 = vpow.pop %v2502
    %v2504 = vmul.f32 %v2476, 1.442695
    %v2505 = vpow.pop %v2504
    %v2506 = vmul.f32 %v2477, 1.442695
    %v2507 = vpow.pop %v2506
    %v2508 = vmul.f32 %v2478, 1.442695
    %v2509 = vpow.pop %v2508
    %v2510 = vmul.f32 %v2479, 1.442695
    %v2511 = vpow.pop %v2510
    %v2512 = vadd.f32 %v2481, 1.0
    %v2513 = vadd.f32 %v2483, 1.0
    %v2514 = vadd.f32 %v2485, 1.0
    %v2515 = vadd.f32 %v2487, 1.0
    %v2516 = vadd.f32 %v2489, 1.0
    %v2517 = vadd.f32 %v2491, 1.0
    %v2518 = vadd.f32 %v2493, 1.0
    %v2519 = vadd.f32 %v2495, 1.0
    %v2520 = vadd.f32 %v2497, 1.0
    %v2521 = vadd.f32 %v2499, 1.0
    %v2522 = vadd.f32 %v2501, 1.0
    %v2523 = vadd.f32 %v2503, 1.0
    %v2524 = vadd.f32 %v2505, 1.0
    %v2525 = vadd.f32 %v2507, 1.0
    %v2526 = vadd.f32 %v2509, 1.0
    %v2527 = vadd.f32 %v2511, 1.0
    %v2528 = vrcp.pop %v2512
    %v2529 = vmul.f32 1.0, %v2528
    %v2530 = vrcp.pop %v2513
    %v2531 = vmul.f32 1.0, %v2530
    %v2532 = vrcp.pop %v2514
    %v2533 = vmul.f32 1.0, %v2532
    %v2534 = vrcp.pop %v2515
    %v2535 = vmul.f32 1.0, %v2534
    %v2536 = vrcp.pop %v2516
    %v2537 = vmul.f32 1.0, %v2536
    %v2538 = vrcp.pop %v2517
    %v2539 = vmul.f32 1.0, %v2538
    %v2540 = vrcp.pop %v2518
    %v2541 = vmul.f32 1.0, %v2540
    %v2542 = vrcp.pop %v2519
    %v2543 = vmul.f32 1.0, %v2542
    %v2544 = vrcp.pop %v2520
    %v2545 = vmul.f32 1.0, %v2544
    %v2546 = vrcp.pop %v2521
    %v2547 = vmul.f32 1.0, %v2546
    %v2548 = vrcp.pop %v2522
    %v2549 = vmul.f32 1.0, %v2548
    %v2550 = vrcp.pop %v2523
    %v2551 = vmul.f32 1.0, %v2550
    %v2552 = vrcp.pop %v2524
    %v2553 = vmul.f32 1.0, %v2552
    %v2554 = vrcp.pop %v2525
    %v2555 = vmul.f32 1.0, %v2554
    %v2556 = vrcp.pop %v2526
    %v2557 = vmul.f32 1.0, %v2556
    %v2558 = vrcp.pop %v2527
    %v2559 = vmul.f32 1.0, %v2558
    %v2560 = vmul.f32 %v1992, %v2529
    %v2561 = vmul.f32 %v1994, %v2531
    %v2562 = vmul.f32 %v2146, %v2533
    %v2563 = vmul.f32 %v2148, %v2535
    %v2564 = vmul.f32 %v2300, %v2537
    %v2565 = vmul.f32 %v2302, %v2539
    %v2566 = vmul.f32 %v2454, %v2541
    %v2567 = vmul.f32 %v2456, %v2543
    %v2568 = vmul.f32 %v1998, %v2545
    %v2569 = vmul.f32 %v2000, %v2547
    %v2570 = vmul.f32 %v2152, %v2549
    %v2571 = vmul.f32 %v2154, %v2551
    %v2572 = vmul.f32 %v2306, %v2553
    %v2573 = vmul.f32 %v2308, %v2555
    %v2574 = vmul.f32 %v2460, %v2557
    %v2575 = vmul.f32 %v2462, %v2559
    %v2576 = vmul.f32 %v822, %v2560
    %v2577 = vmul.f32 %v824, %v2561
    %v2578 = vmul.f32 %v976, %v2562
    %v2579 = vmul.f32 %v978, %v2563
    %v2580 = vmul.f32 %v1130, %v2564
    %v2581 = vmul.f32 %v1132, %v2565
    %v2582 = vmul.f32 %v1284, %v2566
    %v2583 = vmul.f32 %v1286, %v2567
    %v2584 = vmul.f32 %v828, %v2568
    %v2585 = vmul.f32 %v830, %v2569
    %v2586 = vmul.f32 %v982, %v2570
    %v2587 = vmul.f32 %v984, %v2571
    %v2588 = vmul.f32 %v1136, %v2572
    %v2589 = vmul.f32 %v1138, %v2573
    %v2590 = vmul.f32 %v1290, %v2574
    %v2591 = vmul.f32 %v1292, %v2575
    %v2592 = vld [vmem:[#allocation11] sm:$0xff]
    %v2593 = vld [vmem:[#allocation11 + $0x8] sm:$0xff]
    %v2594 = vld [vmem:[#allocation11 + $0x10] sm:$0xff]
    %v2595 = vld [vmem:[#allocation11 + $0x18] sm:$0xff]
    %v2596 = vld [vmem:[#allocation11 + $0x20] sm:$0xff]
    %v2597 = vld [vmem:[#allocation11 + $0x28] sm:$0xff]
    %v2598 = vld [vmem:[#allocation11 + $0x30] sm:$0xff]
    %v2599 = vld [vmem:[#allocation11 + $0x38] sm:$0xff]
    %v2600 = vld [vmem:[#allocation11 + $0x40] sm:$0xff]
    %v2601 = vld [vmem:[#allocation11 + $0x48] sm:$0xff]
    %v2602 = vld [vmem:[#allocation11 + $0x50] sm:$0xff]
    %v2603 = vld [vmem:[#allocation11 + $0x58] sm:$0xff]
    %v2604 = vld [vmem:[#allocation11 + $0x60] sm:$0xff]
    %v2605 = vld [vmem:[#allocation11 + $0x68] sm:$0xff]
    %v2606 = vld [vmem:[#allocation11 + $0x70] sm:$0xff]
    %v2607 = vld [vmem:[#allocation11 + $0x78] sm:$0xff]
    %v2608 = vld [vmem:[#allocation11 + $0x80] sm:$0xff]
    %v2609 = vld [vmem:[#allocation11 + $0x88] sm:$0xff]
    %v2610 = vld [vmem:[#allocation11 + $0x90] sm:$0xff]
    %v2611 = vld [vmem:[#allocation11 + $0x98] sm:$0xff]
    %v2612 = vld [vmem:[#allocation11 + $0xa0] sm:$0xff]
    %v2613 = vld [vmem:[#allocation11 + $0xa8] sm:$0xff]
    %v2614 = vld [vmem:[#allocation11 + $0xb0] sm:$0xff]
    %v2615 = vld [vmem:[#allocation11 + $0xb8] sm:$0xff]
    %v2616 = vld [vmem:[#allocation11 + $0xc0] sm:$0xff]
    %v2617 = vld [vmem:[#allocation11 + $0xc8] sm:$0xff]
    %v2618 = vld [vmem:[#allocation11 + $0xd0] sm:$0xff]
    %v2619 = vld [vmem:[#allocation11 + $0xd8] sm:$0xff]
    %v2620 = vld [vmem:[#allocation11 + $0xe0] sm:$0xff]
    %v2621 = vld [vmem:[#allocation11 + $0xe8] sm:$0xff]
    %v2622 = vld [vmem:[#allocation11 + $0xf0] sm:$0xff]
    %v2623 = vld [vmem:[#allocation11 + $0xf8] sm:$0xff]
    %v2624 = vld [vmem:[#allocation11 + $0x100] sm:$0xff]
    %v2625 = vld [vmem:[#allocation11 + $0x108] sm:$0xff]
    %v2626 = vld [vmem:[#allocation11 + $0x110] sm:$0xff]
    %v2627 = vld [vmem:[#allocation11 + $0x118] sm:$0xff]
    %v2628 = vld [vmem:[#allocation11 + $0x120] sm:$0xff]
    %v2629 = vld [vmem:[#allocation11 + $0x128] sm:$0xff]
    %v2630 = vld [vmem:[#allocation11 + $0x130] sm:$0xff]
    %v2631 = vld [vmem:[#allocation11 + $0x138] sm:$0xff]
    %v2632 = vld [vmem:[#allocation11 + $0x140] sm:$0xff]
    %v2633 = vld [vmem:[#allocation11 + $0x148] sm:$0xff]
    %v2634 = vld [vmem:[#allocation11 + $0x150] sm:$0xff]
    %v2635 = vld [vmem:[#allocation11 + $0x158] sm:$0xff]
    %v2636 = vld [vmem:[#allocation11 + $0x160] sm:$0xff]
    %v2637 = vld [vmem:[#allocation11 + $0x168] sm:$0xff]
    %v2638 = vld [vmem:[#allocation11 + $0x170] sm:$0xff]
    %v2639 = vld [vmem:[#allocation11 + $0x178] sm:$0xff]
    %v2640 = vld [vmem:[#allocation11 + $0x180] sm:$0xff]
    %v2641 = vld [vmem:[#allocation11 + $0x188] sm:$0xff]
    %v2642 = vld [vmem:[#allocation11 + $0x190] sm:$0xff]
    %v2643 = vld [vmem:[#allocation11 + $0x198] sm:$0xff]
    %v2644 = vld [vmem:[#allocation11 + $0x1a0] sm:$0xff]
    %v2645 = vld [vmem:[#allocation11 + $0x1a8] sm:$0xff]
    %v2646 = vld [vmem:[#allocation11 + $0x1b0] sm:$0xff]
    %v2647 = vld [vmem:[#allocation11 + $0x1b8] sm:$0xff]
    %v2648 = vld [vmem:[#allocation11 + $0x1c0] sm:$0xff]
    %v2649 = vld [vmem:[#allocation11 + $0x1c8] sm:$0xff]
    %v2650 = vld [vmem:[#allocation11 + $0x1d0] sm:$0xff]
    %v2651 = vld [vmem:[#allocation11 + $0x1d8] sm:$0xff]
    %v2652 = vld [vmem:[#allocation11 + $0x1e0] sm:$0xff]
    %v2653 = vld [vmem:[#allocation11 + $0x1e8] sm:$0xff]
    %v2654 = vld [vmem:[#allocation11 + $0x1f0] sm:$0xff]
    %v2655 = vld [vmem:[#allocation11 + $0x1f8] sm:$0xff]
    %v2656 = vld [vmem:[#allocation11 + $0x200] sm:$0xff]
    %v2657 = vld [vmem:[#allocation11 + $0x208] sm:$0xff]
    %v2658 = vld [vmem:[#allocation11 + $0x210] sm:$0xff]
    %v2659 = vld [vmem:[#allocation11 + $0x218] sm:$0xff]
    %v2660 = vld [vmem:[#allocation11 + $0x220] sm:$0xff]
    %v2661 = vld [vmem:[#allocation11 + $0x228] sm:$0xff]
    %v2662 = vld [vmem:[#allocation11 + $0x230] sm:$0xff]
    %v2663 = vld [vmem:[#allocation11 + $0x238] sm:$0xff]
    %v2664 = vld [vmem:[#allocation11 + $0x240] sm:$0xff]
    %v2665 = vld [vmem:[#allocation11 + $0x248] sm:$0xff]
    %v2666 = vld [vmem:[#allocation11 + $0x250] sm:$0xff]
    %v2667 = vld [vmem:[#allocation11 + $0x258] sm:$0xff]
    %v2668 = vld [vmem:[#allocation11 + $0x260] sm:$0xff]
    %v2669 = vld [vmem:[#allocation11 + $0x268] sm:$0xff]
    %v2670 = vld [vmem:[#allocation11 + $0x270] sm:$0xff]
    %v2671 = vld [vmem:[#allocation11 + $0x278] sm:$0xff]
    %v2672 = vld [vmem:[#allocation11 + $0x280] sm:$0xff]
    %v2673 = vld [vmem:[#allocation11 + $0x288] sm:$0xff]
    %v2674 = vld [vmem:[#allocation11 + $0x290] sm:$0xff]
    %v2675 = vld [vmem:[#allocation11 + $0x298] sm:$0xff]
    %v2676 = vld [vmem:[#allocation11 + $0x2a0] sm:$0xff]
    %v2677 = vld [vmem:[#allocation11 + $0x2a8] sm:$0xff]
    %v2678 = vld [vmem:[#allocation11 + $0x2b0] sm:$0xff]
    %v2679 = vld [vmem:[#allocation11 + $0x2b8] sm:$0xff]
    %v2680 = vld [vmem:[#allocation11 + $0x2c0] sm:$0xff]
    %v2681 = vld [vmem:[#allocation11 + $0x2c8] sm:$0xff]
    %v2682 = vld [vmem:[#allocation11 + $0x2d0] sm:$0xff]
    %v2683 = vld [vmem:[#allocation11 + $0x2d8] sm:$0xff]
    %v2684 = vld [vmem:[#allocation11 + $0x2e0] sm:$0xff]
    %v2685 = vld [vmem:[#allocation11 + $0x2e8] sm:$0xff]
    %v2686 = vld [vmem:[#allocation11 + $0x2f0] sm:$0xff]
    %v2687 = vld [vmem:[#allocation11 + $0x2f8] sm:$0xff]
    %v2688 = vld [vmem:[#allocation11 + $0x300] sm:$0xff]
    %v2689 = vld [vmem:[#allocation11 + $0x308] sm:$0xff]
    %v2690 = vld [vmem:[#allocation11 + $0x310] sm:$0xff]
    %v2691 = vld [vmem:[#allocation11 + $0x318] sm:$0xff]
    %v2692 = vld [vmem:[#allocation11 + $0x320] sm:$0xff]
    %v2693 = vld [vmem:[#allocation11 + $0x328] sm:$0xff]
    %v2694 = vld [vmem:[#allocation11 + $0x330] sm:$0xff]
    %v2695 = vld [vmem:[#allocation11 + $0x338] sm:$0xff]
    %v2696 = vld [vmem:[#allocation11 + $0x340] sm:$0xff]
    %v2697 = vld [vmem:[#allocation11 + $0x348] sm:$0xff]
    %v2698 = vld [vmem:[#allocation11 + $0x350] sm:$0xff]
    %v2699 = vld [vmem:[#allocation11 + $0x358] sm:$0xff]
    %v2700 = vld [vmem:[#allocation11 + $0x360] sm:$0xff]
    %v2701 = vld [vmem:[#allocation11 + $0x368] sm:$0xff]
    %v2702 = vld [vmem:[#allocation11 + $0x370] sm:$0xff]
    %v2703 = vld [vmem:[#allocation11 + $0x378] sm:$0xff]
    %v2704 = vld [vmem:[#allocation11 + $0x380] sm:$0xff]
    %v2705 = vld [vmem:[#allocation11 + $0x388] sm:$0xff]
    %v2706 = vld [vmem:[#allocation11 + $0x390] sm:$0xff]
    %v2707 = vld [vmem:[#allocation11 + $0x398] sm:$0xff]
    %v2708 = vld [vmem:[#allocation11 + $0x3a0] sm:$0xff]
    %v2709 = vld [vmem:[#allocation11 + $0x3a8] sm:$0xff]
    %v2710 = vld [vmem:[#allocation11 + $0x3b0] sm:$0xff]
    %v2711 = vld [vmem:[#allocation11 + $0x3b8] sm:$0xff]
    %v2712 = vld [vmem:[#allocation11 + $0x3c0] sm:$0xff]
    %v2713 = vld [vmem:[#allocation11 + $0x3c8] sm:$0xff]
    %v2714 = vld [vmem:[#allocation11 + $0x3d0] sm:$0xff]
    %v2715 = vld [vmem:[#allocation11 + $0x3d8] sm:$0xff]
    %v2716 = vld [vmem:[#allocation11 + $0x3e0] sm:$0xff]
    %v2717 = vld [vmem:[#allocation11 + $0x3e8] sm:$0xff]
    %v2718 = vld [vmem:[#allocation11 + $0x3f0] sm:$0xff]
    %v2719 = vld [vmem:[#allocation11 + $0x3f8] sm:$0xff]
    %v2720 = vld [vmem:[#allocation11 + $0x400] sm:$0xff]
    %v2721 = vld [vmem:[#allocation11 + $0x408] sm:$0xff]
    %v2722 = vld [vmem:[#allocation11 + $0x410] sm:$0xff]
    %v2723 = vld [vmem:[#allocation11 + $0x418] sm:$0xff]
    %v2724 = vld [vmem:[#allocation11 + $0x420] sm:$0xff]
    %v2725 = vld [vmem:[#allocation11 + $0x428] sm:$0xff]
    %v2726 = vld [vmem:[#allocation11 + $0x430] sm:$0xff]
    %v2727 = vld [vmem:[#allocation11 + $0x438] sm:$0xff]
    %v2728 = vld [vmem:[#allocation11 + $0x440] sm:$0xff]
    %v2729 = vld [vmem:[#allocation11 + $0x448] sm:$0xff]
    %v2730 = vld [vmem:[#allocation11 + $0x450] sm:$0xff]
    %v2731 = vld [vmem:[#allocation11 + $0x458] sm:$0xff]
    %v2732 = vld [vmem:[#allocation11 + $0x460] sm:$0xff]
    %v2733 = vld [vmem:[#allocation11 + $0x468] sm:$0xff]
    %v2734 = vld [vmem:[#allocation11 + $0x470] sm:$0xff]
    %v2735 = vld [vmem:[#allocation11 + $0x478] sm:$0xff]
    %v2736 = vld [vmem:[#allocation11 + $0x480] sm:$0xff]
    %v2737 = vld [vmem:[#allocation11 + $0x488] sm:$0xff]
    %v2738 = vld [vmem:[#allocation11 + $0x490] sm:$0xff]
    %v2739 = vld [vmem:[#allocation11 + $0x498] sm:$0xff]
    %v2740 = vld [vmem:[#allocation11 + $0x4a0] sm:$0xff]
    %v2741 = vld [vmem:[#allocation11 + $0x4a8] sm:$0xff]
    %v2742 = vld [vmem:[#allocation11 + $0x4b0] sm:$0xff]
    %v2743 = vld [vmem:[#allocation11 + $0x4b8] sm:$0xff]
    %v2744 = vld [vmem:[#allocation11 + $0x4c0] sm:$0xff]
    %v2745 = vld [vmem:[#allocation11 + $0x4c8] sm:$0xff]
    %v2746 = vld [vmem:[#allocation11 + $0x4d0] sm:$0xff]
    %v2747 = vld [vmem:[#allocation11 + $0x4d8] sm:$0xff]
    %v2748 = vld [vmem:[#allocation11 + $0x4e0] sm:$0xff]
    %v2749 = vld [vmem:[#allocation11 + $0x4e8] sm:$0xff]
    %v2750 = vld [vmem:[#allocation11 + $0x4f0] sm:$0xff]
    %v2751 = vld [vmem:[#allocation11 + $0x4f8] sm:$0xff]
    %v2752 = vld [vmem:[#allocation11 + $0x500] sm:$0xff]
    %v2753 = vld [vmem:[#allocation11 + $0x508] sm:$0xff]
    %v2754 = vld [vmem:[#allocation11 + $0x510] sm:$0xff]
    %v2755 = vld [vmem:[#allocation11 + $0x518] sm:$0xff]
    %v2756 = vld [vmem:[#allocation11 + $0x520] sm:$0xff]
    %v2757 = vld [vmem:[#allocation11 + $0x528] sm:$0xff]
    %v2758 = vld [vmem:[#allocation11 + $0x530] sm:$0xff]
    %v2759 = vld [vmem:[#allocation11 + $0x538] sm:$0xff]
    %v2760 = vld [vmem:[#allocation11 + $0x540] sm:$0xff]
    %v2761 = vld [vmem:[#allocation11 + $0x548] sm:$0xff]
    %v2762 = vld [vmem:[#allocation11 + $0x550] sm:$0xff]
    %v2763 = vld [vmem:[#allocation11 + $0x558] sm:$0xff]
    %v2764 = vld [vmem:[#allocation11 + $0x560] sm:$0xff]
    %v2765 = vld [vmem:[#allocation11 + $0x568] sm:$0xff]
    %v2766 = vld [vmem:[#allocation11 + $0x570] sm:$0xff]
    %v2767 = vld [vmem:[#allocation11 + $0x578] sm:$0xff]
    %v2768 = vld [vmem:[#allocation11 + $0x580] sm:$0xff]
    %v2769 = vld [vmem:[#allocation11 + $0x588] sm:$0xff]
    %v2770 = vld [vmem:[#allocation11 + $0x590] sm:$0xff]
    %v2771 = vld [vmem:[#allocation11 + $0x598] sm:$0xff]
    %v2772 = vld [vmem:[#allocation11 + $0x5a0] sm:$0xff]
    %v2773 = vld [vmem:[#allocation11 + $0x5a8] sm:$0xff]
    %v2774 = vld [vmem:[#allocation11 + $0x5b0] sm:$0xff]
    %v2775 = vld [vmem:[#allocation11 + $0x5b8] sm:$0xff]
    %v2776 = vld [vmem:[#allocation11 + $0x5c0] sm:$0xff]
    %v2777 = vld [vmem:[#allocation11 + $0x5c8] sm:$0xff]
    %v2778 = vld [vmem:[#allocation11 + $0x5d0] sm:$0xff]
    %v2779 = vld [vmem:[#allocation11 + $0x5d8] sm:$0xff]
    %v2780 = vld [vmem:[#allocation11 + $0x5e0] sm:$0xff]
    %v2781 = vld [vmem:[#allocation11 + $0x5e8] sm:$0xff]
    %v2782 = vld [vmem:[#allocation11 + $0x5f0] sm:$0xff]
    %v2783 = vld [vmem:[#allocation11 + $0x5f8] sm:$0xff]
    %v2784 = vld [vmem:[#allocation11 + $0x600] sm:$0xff]
    %v2785 = vld [vmem:[#allocation11 + $0x608] sm:$0xff]
    %v2786 = vld [vmem:[#allocation11 + $0x610] sm:$0xff]
    %v2787 = vld [vmem:[#allocation11 + $0x618] sm:$0xff]
    %v2788 = vld [vmem:[#allocation11 + $0x620] sm:$0xff]
    %v2789 = vld [vmem:[#allocation11 + $0x628] sm:$0xff]
    %v2790 = vld [vmem:[#allocation11 + $0x630] sm:$0xff]
    %v2791 = vld [vmem:[#allocation11 + $0x638] sm:$0xff]
    %v2792 = vld [vmem:[#allocation11 + $0x640] sm:$0xff]
    %v2793 = vld [vmem:[#allocation11 + $0x648] sm:$0xff]
    %v2794 = vld [vmem:[#allocation11 + $0x650] sm:$0xff]
    %v2795 = vld [vmem:[#allocation11 + $0x658] sm:$0xff]
    %v2796 = vld [vmem:[#allocation11 + $0x660] sm:$0xff]
    %v2797 = vld [vmem:[#allocation11 + $0x668] sm:$0xff]
    %v2798 = vld [vmem:[#allocation11 + $0x670] sm:$0xff]
    %v2799 = vld [vmem:[#allocation11 + $0x678] sm:$0xff]
    %v2800 = vld [vmem:[#allocation11 + $0x680] sm:$0xff]
    %v2801 = vld [vmem:[#allocation11 + $0x688] sm:$0xff]
    %v2802 = vld [vmem:[#allocation11 + $0x690] sm:$0xff]
    %v2803 = vld [vmem:[#allocation11 + $0x698] sm:$0xff]
    %v2804 = vld [vmem:[#allocation11 + $0x6a0] sm:$0xff]
    %v2805 = vld [vmem:[#allocation11 + $0x6a8] sm:$0xff]
    %v2806 = vld [vmem:[#allocation11 + $0x6b0] sm:$0xff]
    %v2807 = vld [vmem:[#allocation11 + $0x6b8] sm:$0xff]
    %v2808 = vld [vmem:[#allocation11 + $0x6c0] sm:$0xff]
    %v2809 = vld [vmem:[#allocation11 + $0x6c8] sm:$0xff]
    %v2810 = vld [vmem:[#allocation11 + $0x6d0] sm:$0xff]
    %v2811 = vld [vmem:[#allocation11 + $0x6d8] sm:$0xff]
    %v2812 = vld [vmem:[#allocation11 + $0x6e0] sm:$0xff]
    %v2813 = vld [vmem:[#allocation11 + $0x6e8] sm:$0xff]
    %v2814 = vld [vmem:[#allocation11 + $0x6f0] sm:$0xff]
    %v2815 = vld [vmem:[#allocation11 + $0x6f8] sm:$0xff]
    %v2816 = vld [vmem:[#allocation11 + $0x700] sm:$0xff]
    %v2817 = vld [vmem:[#allocation11 + $0x708] sm:$0xff]
    %v2818 = vld [vmem:[#allocation11 + $0x710] sm:$0xff]
    %v2819 = vld [vmem:[#allocation11 + $0x718] sm:$0xff]
    %v2820 = vld [vmem:[#allocation11 + $0x720] sm:$0xff]
    %v2821 = vld [vmem:[#allocation11 + $0x728] sm:$0xff]
    %v2822 = vld [vmem:[#allocation11 + $0x730] sm:$0xff]
    %v2823 = vld [vmem:[#allocation11 + $0x738] sm:$0xff]
    %v2824 = vld [vmem:[#allocation11 + $0x740] sm:$0xff]
    %v2825 = vld [vmem:[#allocation11 + $0x748] sm:$0xff]
    %v2826 = vld [vmem:[#allocation11 + $0x750] sm:$0xff]
    %v2827 = vld [vmem:[#allocation11 + $0x758] sm:$0xff]
    %v2828 = vld [vmem:[#allocation11 + $0x760] sm:$0xff]
    %v2829 = vld [vmem:[#allocation11 + $0x768] sm:$0xff]
    %v2830 = vld [vmem:[#allocation11 + $0x770] sm:$0xff]
    %v2831 = vld [vmem:[#allocation11 + $0x778] sm:$0xff]
    %v2832 = vld [vmem:[#allocation11 + $0x780] sm:$0xff]
    %v2833 = vld [vmem:[#allocation11 + $0x788] sm:$0xff]
    %v2834 = vld [vmem:[#allocation11 + $0x790] sm:$0xff]
    %v2835 = vld [vmem:[#allocation11 + $0x798] sm:$0xff]
    %v2836 = vld [vmem:[#allocation11 + $0x7a0] sm:$0xff]
    %v2837 = vld [vmem:[#allocation11 + $0x7a8] sm:$0xff]
    %v2838 = vld [vmem:[#allocation11 + $0x7b0] sm:$0xff]
    %v2839 = vld [vmem:[#allocation11 + $0x7b8] sm:$0xff]
    %v2840 = vld [vmem:[#allocation11 + $0x7c0] sm:$0xff]
    %v2841 = vld [vmem:[#allocation11 + $0x7c8] sm:$0xff]
    %v2842 = vld [vmem:[#allocation11 + $0x7d0] sm:$0xff]
    %v2843 = vld [vmem:[#allocation11 + $0x7d8] sm:$0xff]
    %v2844 = vld [vmem:[#allocation11 + $0x7e0] sm:$0xff]
    %v2845 = vld [vmem:[#allocation11 + $0x7e8] sm:$0xff]
    %v2846 = vld [vmem:[#allocation11 + $0x7f0] sm:$0xff]
    %v2847 = vld [vmem:[#allocation11 + $0x7f8] sm:$0xff]
    %v2848 = vld [vmem:[#allocation11 + $0x800] sm:$0xff]
    %v2849 = vld [vmem:[#allocation11 + $0x808] sm:$0xff]
    %v2850 = vld [vmem:[#allocation11 + $0x810] sm:$0xff]
    %v2851 = vld [vmem:[#allocation11 + $0x818] sm:$0xff]
    %v2852 = vld [vmem:[#allocation11 + $0x820] sm:$0xff]
    %v2853 = vld [vmem:[#allocation11 + $0x828] sm:$0xff]
    %v2854 = vld [vmem:[#allocation11 + $0x830] sm:$0xff]
    %v2855 = vld [vmem:[#allocation11 + $0x838] sm:$0xff]
    %v2856 = vld [vmem:[#allocation11 + $0x840] sm:$0xff]
    %v2857 = vld [vmem:[#allocation11 + $0x848] sm:$0xff]
    %v2858 = vld [vmem:[#allocation11 + $0x850] sm:$0xff]
    %v2859 = vld [vmem:[#allocation11 + $0x858] sm:$0xff]
    %v2860 = vld [vmem:[#allocation11 + $0x860] sm:$0xff]
    %v2861 = vld [vmem:[#allocation11 + $0x868] sm:$0xff]
    %v2862 = vld [vmem:[#allocation11 + $0x870] sm:$0xff]
    %v2863 = vld [vmem:[#allocation11 + $0x878] sm:$0xff]
    %v2864 = vld [vmem:[#allocation11 + $0x880] sm:$0xff]
    %v2865 = vld [vmem:[#allocation11 + $0x888] sm:$0xff]
    %v2866 = vld [vmem:[#allocation11 + $0x890] sm:$0xff]
    %v2867 = vld [vmem:[#allocation11 + $0x898] sm:$0xff]
    %v2868 = vld [vmem:[#allocation11 + $0x8a0] sm:$0xff]
    %v2869 = vld [vmem:[#allocation11 + $0x8a8] sm:$0xff]
    %v2870 = vld [vmem:[#allocation11 + $0x8b0] sm:$0xff]
    %v2871 = vld [vmem:[#allocation11 + $0x8b8] sm:$0xff]
    %v2872 = vld [vmem:[#allocation11 + $0x8c0] sm:$0xff]
    %v2873 = vld [vmem:[#allocation11 + $0x8c8] sm:$0xff]
    %v2874 = vld [vmem:[#allocation11 + $0x8d0] sm:$0xff]
    %v2875 = vld [vmem:[#allocation11 + $0x8d8] sm:$0xff]
    %v2876 = vld [vmem:[#allocation11 + $0x8e0] sm:$0xff]
    %v2877 = vld [vmem:[#allocation11 + $0x8e8] sm:$0xff]
    %v2878 = vld [vmem:[#allocation11 + $0x8f0] sm:$0xff]
    %v2879 = vld [vmem:[#allocation11 + $0x8f8] sm:$0xff]
    %v2880 = vld [vmem:[#allocation11 + $0x900] sm:$0xff]
    %v2881 = vld [vmem:[#allocation11 + $0x908] sm:$0xff]
    %v2882 = vld [vmem:[#allocation11 + $0x910] sm:$0xff]
    %v2883 = vld [vmem:[#allocation11 + $0x918] sm:$0xff]
    %v2884 = vld [vmem:[#allocation11 + $0x920] sm:$0xff]
    %v2885 = vld [vmem:[#allocation11 + $0x928] sm:$0xff]
    %v2886 = vld [vmem:[#allocation11 + $0x930] sm:$0xff]
    %v2887 = vld [vmem:[#allocation11 + $0x938] sm:$0xff]
    %v2888 = vld [vmem:[#allocation11 + $0x940] sm:$0xff]
    %v2889 = vld [vmem:[#allocation11 + $0x948] sm:$0xff]
    %v2890 = vld [vmem:[#allocation11 + $0x950] sm:$0xff]
    %v2891 = vld [vmem:[#allocation11 + $0x958] sm:$0xff]
    %v2892 = vld [vmem:[#allocation11 + $0x960] sm:$0xff]
    %v2893 = vld [vmem:[#allocation11 + $0x968] sm:$0xff]
    %v2894 = vld [vmem:[#allocation11 + $0x970] sm:$0xff]
    %v2895 = vld [vmem:[#allocation11 + $0x978] sm:$0xff]
    %v2896 = vld [vmem:[#allocation11 + $0x980] sm:$0xff]
    %v2897 = vld [vmem:[#allocation11 + $0x988] sm:$0xff]
    %v2898 = vld [vmem:[#allocation11 + $0x990] sm:$0xff]
    %v2899 = vld [vmem:[#allocation11 + $0x998] sm:$0xff]
    %v2900 = vld [vmem:[#allocation11 + $0x9a0] sm:$0xff]
    %v2901 = vld [vmem:[#allocation11 + $0x9a8] sm:$0xff]
    %v2902 = vld [vmem:[#allocation11 + $0x9b0] sm:$0xff]
    %v2903 = vld [vmem:[#allocation11 + $0x9b8] sm:$0xff]
    %v2904 = vld [vmem:[#allocation11 + $0x9c0] sm:$0xff]
    %v2905 = vld [vmem:[#allocation11 + $0x9c8] sm:$0xff]
    %v2906 = vld [vmem:[#allocation11 + $0x9d0] sm:$0xff]
    %v2907 = vld [vmem:[#allocation11 + $0x9d8] sm:$0xff]
    %v2908 = vld [vmem:[#allocation11 + $0x9e0] sm:$0xff]
    %v2909 = vld [vmem:[#allocation11 + $0x9e8] sm:$0xff]
    %v2910 = vld [vmem:[#allocation11 + $0x9f0] sm:$0xff]
    %v2911 = vld [vmem:[#allocation11 + $0x9f8] sm:$0xff]
    %v2912 = vld [vmem:[#allocation11 + $0xa00] sm:$0xff]
    %v2913 = vld [vmem:[#allocation11 + $0xa08] sm:$0xff]
    %v2914 = vld [vmem:[#allocation11 + $0xa10] sm:$0xff]
    %v2915 = vld [vmem:[#allocation11 + $0xa18] sm:$0xff]
    %v2916 = vld [vmem:[#allocation11 + $0xa20] sm:$0xff]
    %v2917 = vld [vmem:[#allocation11 + $0xa28] sm:$0xff]
    %v2918 = vld [vmem:[#allocation11 + $0xa30] sm:$0xff]
    %v2919 = vld [vmem:[#allocation11 + $0xa38] sm:$0xff]
    %v2920 = vld [vmem:[#allocation11 + $0xa40] sm:$0xff]
    %v2921 = vld [vmem:[#allocation11 + $0xa48] sm:$0xff]
    %v2922 = vld [vmem:[#allocation11 + $0xa50] sm:$0xff]
    %v2923 = vld [vmem:[#allocation11 + $0xa58] sm:$0xff]
    %v2924 = vld [vmem:[#allocation11 + $0xa60] sm:$0xff]
    %v2925 = vld [vmem:[#allocation11 + $0xa68] sm:$0xff]
    %v2926 = vld [vmem:[#allocation11 + $0xa70] sm:$0xff]
    %v2927 = vld [vmem:[#allocation11 + $0xa78] sm:$0xff]
    %v2928 = vld [vmem:[#allocation11 + $0xa80] sm:$0xff]
    %v2929 = vld [vmem:[#allocation11 + $0xa88] sm:$0xff]
    %v2930 = vld [vmem:[#allocation11 + $0xa90] sm:$0xff]
    %v2931 = vld [vmem:[#allocation11 + $0xa98] sm:$0xff]
    %v2932 = vld [vmem:[#allocation11 + $0xaa0] sm:$0xff]
    %v2933 = vld [vmem:[#allocation11 + $0xaa8] sm:$0xff]
    %v2934 = vld [vmem:[#allocation11 + $0xab0] sm:$0xff]
    %v2935 = vld [vmem:[#allocation11 + $0xab8] sm:$0xff]
    %v2936 = vld [vmem:[#allocation11 + $0xac0] sm:$0xff]
    %v2937 = vld [vmem:[#allocation11 + $0xac8] sm:$0xff]
    %v2938 = vld [vmem:[#allocation11 + $0xad0] sm:$0xff]
    %v2939 = vld [vmem:[#allocation11 + $0xad8] sm:$0xff]
    %v2940 = vld [vmem:[#allocation11 + $0xae0] sm:$0xff]
    %v2941 = vld [vmem:[#allocation11 + $0xae8] sm:$0xff]
    %v2942 = vld [vmem:[#allocation11 + $0xaf0] sm:$0xff]
    %v2943 = vld [vmem:[#allocation11 + $0xaf8] sm:$0xff]
    %v2944 = vld [vmem:[#allocation11 + $0xb00] sm:$0xff]
    %v2945 = vld [vmem:[#allocation11 + $0xb08] sm:$0xff]
    %v2946 = vld [vmem:[#allocation11 + $0xb10] sm:$0xff]
    %v2947 = vld [vmem:[#allocation11 + $0xb18] sm:$0xff]
    %v2948 = vld [vmem:[#allocation11 + $0xb20] sm:$0xff]
    %v2949 = vld [vmem:[#allocation11 + $0xb28] sm:$0xff]
    %v2950 = vld [vmem:[#allocation11 + $0xb30] sm:$0xff]
    %v2951 = vld [vmem:[#allocation11 + $0xb38] sm:$0xff]
    %v2952 = vld [vmem:[#allocation11 + $0xb40] sm:$0xff]
    %v2953 = vld [vmem:[#allocation11 + $0xb48] sm:$0xff]
    %v2954 = vld [vmem:[#allocation11 + $0xb50] sm:$0xff]
    %v2955 = vld [vmem:[#allocation11 + $0xb58] sm:$0xff]
    %v2956 = vld [vmem:[#allocation11 + $0xb60] sm:$0xff]
    %v2957 = vld [vmem:[#allocation11 + $0xb68] sm:$0xff]
    %v2958 = vld [vmem:[#allocation11 + $0xb70] sm:$0xff]
    %v2959 = vld [vmem:[#allocation11 + $0xb78] sm:$0xff]
    %v2960 = vld [vmem:[#allocation11 + $0xb80] sm:$0xff]
    %v2961 = vld [vmem:[#allocation11 + $0xb88] sm:$0xff]
    %v2962 = vld [vmem:[#allocation11 + $0xb90] sm:$0xff]
    %v2963 = vld [vmem:[#allocation11 + $0xb98] sm:$0xff]
    %v2964 = vld [vmem:[#allocation11 + $0xba0] sm:$0xff]
    %v2965 = vld [vmem:[#allocation11 + $0xba8] sm:$0xff]
    %v2966 = vld [vmem:[#allocation11 + $0xbb0] sm:$0xff]
    %v2967 = vld [vmem:[#allocation11 + $0xbb8] sm:$0xff]
    %v2968 = vld [vmem:[#allocation11 + $0xbc0] sm:$0xff]
    %v2969 = vld [vmem:[#allocation11 + $0xbc8] sm:$0xff]
    %v2970 = vld [vmem:[#allocation11 + $0xbd0] sm:$0xff]
    %v2971 = vld [vmem:[#allocation11 + $0xbd8] sm:$0xff]
    %v2972 = vld [vmem:[#allocation11 + $0xbe0] sm:$0xff]
    %v2973 = vld [vmem:[#allocation11 + $0xbe8] sm:$0xff]
    %v2974 = vld [vmem:[#allocation11 + $0xbf0] sm:$0xff]
    %v2975 = vld [vmem:[#allocation11 + $0xbf8] sm:$0xff]
    %v2976 = vld [vmem:[#allocation11 + $0xc00] sm:$0xff]
    %v2977 = vld [vmem:[#allocation11 + $0xc08] sm:$0xff]
    %v2978 = vld [vmem:[#allocation11 + $0xc10] sm:$0xff]
    %v2979 = vld [vmem:[#allocation11 + $0xc18] sm:$0xff]
    %v2980 = vld [vmem:[#allocation11 + $0xc20] sm:$0xff]
    %v2981 = vld [vmem:[#allocation11 + $0xc28] sm:$0xff]
    %v2982 = vld [vmem:[#allocation11 + $0xc30] sm:$0xff]
    %v2983 = vld [vmem:[#allocation11 + $0xc38] sm:$0xff]
    %v2984 = vld [vmem:[#allocation11 + $0xc40] sm:$0xff]
    %v2985 = vld [vmem:[#allocation11 + $0xc48] sm:$0xff]
    %v2986 = vld [vmem:[#allocation11 + $0xc50] sm:$0xff]
    %v2987 = vld [vmem:[#allocation11 + $0xc58] sm:$0xff]
    %v2988 = vld [vmem:[#allocation11 + $0xc60] sm:$0xff]
    %v2989 = vld [vmem:[#allocation11 + $0xc68] sm:$0xff]
    %v2990 = vld [vmem:[#allocation11 + $0xc70] sm:$0xff]
    %v2991 = vld [vmem:[#allocation11 + $0xc78] sm:$0xff]
    %v2992 = vld [vmem:[#allocation11 + $0xc80] sm:$0xff]
    %v2993 = vld [vmem:[#allocation11 + $0xc88] sm:$0xff]
    %v2994 = vld [vmem:[#allocation11 + $0xc90] sm:$0xff]
    %v2995 = vld [vmem:[#allocation11 + $0xc98] sm:$0xff]
    %v2996 = vld [vmem:[#allocation11 + $0xca0] sm:$0xff]
    %v2997 = vld [vmem:[#allocation11 + $0xca8] sm:$0xff]
    %v2998 = vld [vmem:[#allocation11 + $0xcb0] sm:$0xff]
    %v2999 = vld [vmem:[#allocation11 + $0xcb8] sm:$0xff]
    %v3000 = vld [vmem:[#allocation11 + $0xcc0] sm:$0xff]
    %v3001 = vld [vmem:[#allocation11 + $0xcc8] sm:$0xff]
    %v3002 = vld [vmem:[#allocation11 + $0xcd0] sm:$0xff]
    %v3003 = vld [vmem:[#allocation11 + $0xcd8] sm:$0xff]
    %v3004 = vld [vmem:[#allocation11 + $0xce0] sm:$0xff]
    %v3005 = vld [vmem:[#allocation11 + $0xce8] sm:$0xff]
    %v3006 = vld [vmem:[#allocation11 + $0xcf0] sm:$0xff]
    %v3007 = vld [vmem:[#allocation11 + $0xcf8] sm:$0xff]
    %v3008 = vld [vmem:[#allocation11 + $0xd00] sm:$0xff]
    %v3009 = vld [vmem:[#allocation11 + $0xd08] sm:$0xff]
    %v3010 = vld [vmem:[#allocation11 + $0xd10] sm:$0xff]
    %v3011 = vld [vmem:[#allocation11 + $0xd18] sm:$0xff]
    %v3012 = vld [vmem:[#allocation11 + $0xd20] sm:$0xff]
    %v3013 = vld [vmem:[#allocation11 + $0xd28] sm:$0xff]
    %v3014 = vld [vmem:[#allocation11 + $0xd30] sm:$0xff]
    %v3015 = vld [vmem:[#allocation11 + $0xd38] sm:$0xff]
    %v3016 = vld [vmem:[#allocation11 + $0xd40] sm:$0xff]
    %v3017 = vld [vmem:[#allocation11 + $0xd48] sm:$0xff]
    %v3018 = vld [vmem:[#allocation11 + $0xd50] sm:$0xff]
    %v3019 = vld [vmem:[#allocation11 + $0xd58] sm:$0xff]
    %v3020 = vld [vmem:[#allocation11 + $0xd60] sm:$0xff]
    %v3021 = vld [vmem:[#allocation11 + $0xd68] sm:$0xff]
    %v3022 = vld [vmem:[#allocation11 + $0xd70] sm:$0xff]
    %v3023 = vld [vmem:[#allocation11 + $0xd78] sm:$0xff]
    %v3024 = vld [vmem:[#allocation11 + $0xd80] sm:$0xff]
    %v3025 = vld [vmem:[#allocation11 + $0xd88] sm:$0xff]
    %v3026 = vld [vmem:[#allocation11 + $0xd90] sm:$0xff]
    %v3027 = vld [vmem:[#allocation11 + $0xd98] sm:$0xff]
    %v3028 = vld [vmem:[#allocation11 + $0xda0] sm:$0xff]
    %v3029 = vld [vmem:[#allocation11 + $0xda8] sm:$0xff]
    %v3030 = vld [vmem:[#allocation11 + $0xdb0] sm:$0xff]
    %v3031 = vld [vmem:[#allocation11 + $0xdb8] sm:$0xff]
    %v3032 = vld [vmem:[#allocation11 + $0xdc0] sm:$0xff]
    %v3033 = vld [vmem:[#allocation11 + $0xdc8] sm:$0xff]
    %v3034 = vld [vmem:[#allocation11 + $0xdd0] sm:$0xff]
    %v3035 = vld [vmem:[#allocation11 + $0xdd8] sm:$0xff]
    %v3036 = vld [vmem:[#allocation11 + $0xde0] sm:$0xff]
    %v3037 = vld [vmem:[#allocation11 + $0xde8] sm:$0xff]
    %v3038 = vld [vmem:[#allocation11 + $0xdf0] sm:$0xff]
    %v3039 = vld [vmem:[#allocation11 + $0xdf8] sm:$0xff]
    %v3040 = vld [vmem:[#allocation11 + $0xe00] sm:$0xff]
    %v3041 = vld [vmem:[#allocation11 + $0xe08] sm:$0xff]
    %v3042 = vld [vmem:[#allocation11 + $0xe10] sm:$0xff]
    %v3043 = vld [vmem:[#allocation11 + $0xe18] sm:$0xff]
    %v3044 = vld [vmem:[#allocation11 + $0xe20] sm:$0xff]
    %v3045 = vld [vmem:[#allocation11 + $0xe28] sm:$0xff]
    %v3046 = vld [vmem:[#allocation11 + $0xe30] sm:$0xff]
    %v3047 = vld [vmem:[#allocation11 + $0xe38] sm:$0xff]
    %v3048 = vld [vmem:[#allocation11 + $0xe40] sm:$0xff]
    %v3049 = vld [vmem:[#allocation11 + $0xe48] sm:$0xff]
    %v3050 = vld [vmem:[#allocation11 + $0xe50] sm:$0xff]
    %v3051 = vld [vmem:[#allocation11 + $0xe58] sm:$0xff]
    %v3052 = vld [vmem:[#allocation11 + $0xe60] sm:$0xff]
    %v3053 = vld [vmem:[#allocation11 + $0xe68] sm:$0xff]
    %v3054 = vld [vmem:[#allocation11 + $0xe70] sm:$0xff]
    %v3055 = vld [vmem:[#allocation11 + $0xe78] sm:$0xff]
    %v3056 = vld [vmem:[#allocation11 + $0xe80] sm:$0xff]
    %v3057 = vld [vmem:[#allocation11 + $0xe88] sm:$0xff]
    %v3058 = vld [vmem:[#allocation11 + $0xe90] sm:$0xff]
    %v3059 = vld [vmem:[#allocation11 + $0xe98] sm:$0xff]
    %v3060 = vld [vmem:[#allocation11 + $0xea0] sm:$0xff]
    %v3061 = vld [vmem:[#allocation11 + $0xea8] sm:$0xff]
    %v3062 = vld [vmem:[#allocation11 + $0xeb0] sm:$0xff]
    %v3063 = vld [vmem:[#allocation11 + $0xeb8] sm:$0xff]
    %v3064 = vld [vmem:[#allocation11 + $0xec0] sm:$0xff]
    %v3065 = vld [vmem:[#allocation11 + $0xec8] sm:$0xff]
    %v3066 = vld [vmem:[#allocation11 + $0xed0] sm:$0xff]
    %v3067 = vld [vmem:[#allocation11 + $0xed8] sm:$0xff]
    %v3068 = vld [vmem:[#allocation11 + $0xee0] sm:$0xff]
    %v3069 = vld [vmem:[#allocation11 + $0xee8] sm:$0xff]
    %v3070 = vld [vmem:[#allocation11 + $0xef0] sm:$0xff]
    %v3071 = vld [vmem:[#allocation11 + $0xef8] sm:$0xff]
    %v3072 = vld [vmem:[#allocation11 + $0xf00] sm:$0xff]
    %v3073 = vld [vmem:[#allocation11 + $0xf08] sm:$0xff]
    %v3074 = vld [vmem:[#allocation11 + $0xf10] sm:$0xff]
    %v3075 = vld [vmem:[#allocation11 + $0xf18] sm:$0xff]
    %v3076 = vld [vmem:[#allocation11 + $0xf20] sm:$0xff]
    %v3077 = vld [vmem:[#allocation11 + $0xf28] sm:$0xff]
    %v3078 = vld [vmem:[#allocation11 + $0xf30] sm:$0xff]
    %v3079 = vld [vmem:[#allocation11 + $0xf38] sm:$0xff]
    %v3080 = vld [vmem:[#allocation11 + $0xf40] sm:$0xff]
    %v3081 = vld [vmem:[#allocation11 + $0xf48] sm:$0xff]
    %v3082 = vld [vmem:[#allocation11 + $0xf50] sm:$0xff]
    %v3083 = vld [vmem:[#allocation11 + $0xf58] sm:$0xff]
    %v3084 = vld [vmem:[#allocation11 + $0xf60] sm:$0xff]
    %v3085 = vld [vmem:[#allocation11 + $0xf68] sm:$0xff]
    %v3086 = vld [vmem:[#allocation11 + $0xf70] sm:$0xff]
    %v3087 = vld [vmem:[#allocation11 + $0xf78] sm:$0xff]
    %v3088 = vld [vmem:[#allocation11 + $0xf80] sm:$0xff]
    %v3089 = vld [vmem:[#allocation11 + $0xf88] sm:$0xff]
    %v3090 = vld [vmem:[#allocation11 + $0xf90] sm:$0xff]
    %v3091 = vld [vmem:[#allocation11 + $0xf98] sm:$0xff]
    %v3092 = vld [vmem:[#allocation11 + $0xfa0] sm:$0xff]
    %v3093 = vld [vmem:[#allocation11 + $0xfa8] sm:$0xff]
    %v3094 = vld [vmem:[#allocation11 + $0xfb0] sm:$0xff]
    %v3095 = vld [vmem:[#allocation11 + $0xfb8] sm:$0xff]
    %v3096 = vld [vmem:[#allocation11 + $0xfc0] sm:$0xff]
    %v3097 = vld [vmem:[#allocation11 + $0xfc8] sm:$0xff]
    %v3098 = vld [vmem:[#allocation11 + $0xfd0] sm:$0xff]
    %v3099 = vld [vmem:[#allocation11 + $0xfd8] sm:$0xff]
    %v3100 = vld [vmem:[#allocation11 + $0xfe0] sm:$0xff]
    %v3101 = vld [vmem:[#allocation11 + $0xfe8] sm:$0xff]
    %v3102 = vld [vmem:[#allocation11 + $0xff0] sm:$0xff]
    %v3103 = vld [vmem:[#allocation11 + $0xff8] sm:$0xff]
    %v3104 = vld [vmem:[#allocation13] sm:$0xf]
    %v3106 = vlaneseq
    %v3107 = vshrl.u32 %v3106, 7
    %v3108 = vsub.s32 0, %v3107
    %v3109 = vrot.slane %v3104, %v3108
    %v3110 = vlaneseq
    %v3111 = vshrl.u32 %v3110, 7
    %v3112 = vsub.s32 1, %v3111
    %v3113 = vrot.slane %v3104, %v3112
    %v3114 = vlaneseq
    %v3115 = vshrl.u32 %v3114, 7
    %v3116 = vsub.s32 2, %v3115
    %v3117 = vrot.slane %v3104, %v3116
    %v3118 = vlaneseq
    %v3119 = vshrl.u32 %v3118, 7
    %v3120 = vsub.s32 3, %v3119
    %v3121 = vrot.slane %v3104, %v3120
    %3126 = vmatprep.subr.mxu0 %v2653
    %3127 = vmatpush1.msra.mxu0 %v2652
    %3128 = vmatprep.subr.mxu0 %v2649
    %3129 = vmatpush1.msra.mxu0 %v2648
    %3130 = vmatprep.subr.mxu0 %v2645
    %3131 = vmatpush1.msra.mxu0 %v2644
    %3132 = vmatprep.subr.mxu0 %v2641
    %3133 = vmatpush1.msra.mxu0 %v2640
    %3134 = vmatprep.subr.mxu0 %v2637
    %3135 = vmatpush1.msra.mxu0 %v2636
    %3136 = vmatprep.subr.mxu0 %v2633
    %3137 = vmatpush1.msra.mxu0 %v2632
    %3138 = vmatprep.subr.mxu0 %v2629
    %3139 = vmatpush1.msra.mxu0 %v2628
    %3140 = vmatprep.subr.mxu0 %v2625
    %3141 = vmatpush1.msra.mxu0 %v2624
    %3142 = vmatprep.subr.mxu0 %v2621
    %3143 = vmatpush1.msra.mxu0 %v2620
    %3144 = vmatprep.subr.mxu0 %v2617
    %3145 = vmatpush1.msra.mxu0 %v2616
    %3146 = vmatprep.subr.mxu0 %v2613
    %3147 = vmatpush1.msra.mxu0 %v2612
    %3148 = vmatprep.subr.mxu0 %v2609
    %3149 = vmatpush1.msra.mxu0 %v2608
    %3150 = vmatprep.subr.mxu0 %v2605
    %3151 = vmatpush1.msra.mxu0 %v2604
    %3152 = vmatprep.subr.mxu0 %v2601
    %3153 = vmatpush1.msra.mxu0 %v2600
    %3154 = vmatprep.subr.mxu0 %v2597
    %3155 = vmatpush1.msra.mxu0 %v2596
    %3156 = vmatprep.subr.mxu0 %v2593
    %3157 = vmatpush1.msra.mxu0 %v2592
    %3158 = vmatprep.subr.mxu0 %v2717
    %3159 = vmatpush2.msra.mxu0 %v2716
    %3160 = vmatprep.subr.mxu0 %v2713
    %3161 = vmatpush2.msra.mxu0 %v2712
    %3162 = vmatprep.subr.mxu0 %v2709
    %3163 = vmatpush2.msra.mxu0 %v2708
    %3164 = vmatprep.subr.mxu0 %v2705
    %3165 = vmatpush2.msra.mxu0 %v2704
    %3166 = vmatprep.subr.mxu0 %v2701
    %3167 = vmatpush2.msra.mxu0 %v2700
    %3168 = vmatprep.subr.mxu0 %v2697
    %3169 = vmatpush2.msra.mxu0 %v2696
    %3170 = vmatprep.subr.mxu0 %v2693
    %3171 = vmatpush2.msra.mxu0 %v2692
    %3172 = vmatprep.subr.mxu0 %v2689
    %3173 = vmatpush2.msra.mxu0 %v2688
    %3174 = vmatprep.subr.mxu0 %v2685
    %3175 = vmatpush2.msra.mxu0 %v2684
    %3176 = vmatprep.subr.mxu0 %v2681
    %3177 = vmatpush2.msra.mxu0 %v2680
    %3178 = vmatprep.subr.mxu0 %v2677
    %3179 = vmatpush2.msra.mxu0 %v2676
    %3180 = vmatprep.subr.mxu0 %v2673
    %3181 = vmatpush2.msra.mxu0 %v2672
    %3182 = vmatprep.subr.mxu0 %v2669
    %3183 = vmatpush2.msra.mxu0 %v2668
    %3184 = vmatprep.subr.mxu0 %v2665
    %3185 = vmatpush2.msra.mxu0 %v2664
    %3186 = vmatprep.subr.mxu0 %v2661
    %3187 = vmatpush2.msra.mxu0 %v2660
    %3188 = vmatprep.subr.mxu0 %v2657
    %3189 = vmatpush2.msra.mxu0 %v2656
    %3190 = vmatprep.mubr.f32.mxu0 %v2577
    %3191 = vmatmul.mubr.f32.gmra.mxu0 %v2576
    %v3192 = vpop.f32.mrf.mxu0
    %v3193 = vadd.f32 %v3109, %v3192
    %v3194 = vpop.f32.mrf.mxu0
    %v3195 = vadd.f32 %v3113, %v3194
    %3196 = vmatprep.mubr.f32.mxu0 %v2585
    %3197 = vmatmul.mubr.f32.gmra.mxu0 %v2584
    %v3198 = vpop.f32.mrf.mxu0
    %v3199 = vadd.f32 %v3109, %v3198
    %v3200 = vpop.f32.mrf.mxu0
    %v3201 = vadd.f32 %v3113, %v3200
    %3202 = vdwg.mxu0
    %3203 = vmatprep.subr.mxu0 %v2781
    %3204 = vmatpush1.msra.mxu0 %v2780
    %3205 = vmatprep.subr.mxu0 %v2777
    %3206 = vmatpush1.msra.mxu0 %v2776
    %3207 = vmatprep.subr.mxu0 %v2773
    %3208 = vmatpush1.msra.mxu0 %v2772
    %3209 = vmatprep.subr.mxu0 %v2769
    %3210 = vmatpush1.msra.mxu0 %v2768
    %3211 = vmatprep.subr.mxu0 %v2765
    %3212 = vmatpush1.msra.mxu0 %v2764
    %3213 = vmatprep.subr.mxu0 %v2761
    %3214 = vmatpush1.msra.mxu0 %v2760
    %3215 = vmatprep.subr.mxu0 %v2757
    %3216 = vmatpush1.msra.mxu0 %v2756
    %3217 = vmatprep.subr.mxu0 %v2753
    %3218 = vmatpush1.msra.mxu0 %v2752
    %3219 = vmatprep.subr.mxu0 %v2749
    %3220 = vmatpush1.msra.mxu0 %v2748
    %3221 = vmatprep.subr.mxu0 %v2745
    %3222 = vmatpush1.msra.mxu0 %v2744
    %3223 = vmatprep.subr.mxu0 %v2741
    %3224 = vmatpush1.msra.mxu0 %v2740
    %3225 = vmatprep.subr.mxu0 %v2737
    %3226 = vmatpush1.msra.mxu0 %v2736
    %3227 = vmatprep.subr.mxu0 %v2733
    %3228 = vmatpush1.msra.mxu0 %v2732
    %3229 = vmatprep.subr.mxu0 %v2729
    %3230 = vmatpush1.msra.mxu0 %v2728
    %3231 = vmatprep.subr.mxu0 %v2725
    %3232 = vmatpush1.msra.mxu0 %v2724
    %3233 = vmatprep.subr.mxu0 %v2721
    %3234 = vmatpush1.msra.mxu0 %v2720
    %3235 = vmatprep.subr.mxu0 %v2845
    %3236 = vmatpush2.msra.mxu0 %v2844
    %3237 = vmatprep.subr.mxu0 %v2841
    %3238 = vmatpush2.msra.mxu0 %v2840
    %3239 = vmatprep.subr.mxu0 %v2837
    %3240 = vmatpush2.msra.mxu0 %v2836
    %3241 = vmatprep.subr.mxu0 %v2833
    %3242 = vmatpush2.msra.mxu0 %v2832
    %3243 = vmatprep.subr.mxu0 %v2829
    %3244 = vmatpush2.msra.mxu0 %v2828
    %3245 = vmatprep.subr.mxu0 %v2825
    %3246 = vmatpush2.msra.mxu0 %v2824
    %3247 = vmatprep.subr.mxu0 %v2821
    %3248 = vmatpush2.msra.mxu0 %v2820
    %3249 = vmatprep.subr.mxu0 %v2817
    %3250 = vmatpush2.msra.mxu0 %v2816
    %3251 = vmatprep.subr.mxu0 %v2813
    %3252 = vmatpush2.msra.mxu0 %v2812
    %3253 = vmatprep.subr.mxu0 %v2809
    %3254 = vmatpush2.msra.mxu0 %v2808
    %3255 = vmatprep.subr.mxu0 %v2805
    %3256 = vmatpush2.msra.mxu0 %v2804
    %3257 = vmatprep.subr.mxu0 %v2801
    %3258 = vmatpush2.msra.mxu0 %v2800
    %3259 = vmatprep.subr.mxu0 %v2797
    %3260 = vmatpush2.msra.mxu0 %v2796
    %3261 = vmatprep.subr.mxu0 %v2793
    %3262 = vmatpush2.msra.mxu0 %v2792
    %3263 = vmatprep.subr.mxu0 %v2789
    %3264 = vmatpush2.msra.mxu0 %v2788
    %3265 = vmatprep.subr.mxu0 %v2785
    %3266 = vmatpush2.msra.mxu0 %v2784
    %3267 = vmatprep.mubr.f32.mxu0 %v2579
    %3268 = vmatmul.mubr.f32.gmra.mxu0 %v2578
    %v3269 = vpop.f32.mrf.mxu0
    %v3270 = vadd.f32 %v3193, %v3269
    %v3271 = vpop.f32.mrf.mxu0
    %v3272 = vadd.f32 %v3195, %v3271
    %3273 = vmatprep.mubr.f32.mxu0 %v2587
    %3274 = vmatmul.mubr.f32.gmra.mxu0 %v2586
    %v3275 = vpop.f32.mrf.mxu0
    %v3276 = vadd.f32 %v3199, %v3275
    %v3277 = vpop.f32.mrf.mxu0
    %v3278 = vadd.f32 %v3201, %v3277
    %3279 = vdwg.mxu0
    %3280 = vmatprep.subr.mxu0 %v2909
    %3281 = vmatpush1.msra.mxu0 %v2908
    %3282 = vmatprep.subr.mxu0 %v2905
    %3283 = vmatpush1.msra.mxu0 %v2904
    %3284 = vmatprep.subr.mxu0 %v2901
    %3285 = vmatpush1.msra.mxu0 %v2900
    %3286 = vmatprep.subr.mxu0 %v2897
    %3287 = vmatpush1.msra.mxu0 %v2896
    %3288 = vmatprep.subr.mxu0 %v2893
    %3289 = vmatpush1.msra.mxu0 %v2892
    %3290 = vmatprep.subr.mxu0 %v2889
    %3291 = vmatpush1.msra.mxu0 %v2888
    %3292 = vmatprep.subr.mxu0 %v2885
    %3293 = vmatpush1.msra.mxu0 %v2884
    %3294 = vmatprep.subr.mxu0 %v2881
    %3295 = vmatpush1.msra.mxu0 %v2880
    %3296 = vmatprep.subr.mxu0 %v2877
    %3297 = vmatpush1.msra.mxu0 %v2876
    %3298 = vmatprep.subr.mxu0 %v2873
    %3299 = vmatpush1.msra.mxu0 %v2872
    %3300 = vmatprep.subr.mxu0 %v2869
    %3301 = vmatpush1.msra.mxu0 %v2868
    %3302 = vmatprep.subr.mxu0 %v2865
    %3303 = vmatpush1.msra.mxu0 %v2864
    %3304 = vmatprep.subr.mxu0 %v2861
    %3305 = vmatpush1.msra.mxu0 %v2860
    %3306 = vmatprep.subr.mxu0 %v2857
    %3307 = vmatpush1.msra.mxu0 %v2856
    %3308 = vmatprep.subr.mxu0 %v2853
    %3309 = vmatpush1.msra.mxu0 %v2852
    %3310 = vmatprep.subr.mxu0 %v2849
    %3311 = vmatpush1.msra.mxu0 %v2848
    %3312 = vmatprep.subr.mxu0 %v2973
    %3313 = vmatpush2.msra.mxu0 %v2972
    %3314 = vmatprep.subr.mxu0 %v2969
    %3315 = vmatpush2.msra.mxu0 %v2968
    %3316 = vmatprep.subr.mxu0 %v2965
    %3317 = vmatpush2.msra.mxu0 %v2964
    %3318 = vmatprep.subr.mxu0 %v2961
    %3319 = vmatpush2.msra.mxu0 %v2960
    %3320 = vmatprep.subr.mxu0 %v2957
    %3321 = vmatpush2.msra.mxu0 %v2956
    %3322 = vmatprep.subr.mxu0 %v2953
    %3323 = vmatpush2.msra.mxu0 %v2952
    %3324 = vmatprep.subr.mxu0 %v2949
    %3325 = vmatpush2.msra.mxu0 %v2948
    %3326 = vmatprep.subr.mxu0 %v2945
    %3327 = vmatpush2.msra.mxu0 %v2944
    %3328 = vmatprep.subr.mxu0 %v2941
    %3329 = vmatpush2.msra.mxu0 %v2940
    %3330 = vmatprep.subr.mxu0 %v2937
    %3331 = vmatpush2.msra.mxu0 %v2936
    %3332 = vmatprep.subr.mxu0 %v2933
    %3333 = vmatpush2.msra.mxu0 %v2932
    %3334 = vmatprep.subr.mxu0 %v2929
    %3335 = vmatpush2.msra.mxu0 %v2928
    %3336 = vmatprep.subr.mxu0 %v2925
    %3337 = vmatpush2.msra.mxu0 %v2924
    %3338 = vmatprep.subr.mxu0 %v2921
    %3339 = vmatpush2.msra.mxu0 %v2920
    %3340 = vmatprep.subr.mxu0 %v2917
    %3341 = vmatpush2.msra.mxu0 %v2916
    %3342 = vmatprep.subr.mxu0 %v2913
    %3343 = vmatpush2.msra.mxu0 %v2912
    %3344 = vmatprep.mubr.f32.mxu0 %v2581
    %3345 = vmatmul.mubr.f32.gmra.mxu0 %v2580
    %v3346 = vpop.f32.mrf.mxu0
    %v3347 = vadd.f32 %v3270, %v3346
    %v3348 = vpop.f32.mrf.mxu0
    %v3349 = vadd.f32 %v3272, %v3348
    %3350 = vmatprep.mubr.f32.mxu0 %v2589
    %3351 = vmatmul.mubr.f32.gmra.mxu0 %v2588
    %v3352 = vpop.f32.mrf.mxu0
    %v3353 = vadd.f32 %v3276, %v3352
    %v3354 = vpop.f32.mrf.mxu0
    %v3355 = vadd.f32 %v3278, %v3354
    %3356 = vdwg.mxu0
    %3357 = vmatprep.subr.mxu0 %v3037
    %3358 = vmatpush1.msra.mxu0 %v3036
    %3359 = vmatprep.subr.mxu0 %v3033
    %3360 = vmatpush1.msra.mxu0 %v3032
    %3361 = vmatprep.subr.mxu0 %v3029
    %3362 = vmatpush1.msra.mxu0 %v3028
    %3363 = vmatprep.subr.mxu0 %v3025
    %3364 = vmatpush1.msra.mxu0 %v3024
    %3365 = vmatprep.subr.mxu0 %v3021
    %3366 = vmatpush1.msra.mxu0 %v3020
    %3367 = vmatprep.subr.mxu0 %v3017
    %3368 = vmatpush1.msra.mxu0 %v3016
    %3369 = vmatprep.subr.mxu0 %v3013
    %3370 = vmatpush1.msra.mxu0 %v3012
    %3371 = vmatprep.subr.mxu0 %v3009
    %3372 = vmatpush1.msra.mxu0 %v3008
    %3373 = vmatprep.subr.mxu0 %v3005
    %3374 = vmatpush1.msra.mxu0 %v3004
    %3375 = vmatprep.subr.mxu0 %v3001
    %3376 = vmatpush1.msra.mxu0 %v3000
    %3377 = vmatprep.subr.mxu0 %v2997
    %3378 = vmatpush1.msra.mxu0 %v2996
    %3379 = vmatprep.subr.mxu0 %v2993
    %3380 = vmatpush1.msra.mxu0 %v2992
    %3381 = vmatprep.subr.mxu0 %v2989
    %3382 = vmatpush1.msra.mxu0 %v2988
    %3383 = vmatprep.subr.mxu0 %v2985
    %3384 = vmatpush1.msra.mxu0 %v2984
    %3385 = vmatprep.subr.mxu0 %v2981
    %3386 = vmatpush1.msra.mxu0 %v2980
    %3387 = vmatprep.subr.mxu0 %v2977
    %3388 = vmatpush1.msra.mxu0 %v2976
    %3389 = vmatprep.subr.mxu0 %v3101
    %3390 = vmatpush2.msra.mxu0 %v3100
    %3391 = vmatprep.subr.mxu0 %v3097
    %3392 = vmatpush2.msra.mxu0 %v3096
    %3393 = vmatprep.subr.mxu0 %v3093
    %3394 = vmatpush2.msra.mxu0 %v3092
    %3395 = vmatprep.subr.mxu0 %v3089
    %3396 = vmatpush2.msra.mxu0 %v3088
    %3397 = vmatprep.subr.mxu0 %v3085
    %3398 = vmatpush2.msra.mxu0 %v3084
    %3399 = vmatprep.subr.mxu0 %v3081
    %3400 = vmatpush2.msra.mxu0 %v3080
    %3401 = vmatprep.subr.mxu0 %v3077
    %3402 = vmatpush2.msra.mxu0 %v3076
    %3403 = vmatprep.subr.mxu0 %v3073
    %3404 = vmatpush2.msra.mxu0 %v3072
    %3405 = vmatprep.subr.mxu0 %v3069
    %3406 = vmatpush2.msra.mxu0 %v3068
    %3407 = vmatprep.subr.mxu0 %v3065
    %3408 = vmatpush2.msra.mxu0 %v3064
    %3409 = vmatprep.subr.mxu0 %v3061
    %3410 = vmatpush2.msra.mxu0 %v3060
    %3411 = vmatprep.subr.mxu0 %v3057
    %3412 = vmatpush2.msra.mxu0 %v3056
    %3413 = vmatprep.subr.mxu0 %v3053
    %3414 = vmatpush2.msra.mxu0 %v3052
    %3415 = vmatprep.subr.mxu0 %v3049
    %3416 = vmatpush2.msra.mxu0 %v3048
    %3417 = vmatprep.subr.mxu0 %v3045
    %3418 = vmatpush2.msra.mxu0 %v3044
    %3419 = vmatprep.subr.mxu0 %v3041
    %3420 = vmatpush2.msra.mxu0 %v3040
    %3421 = vmatprep.mubr.f32.mxu0 %v2583
    %3422 = vmatmul.mubr.f32.gmra.mxu0 %v2582
    %v3423 = vpop.f32.mrf.mxu0
    %v3424 = vadd.f32 %v3347, %v3423
    %v3425 = vpop.f32.mrf.mxu0
    %v3426 = vadd.f32 %v3349, %v3425
    %3427 = vmatprep.mubr.f32.mxu0 %v2591
    %3428 = vmatmul.mubr.f32.gmra.mxu0 %v2590
    %v3429 = vpop.f32.mrf.mxu0
    %v3430 = vadd.f32 %v3353, %v3429
    %v3431 = vpop.f32.mrf.mxu0
    %v3432 = vadd.f32 %v3355, %v3431
    %3433 = vdwg.mxu0
    %3434 = vmatprep.subr.mxu0 %v2655
    %3435 = vmatpush1.msra.mxu0 %v2654
    %3436 = vmatprep.subr.mxu0 %v2651
    %3437 = vmatpush1.msra.mxu0 %v2650
    %3438 = vmatprep.subr.mxu0 %v2647
    %3439 = vmatpush1.msra.mxu0 %v2646
    %3440 = vmatprep.subr.mxu0 %v2643
    %3441 = vmatpush1.msra.mxu0 %v2642
    %3442 = vmatprep.subr.mxu0 %v2639
    %3443 = vmatpush1.msra.mxu0 %v2638
    %3444 = vmatprep.subr.mxu0 %v2635
    %3445 = vmatpush1.msra.mxu0 %v2634
    %3446 = vmatprep.subr.mxu0 %v2631
    %3447 = vmatpush1.msra.mxu0 %v2630
    %3448 = vmatprep.subr.mxu0 %v2627
    %3449 = vmatpush1.msra.mxu0 %v2626
    %3450 = vmatprep.subr.mxu0 %v2623
    %3451 = vmatpush1.msra.mxu0 %v2622
    %3452 = vmatprep.subr.mxu0 %v2619
    %3453 = vmatpush1.msra.mxu0 %v2618
    %3454 = vmatprep.subr.mxu0 %v2615
    %3455 = vmatpush1.msra.mxu0 %v2614
    %3456 = vmatprep.subr.mxu0 %v2611
    %3457 = vmatpush1.msra.mxu0 %v2610
    %3458 = vmatprep.subr.mxu0 %v2607
    %3459 = vmatpush1.msra.mxu0 %v2606
    %3460 = vmatprep.subr.mxu0 %v2603
    %3461 = vmatpush1.msra.mxu0 %v2602
    %3462 = vmatprep.subr.mxu0 %v2599
    %3463 = vmatpush1.msra.mxu0 %v2598
    %3464 = vmatprep.subr.mxu0 %v2595
    %3465 = vmatpush1.msra.mxu0 %v2594
    %3466 = vmatprep.subr.mxu0 %v2719
    %3467 = vmatpush2.msra.mxu0 %v2718
    %3468 = vmatprep.subr.mxu0 %v2715
    %3469 = vmatpush2.msra.mxu0 %v2714
    %3470 = vmatprep.subr.mxu0 %v2711
    %3471 = vmatpush2.msra.mxu0 %v2710
    %3472 = vmatprep.subr.mxu0 %v2707
    %3473 = vmatpush2.msra.mxu0 %v2706
    %3474 = vmatprep.subr.mxu0 %v2703
    %3475 = vmatpush2.msra.mxu0 %v2702
    %3476 = vmatprep.subr.mxu0 %v2699
    %3477 = vmatpush2.msra.mxu0 %v2698
    %3478 = vmatprep.subr.mxu0 %v2695
    %3479 = vmatpush2.msra.mxu0 %v2694
    %3480 = vmatprep.subr.mxu0 %v2691
    %3481 = vmatpush2.msra.mxu0 %v2690
    %3482 = vmatprep.subr.mxu0 %v2687
    %3483 = vmatpush2.msra.mxu0 %v2686
    %3484 = vmatprep.subr.mxu0 %v2683
    %3485 = vmatpush2.msra.mxu0 %v2682
    %3486 = vmatprep.subr.mxu0 %v2679
    %3487 = vmatpush2.msra.mxu0 %v2678
    %3488 = vmatprep.subr.mxu0 %v2675
    %3489 = vmatpush2.msra.mxu0 %v2674
    %3490 = vmatprep.subr.mxu0 %v2671
    %3491 = vmatpush2.msra.mxu0 %v2670
    %3492 = vmatprep.subr.mxu0 %v2667
    %3493 = vmatpush2.msra.mxu0 %v2666
    %3494 = vmatprep.subr.mxu0 %v2663
    %3495 = vmatpush2.msra.mxu0 %v2662
    %3496 = vmatprep.subr.mxu0 %v2659
    %3497 = vmatpush2.msra.mxu0 %v2658
    %3498 = vmatprep.mubr.f32.mxu0 %v2577
    %3499 = vmatmul.mubr.f32.gmra.mxu0 %v2576
    %v3500 = vpop.f32.mrf.mxu0
    %v3501 = vadd.f32 %v3117, %v3500
    %v3502 = vpop.f32.mrf.mxu0
    %v3503 = vadd.f32 %v3121, %v3502
    %3504 = vmatprep.mubr.f32.mxu0 %v2585
    %3505 = vmatmul.mubr.f32.gmra.mxu0 %v2584
    %v3506 = vpop.f32.mrf.mxu0
    %v3507 = vadd.f32 %v3117, %v3506
    %v3508 = vpop.f32.mrf.mxu0
    %v3509 = vadd.f32 %v3121, %v3508
    %3510 = vdwg.mxu0
    %3511 = vmatprep.subr.mxu0 %v2783
    %3512 = vmatpush1.msra.mxu0 %v2782
    %3513 = vmatprep.subr.mxu0 %v2779
    %3514 = vmatpush1.msra.mxu0 %v2778
    %3515 = vmatprep.subr.mxu0 %v2775
    %3516 = vmatpush1.msra.mxu0 %v2774
    %3517 = vmatprep.subr.mxu0 %v2771
    %3518 = vmatpush1.msra.mxu0 %v2770
    %3519 = vmatprep.subr.mxu0 %v2767
    %3520 = vmatpush1.msra.mxu0 %v2766
    %3521 = vmatprep.subr.mxu0 %v2763
    %3522 = vmatpush1.msra.mxu0 %v2762
    %3523 = vmatprep.subr.mxu0 %v2759
    %3524 = vmatpush1.msra.mxu0 %v2758
    %3525 = vmatprep.subr.mxu0 %v2755
    %3526 = vmatpush1.msra.mxu0 %v2754
    %3527 = vmatprep.subr.mxu0 %v2751
    %3528 = vmatpush1.msra.mxu0 %v2750
    %3529 = vmatprep.subr.mxu0 %v2747
    %3530 = vmatpush1.msra.mxu0 %v2746
    %3531 = vmatprep.subr.mxu0 %v2743
    %3532 = vmatpush1.msra.mxu0 %v2742
    %3533 = vmatprep.subr.mxu0 %v2739
    %3534 = vmatpush1.msra.mxu0 %v2738
    %3535 = vmatprep.subr.mxu0 %v2735
    %3536 = vmatpush1.msra.mxu0 %v2734
    %3537 = vmatprep.subr.mxu0 %v2731
    %3538 = vmatpush1.msra.mxu0 %v2730
    %3539 = vmatprep.subr.mxu0 %v2727
    %3540 = vmatpush1.msra.mxu0 %v2726
    %3541 = vmatprep.subr.mxu0 %v2723
    %3542 = vmatpush1.msra.mxu0 %v2722
    %3543 = vmatprep.subr.mxu0 %v2847
    %3544 = vmatpush2.msra.mxu0 %v2846
    %3545 = vmatprep.subr.mxu0 %v2843
    %3546 = vmatpush2.msra.mxu0 %v2842
    %3547 = vmatprep.subr.mxu0 %v2839
    %3548 = vmatpush2.msra.mxu0 %v2838
    %3549 = vmatprep.subr.mxu0 %v2835
    %3550 = vmatpush2.msra.mxu0 %v2834
    %3551 = vmatprep.subr.mxu0 %v2831
    %3552 = vmatpush2.msra.mxu0 %v2830
    %3553 = vmatprep.subr.mxu0 %v2827
    %3554 = vmatpush2.msra.mxu0 %v2826
    %3555 = vmatprep.subr.mxu0 %v2823
    %3556 = vmatpush2.msra.mxu0 %v2822
    %3557 = vmatprep.subr.mxu0 %v2819
    %3558 = vmatpush2.msra.mxu0 %v2818
    %3559 = vmatprep.subr.mxu0 %v2815
    %3560 = vmatpush2.msra.mxu0 %v2814
    %3561 = vmatprep.subr.mxu0 %v2811
    %3562 = vmatpush2.msra.mxu0 %v2810
    %3563 = vmatprep.subr.mxu0 %v2807
    %3564 = vmatpush2.msra.mxu0 %v2806
    %3565 = vmatprep.subr.mxu0 %v2803
    %3566 = vmatpush2.msra.mxu0 %v2802
    %3567 = vmatprep.subr.mxu0 %v2799
    %3568 = vmatpush2.msra.mxu0 %v2798
    %3569 = vmatprep.subr.mxu0 %v2795
    %3570 = vmatpush2.msra.mxu0 %v2794
    %3571 = vmatprep.subr.mxu0 %v2791
    %3572 = vmatpush2.msra.mxu0 %v2790
    %3573 = vmatprep.subr.mxu0 %v2787
    %3574 = vmatpush2.msra.mxu0 %v2786
    %3575 = vmatprep.mubr.f32.mxu0 %v2579
    %3576 = vmatmul.mubr.f32.gmra.mxu0 %v2578
    %v3577 = vpop.f32.mrf.mxu0
    %v3578 = vadd.f32 %v3501, %v3577
    %v3579 = vpop.f32.mrf.mxu0
    %v3580 = vadd.f32 %v3503, %v3579
    %3581 = vmatprep.mubr.f32.mxu0 %v2587
    %3582 = vmatmul.mubr.f32.gmra.mxu0 %v2586
    %v3583 = vpop.f32.mrf.mxu0
    %v3584 = vadd.f32 %v3507, %v3583
    %v3585 = vpop.f32.mrf.mxu0
    %v3586 = vadd.f32 %v3509, %v3585
    %3587 = vdwg.mxu0
    %3588 = vmatprep.subr.mxu0 %v2911
    %3589 = vmatpush1.msra.mxu0 %v2910
    %3590 = vmatprep.subr.mxu0 %v2907
    %3591 = vmatpush1.msra.mxu0 %v2906
    %3592 = vmatprep.subr.mxu0 %v2903
    %3593 = vmatpush1.msra.mxu0 %v2902
    %3594 = vmatprep.subr.mxu0 %v2899
    %3595 = vmatpush1.msra.mxu0 %v2898
    %3596 = vmatprep.subr.mxu0 %v2895
    %3597 = vmatpush1.msra.mxu0 %v2894
    %3598 = vmatprep.subr.mxu0 %v2891
    %3599 = vmatpush1.msra.mxu0 %v2890
    %3600 = vmatprep.subr.mxu0 %v2887
    %3601 = vmatpush1.msra.mxu0 %v2886
    %3602 = vmatprep.subr.mxu0 %v2883
    %3603 = vmatpush1.msra.mxu0 %v2882
    %3604 = vmatprep.subr.mxu0 %v2879
    %3605 = vmatpush1.msra.mxu0 %v2878
    %3606 = vmatprep.subr.mxu0 %v2875
    %3607 = vmatpush1.msra.mxu0 %v2874
    %3608 = vmatprep.subr.mxu0 %v2871
    %3609 = vmatpush1.msra.mxu0 %v2870
    %3610 = vmatprep.subr.mxu0 %v2867
    %3611 = vmatpush1.msra.mxu0 %v2866
    %3612 = vmatprep.subr.mxu0 %v2863
    %3613 = vmatpush1.msra.mxu0 %v2862
    %3614 = vmatprep.subr.mxu0 %v2859
    %3615 = vmatpush1.msra.mxu0 %v2858
    %3616 = vmatprep.subr.mxu0 %v2855
    %3617 = vmatpush1.msra.mxu0 %v2854
    %3618 = vmatprep.subr.mxu0 %v2851
    %3619 = vmatpush1.msra.mxu0 %v2850
    %3620 = vmatprep.subr.mxu0 %v2975
    %3621 = vmatpush2.msra.mxu0 %v2974
    %3622 = vmatprep.subr.mxu0 %v2971
    %3623 = vmatpush2.msra.mxu0 %v2970
    %3624 = vmatprep.subr.mxu0 %v2967
    %3625 = vmatpush2.msra.mxu0 %v2966
    %3626 = vmatprep.subr.mxu0 %v2963
    %3627 = vmatpush2.msra.mxu0 %v2962
    %3628 = vmatprep.subr.mxu0 %v2959
    %3629 = vmatpush2.msra.mxu0 %v2958
    %3630 = vmatprep.subr.mxu0 %v2955
    %3631 = vmatpush2.msra.mxu0 %v2954
    %3632 = vmatprep.subr.mxu0 %v2951
    %3633 = vmatpush2.msra.mxu0 %v2950
    %3634 = vmatprep.subr.mxu0 %v2947
    %3635 = vmatpush2.msra.mxu0 %v2946
    %3636 = vmatprep.subr.mxu0 %v2943
    %3637 = vmatpush2.msra.mxu0 %v2942
    %3638 = vmatprep.subr.mxu0 %v2939
    %3639 = vmatpush2.msra.mxu0 %v2938
    %3640 = vmatprep.subr.mxu0 %v2935
    %3641 = vmatpush2.msra.mxu0 %v2934
    %3642 = vmatprep.subr.mxu0 %v2931
    %3643 = vmatpush2.msra.mxu0 %v2930
    %3644 = vmatprep.subr.mxu0 %v2927
    %3645 = vmatpush2.msra.mxu0 %v2926
    %3646 = vmatprep.subr.mxu0 %v2923
    %3647 = vmatpush2.msra.mxu0 %v2922
    %3648 = vmatprep.subr.mxu0 %v2919
    %3649 = vmatpush2.msra.mxu0 %v2918
    %3650 = vmatprep.subr.mxu0 %v2915
    %3651 = vmatpush2.msra.mxu0 %v2914
    %3652 = vmatprep.mubr.f32.mxu0 %v2581
    %3653 = vmatmul.mubr.f32.gmra.mxu0 %v2580
    %v3654 = vpop.f32.mrf.mxu0
    %v3655 = vadd.f32 %v3578, %v3654
    %v3656 = vpop.f32.mrf.mxu0
    %v3657 = vadd.f32 %v3580, %v3656
    %3658 = vmatprep.mubr.f32.mxu0 %v2589
    %3659 = vmatmul.mubr.f32.gmra.mxu0 %v2588
    %v3660 = vpop.f32.mrf.mxu0
    %v3661 = vadd.f32 %v3584, %v3660
    %v3662 = vpop.f32.mrf.mxu0
    %v3663 = vadd.f32 %v3586, %v3662
    %3664 = vdwg.mxu0
    %3665 = vmatprep.subr.mxu0 %v3039
    %3666 = vmatpush1.msra.mxu0 %v3038
    %3667 = vmatprep.subr.mxu0 %v3035
    %3668 = vmatpush1.msra.mxu0 %v3034
    %3669 = vmatprep.subr.mxu0 %v3031
    %3670 = vmatpush1.msra.mxu0 %v3030
    %3671 = vmatprep.subr.mxu0 %v3027
    %3672 = vmatpush1.msra.mxu0 %v3026
    %3673 = vmatprep.subr.mxu0 %v3023
    %3674 = vmatpush1.msra.mxu0 %v3022
    %3675 = vmatprep.subr.mxu0 %v3019
    %3676 = vmatpush1.msra.mxu0 %v3018
    %3677 = vmatprep.subr.mxu0 %v3015
    %3678 = vmatpush1.msra.mxu0 %v3014
    %3679 = vmatprep.subr.mxu0 %v3011
    %3680 = vmatpush1.msra.mxu0 %v3010
    %3681 = vmatprep.subr.mxu0 %v3007
    %3682 = vmatpush1.msra.mxu0 %v3006
    %3683 = vmatprep.subr.mxu0 %v3003
    %3684 = vmatpush1.msra.mxu0 %v3002
    %3685 = vmatprep.subr.mxu0 %v2999
    %3686 = vmatpush1.msra.mxu0 %v2998
    %3687 = vmatprep.subr.mxu0 %v2995
    %3688 = vmatpush1.msra.mxu0 %v2994
    %3689 = vmatprep.subr.mxu0 %v2991
    %3690 = vmatpush1.msra.mxu0 %v2990
    %3691 = vmatprep.subr.mxu0 %v2987
    %3692 = vmatpush1.msra.mxu0 %v2986
    %3693 = vmatprep.subr.mxu0 %v2983
    %3694 = vmatpush1.msra.mxu0 %v2982
    %3695 = vmatprep.subr.mxu0 %v2979
    %3696 = vmatpush1.msra.mxu0 %v2978
    %3697 = vmatprep.subr.mxu0 %v3103
    %3698 = vmatpush2.msra.mxu0 %v3102
    %3699 = vmatprep.subr.mxu0 %v3099
    %3700 = vmatpush2.msra.mxu0 %v3098
    %3701 = vmatprep.subr.mxu0 %v3095
    %3702 = vmatpush2.msra.mxu0 %v3094
    %3703 = vmatprep.subr.mxu0 %v3091
    %3704 = vmatpush2.msra.mxu0 %v3090
    %3705 = vmatprep.subr.mxu0 %v3087
    %3706 = vmatpush2.msra.mxu0 %v3086
    %3707 = vmatprep.subr.mxu0 %v3083
    %3708 = vmatpush2.msra.mxu0 %v3082
    %3709 = vmatprep.subr.mxu0 %v3079
    %3710 = vmatpush2.msra.mxu0 %v3078
    %3711 = vmatprep.subr.mxu0 %v3075
    %3712 = vmatpush2.msra.mxu0 %v3074
    %3713 = vmatprep.subr.mxu0 %v3071
    %3714 = vmatpush2.msra.mxu0 %v3070
    %3715 = vmatprep.subr.mxu0 %v3067
    %3716 = vmatpush2.msra.mxu0 %v3066
    %3717 = vmatprep.subr.mxu0 %v3063
    %3718 = vmatpush2.msra.mxu0 %v3062
    %3719 = vmatprep.subr.mxu0 %v3059
    %3720 = vmatpush2.msra.mxu0 %v3058
    %3721 = vmatprep.subr.mxu0 %v3055
    %3722 = vmatpush2.msra.mxu0 %v3054
    %3723 = vmatprep.subr.mxu0 %v3051
    %3724 = vmatpush2.msra.mxu0 %v3050
    %3725 = vmatprep.subr.mxu0 %v3047
    %3726 = vmatpush2.msra.mxu0 %v3046
    %3727 = vmatprep.subr.mxu0 %v3043
    %3728 = vmatpush2.msra.mxu0 %v3042
    %3729 = vmatprep.mubr.f32.mxu0 %v2583
    %3730 = vmatmul.mubr.f32.gmra.mxu0 %v2582
    %v3731 = vpop.f32.mrf.mxu0
    %v3732 = vadd.f32 %v3655, %v3731
    %v3733 = vpop.f32.mrf.mxu0
    %v3734 = vadd.f32 %v3657, %v3733
    %3735 = vmatprep.mubr.f32.mxu0 %v2591
    %3736 = vmatmul.mubr.f32.gmra.mxu0 %v2590
    %v3737 = vpop.f32.mrf.mxu0
    %v3738 = vadd.f32 %v3661, %v3737
    %v3739 = vpop.f32.mrf.mxu0
    %v3740 = vadd.f32 %v3663, %v3739
    %3741 = vdwg.mxu0
    %3742 = vst [vmem:[#allocation14] sm:$0xff] %v3424
    %3743 = vst [vmem:[#allocation14 + $0x8] sm:$0xff] %v3426
    %3744 = vst [vmem:[#allocation14 + $0x10] sm:$0xff] %v3732
    %3745 = vst [vmem:[#allocation14 + $0x18] sm:$0xff] %v3734
    %3746 = vst [vmem:[#allocation14 + $0x20] sm:$0xff] %v3430
    %3747 = vst [vmem:[#allocation14 + $0x28] sm:$0xff] %v3432
    %3748 = vst [vmem:[#allocation14 + $0x30] sm:$0xff] %v3738
    %3749 = vst [vmem:[#allocation14 + $0x38] sm:$0xff] %v3740
    // Predicated region
    $region58: #{tpu_custom_call.1} parent=1 // pred_check
      _
    $region59: #{tpu_custom_call.1} parent=1 // pred_check_branch
      %3751 = sbr.rel (0) target = $region61
    $region60: #{tpu_custom_call.1} parent=1 // pred_region
      %s3753 = ssub.s32 1024, 1024
      %3754 = vsyncadd [#allocation4], %s3753
      %s3755 = sshll.u32 [#allocation14], 4
      %s3756 = int_to_ptr.vmem [resolvable:$true] %s3755
      %3761 = dma.vmem_to_hbm [thread:$0]  %s3756, 1024, %s7, [#allocation4], 512, 512, 32
    $region61: #{tpu_custom_call.1} parent=1 // pred_fallthru
      _
    // Predicated region
    $region62: #{tpu_custom_call.1} parent=1 // pred_check
      _
    $region63: #{tpu_custom_call.1} parent=1 // pred_check_branch
      %3763 = sbr.rel (0) target = $region65
    $region64: #{tpu_custom_call.1} parent=1 // pred_region
      %3764 = dma.done [#allocation4], 1024
    $region65: #{tpu_custom_call.1} parent=1 // pred_fallthru
      _
    %3765 = vsyncpa [#allocation3], 1
    %3766 = vsyncpa [#allocation6], 1
    %3767 = vsyncpa [#allocation9], 1
    %3768 = vsyncpa [#allocation12], 1
    %3769 = vsyncpa [#allocation4], 1

</llo_original>
